<compile_context>
chip_gen: v5e
topology: v5e:2x2
jax: 0.10.0
libtpu: 0.0.40
codegen_flags: <defaults>
</compile_context>

<pallas_src>
import jax
import jax.numpy as jnp
from jax.experimental import pallas as pl
from jax.experimental.pallas import tpu as pltpu


NEG_BIG = jnp.float32(-1e30)  # padded-lane logit bias; exp() underflows to 0


def agentnet_kernel(x_ref,
                    w1_ref, b1_ref,
                    w2_ref, b2_ref,
                    w3_ref, b3_ref,
                    w4_ref, b4_ref,
                    o_ref):
    # (TB, 8) f32 -> bf16 operand for the MXU; accumulate in f32.
    x = x_ref[...].astype(jnp.bfloat16)

    # linear1 + relu                                            (TB, 128)
    h = jnp.dot(x, w1_ref[...], preferred_element_type=jnp.float32) + b1_ref[...]
    h = jnp.maximum(h, 0.0).astype(jnp.bfloat16)

    # linear2 + relu                                            (TB, 256)
    h = jnp.dot(h, w2_ref[...], preferred_element_type=jnp.float32) + b2_ref[...]
    h = jnp.maximum(h, 0.0).astype(jnp.bfloat16)

    # linear3 + relu                                            (TB, 256)
    h = jnp.dot(h, w3_ref[...], preferred_element_type=jnp.float32) + b3_ref[...]
    h = jnp.maximum(h, 0.0).astype(jnp.bfloat16)

    # linear4 (lane-padded 8 -> 128; padded lanes carry bias -1e30)  (TB, 128)
    logits = jnp.dot(h, w4_ref[...], preferred_element_type=jnp.float32) + b4_ref[...]

    # softmax over the feature dim (f32, max-stabilized). Padded lanes
    # contribute exp(-1e30 - m) == 0 to the denominator, so columns 0..7 are
    # exactly the softmax over the real 8 logits.
    m = jnp.max(logits, axis=-1, keepdims=True)
    e = jnp.exp(logits - m)
    denom = jnp.sum(e, axis=-1, keepdims=True)
    inv = pl.reciprocal(denom, approx=True)       # EUP vrcp (free slot)
    inv = inv * (2.0 - denom * inv)               # one Newton step -> f32 accuracy
    o_ref[...] = e * inv


def agentnet_forward(x, params, *, block_batch=512):
    """x: (B, 8) float32.

    params: dict with transposed weights w1..w4 (bf16, (in, out)) and biases
    b1..b4 (f32, (1, out)).  Returns (B, 8) float32 softmax probabilities.
    """
    B = x.shape[0]

    # Batch tile: multiple of 8 sublanes, capped at block_batch.
    tb = min(block_batch, ((B + 7) // 8) * 8)
    grid_b = pl.cdiv(B, tb)
    b_padded = grid_b * tb
    if b_padded != B:
        x = jnp.pad(x, ((0, b_padded - B), (0, 0)))

    # Pad the final layer 8 -> 128 output lanes so the output store is
    # lane-dense.  Padded weight columns are zero; padded biases are -1e30 so
    # the padded logits vanish under softmax.
    w4p = jnp.pad(params["w4"], ((0, 0), (0, 128 - 8)))
    b4p = jnp.pad(params["b4"], ((0, 0), (0, 128 - 8)), constant_values=NEG_BIG)

    args = (x,
            params["w1"], params["b1"],
            params["w2"], params["b2"],
            params["w3"], params["b3"],
            w4p, b4p)

    def resident(shape):
        # Constant index_map -> block never changes -> stays VMEM-resident.
        return pl.BlockSpec(shape, lambda i: (0, 0))

    out_padded = pl.pallas_call(
        agentnet_kernel,
        out_shape=jax.ShapeDtypeStruct((b_padded, 128), jnp.float32),
        grid=(grid_b,),
        in_specs=[
            pl.BlockSpec((tb, 8), lambda i: (i, 0)),    # x tile (pipelined)
            resident((8, 128)),   resident((1, 128)),   # w1, b1
            resident((128, 256)), resident((1, 256)),   # w2, b2
            resident((256, 256)), resident((1, 256)),   # w3, b3
            resident((256, 128)), resident((1, 128)),   # w4 (padded), b4 (padded)
        ],
        out_specs=pl.BlockSpec((tb, 128), lambda i: (i, 0)),
        compiler_params=pltpu.CompilerParams(
            dimension_semantics=("parallel",)),         # megacore on v7x
    )(*args)

    return out_padded[:B, :8]


def init_params(key):
    """Deterministic init mimicking PyTorch's default Linear init
    (uniform(-1/sqrt(fan_in), 1/sqrt(fan_in))).  Weights stored transposed
    (in, out) and cast to bf16; biases kept f32 as (1, out)."""
    dims = [(8, 128), (128, 256), (256, 256), (256, 8)]
    params = {}
    for i, (fan_in, fan_out) in enumerate(dims, start=1):
        key, kw, kb = jax.random.split(key, 3)
        bound = 1.0 / (fan_in ** 0.5)
        w = jax.random.uniform(kw, (fan_in, fan_out), jnp.float32, -bound, bound)
        b = jax.random.uniform(kb, (1, fan_out), jnp.float32, -bound, bound)
        params[f"w{i}"] = w.astype(jnp.bfloat16)
        params[f"b{i}"] = b
    return params


if __name__ == "__main__":
    key = jax.random.PRNGKey(0)
    kp, kx = jax.random.split(key)
    params = init_params(kp)

    # Batch large enough to exercise the batch grid (2 tiles of 512) and the
    # ragged-tail padding path; state dim is 8 per the module.
    B = 1000
    x = jax.random.normal(kx, (B, 8), jnp.float32)

    out = agentnet_forward(x, params, block_batch=512)
    out = jax.block_until_ready(out)

    # sanity: shape and softmax rows sum to 1
    assert out.shape == (B, 8)
    row_sums = jnp.sum(out, axis=-1)
    assert bool(jnp.all(jnp.abs(row_sums - 1.0) < 1e-4))
    assert bool(jnp.all(out >= 0.0))

    print("KERNEL_OK")
</pallas_src>

<mosaic_0001>
module attributes {stable_mosaic.version = 11 : i64} {
  func.func @agentnet_kernel(%arg0: i32, %arg1: memref<512x8xf32, #tpu.memory_space<vmem>>, %arg2: memref<8x128xbf16, #tpu.memory_space<vmem>>, %arg3: memref<1x128xf32, #tpu.memory_space<vmem>>, %arg4: memref<128x256xbf16, #tpu.memory_space<vmem>>, %arg5: memref<1x256xf32, #tpu.memory_space<vmem>>, %arg6: memref<256x256xbf16, #tpu.memory_space<vmem>>, %arg7: memref<1x256xf32, #tpu.memory_space<vmem>>, %arg8: memref<256x128xbf16, #tpu.memory_space<vmem>>, %arg9: memref<1x128xf32, #tpu.memory_space<vmem>>, %arg10: memref<512x128xf32, #tpu.memory_space<vmem>>) attributes {dimension_semantics = [#tpu.dimension_semantics<parallel>], iteration_bounds = array<i64: 2>, scalar_prefetch = 0 : i64, scratch_operands = 0 : i64, tpu.core_type = #tpu.core_type<tc>, window_params = [{transform_indices = @transform_0, window_bounds = array<i64: 512, 8>}, {pipeline_mode = #tpu.pipeline_mode<synchronous>, transform_indices = @transform_1, window_bounds = array<i64: 8, 128>}, {pipeline_mode = #tpu.pipeline_mode<synchronous>, transform_indices = @transform_2, window_bounds = array<i64: 1, 128>}, {pipeline_mode = #tpu.pipeline_mode<synchronous>, transform_indices = @transform_3, window_bounds = array<i64: 128, 256>}, {pipeline_mode = #tpu.pipeline_mode<synchronous>, transform_indices = @transform_4, window_bounds = array<i64: 1, 256>}, {pipeline_mode = #tpu.pipeline_mode<synchronous>, transform_indices = @transform_5, window_bounds = array<i64: 256, 256>}, {pipeline_mode = #tpu.pipeline_mode<synchronous>, transform_indices = @transform_6, window_bounds = array<i64: 1, 256>}, {pipeline_mode = #tpu.pipeline_mode<synchronous>, transform_indices = @transform_7, window_bounds = array<i64: 256, 128>}, {pipeline_mode = #tpu.pipeline_mode<synchronous>, transform_indices = @transform_8, window_bounds = array<i64: 1, 128>}, {transform_indices = @transform_9, window_bounds = array<i64: 512, 128>}]} {
    %c0 = arith.constant 0 : index
    %c0_0 = arith.constant 0 : index
    %0 = vector.load %arg1[%c0, %c0_0] : memref<512x8xf32, #tpu.memory_space<vmem>>, vector<512x8xf32>
    %1 = arith.truncf %0 : vector<512x8xf32> to vector<512x8xbf16>
    %c0_1 = arith.constant 0 : index
    %c0_2 = arith.constant 0 : index
    %2 = vector.load %arg2[%c0_1, %c0_2] : memref<8x128xbf16, #tpu.memory_space<vmem>>, vector<8x128xbf16>
    %cst = arith.constant dense<0.000000e+00> : vector<512x128xf32>
    %3 = tpu.matmul %1, %2, %cst {dimension_numbers = #tpu.dot_dimension_numbers<[1], [0], [0], [1], [0, 0, 1, 1], [], []>} : vector<512x8xbf16>, vector<8x128xbf16>, vector<512x128xf32> -> vector<512x128xf32>
    %c0_3 = arith.constant 0 : index
    %c0_4 = arith.constant 0 : index
    %4 = vector.load %arg3[%c0_3, %c0_4] : memref<1x128xf32, #tpu.memory_space<vmem>>, vector<1x128xf32>
    %5 = vector.broadcast %4 : vector<1x128xf32> to vector<512x128xf32>
    %6 = arith.addf %3, %5 : vector<512x128xf32>
    %cst_5 = arith.constant 0.000000e+00 : f32
    %7 = vector.broadcast %cst_5 : f32 to vector<512x128xf32>
    %8 = arith.maximumf %6, %7 : vector<512x128xf32>
    %9 = arith.truncf %8 : vector<512x128xf32> to vector<512x128xbf16>
    %c0_6 = arith.constant 0 : index
    %c0_7 = arith.constant 0 : index
    %10 = vector.load %arg4[%c0_6, %c0_7] : memref<128x256xbf16, #tpu.memory_space<vmem>>, vector<128x256xbf16>
    %cst_8 = arith.constant dense<0.000000e+00> : vector<512x256xf32>
    %11 = tpu.matmul %9, %10, %cst_8 {dimension_numbers = #tpu.dot_dimension_numbers<[1], [0], [0], [1], [0, 0, 1, 1], [], []>} : vector<512x128xbf16>, vector<128x256xbf16>, vector<512x256xf32> -> vector<512x256xf32>
    %c0_9 = arith.constant 0 : index
    %c0_10 = arith.constant 0 : index
    %12 = vector.load %arg5[%c0_9, %c0_10] : memref<1x256xf32, #tpu.memory_space<vmem>>, vector<1x256xf32>
    %13 = vector.broadcast %12 : vector<1x256xf32> to vector<512x256xf32>
    %14 = arith.addf %11, %13 : vector<512x256xf32>
    %cst_11 = arith.constant 0.000000e+00 : f32
    %15 = vector.broadcast %cst_11 : f32 to vector<512x256xf32>
    %16 = arith.maximumf %14, %15 : vector<512x256xf32>
    %17 = arith.truncf %16 : vector<512x256xf32> to vector<512x256xbf16>
    %c0_12 = arith.constant 0 : index
    %c0_13 = arith.constant 0 : index
    %18 = vector.load %arg6[%c0_12, %c0_13] : memref<256x256xbf16, #tpu.memory_space<vmem>>, vector<256x256xbf16>
    %cst_14 = arith.constant dense<0.000000e+00> : vector<512x256xf32>
    %19 = tpu.matmul %17, %18, %cst_14 {dimension_numbers = #tpu.dot_dimension_numbers<[1], [0], [0], [1], [0, 0, 1, 1], [], []>} : vector<512x256xbf16>, vector<256x256xbf16>, vector<512x256xf32> -> vector<512x256xf32>
    %c0_15 = arith.constant 0 : index
    %c0_16 = arith.constant 0 : index
    %20 = vector.load %arg7[%c0_15, %c0_16] : memref<1x256xf32, #tpu.memory_space<vmem>>, vector<1x256xf32>
    %21 = vector.broadcast %20 : vector<1x256xf32> to vector<512x256xf32>
    %22 = arith.addf %19, %21 : vector<512x256xf32>
    %cst_17 = arith.constant 0.000000e+00 : f32
    %23 = vector.broadcast %cst_17 : f32 to vector<512x256xf32>
    %24 = arith.maximumf %22, %23 : vector<512x256xf32>
    %25 = arith.truncf %24 : vector<512x256xf32> to vector<512x256xbf16>
    %c0_18 = arith.constant 0 : index
    %c0_19 = arith.constant 0 : index
    %26 = vector.load %arg8[%c0_18, %c0_19] : memref<256x128xbf16, #tpu.memory_space<vmem>>, vector<256x128xbf16>
    %cst_20 = arith.constant dense<0.000000e+00> : vector<512x128xf32>
    %27 = tpu.matmul %25, %26, %cst_20 {dimension_numbers = #tpu.dot_dimension_numbers<[1], [0], [0], [1], [0, 0, 1, 1], [], []>} : vector<512x256xbf16>, vector<256x128xbf16>, vector<512x128xf32> -> vector<512x128xf32>
    %c0_21 = arith.constant 0 : index
    %c0_22 = arith.constant 0 : index
    %28 = vector.load %arg9[%c0_21, %c0_22] : memref<1x128xf32, #tpu.memory_space<vmem>>, vector<1x128xf32>
    %29 = vector.broadcast %28 : vector<1x128xf32> to vector<512x128xf32>
    %30 = arith.addf %27, %29 : vector<512x128xf32>
    %cst_23 = arith.constant dense<0xFF800000> : vector<512xf32>
    %31 = vector.multi_reduction <maximumf>, %30, %cst_23 [1] : vector<512x128xf32> to vector<512xf32>
    %32 = vector.shape_cast %31 : vector<512xf32> to vector<512x1xf32>
    %33 = vector.broadcast %32 : vector<512x1xf32> to vector<512x128xf32>
    %34 = arith.subf %30, %33 : vector<512x128xf32>
    %35 = math.exp %34 : vector<512x128xf32>
    %cst_24 = arith.constant dense<0.000000e+00> : vector<512xf32>
    %36 = vector.multi_reduction <add>, %35, %cst_24 [1] : vector<512x128xf32> to vector<512xf32>
    %37 = vector.shape_cast %36 : vector<512xf32> to vector<512x1xf32>
    %38 = tpu.reciprocal %37 {approx = true} : vector<512x1xf32> -> vector<512x1xf32>
    %39 = arith.mulf %37, %38 : vector<512x1xf32>
    %cst_25 = arith.constant 2.000000e+00 : f32
    %40 = vector.broadcast %cst_25 : f32 to vector<512x1xf32>
    %41 = arith.subf %40, %39 : vector<512x1xf32>
    %42 = arith.mulf %38, %41 : vector<512x1xf32>
    %43 = vector.broadcast %42 : vector<512x1xf32> to vector<512x128xf32>
    %44 = arith.mulf %35, %43 : vector<512x128xf32>
    %c0_26 = arith.constant 0 : index
    %c0_27 = arith.constant 0 : index
    %45 = vector.load %arg10[%c0_26, %c0_27] : memref<512x128xf32, #tpu.memory_space<vmem>>, vector<512x128xf32>
    tpu.vector_store %arg10[%c0_26, %c0_27], %44 {strides = array<i32>} : memref<512x128xf32, #tpu.memory_space<vmem>>, vector<512x128xf32>,
    return
  }
  func.func @transform_0(%arg0: i32) -> (i32, i32) {
    %c0_i32 = arith.constant 0 : i32
    %c0_i32_0 = arith.constant 0 : i32
    return %arg0, %c0_i32 : i32, i32
  }
  func.func @transform_1(%arg0: i32) -> (i32, i32) {
    %c0_i32 = arith.constant 0 : i32
    %c0_i32_0 = arith.constant 0 : i32
    %c0_i32_1 = arith.constant 0 : i32
    return %c0_i32, %c0_i32_0 : i32, i32
  }
  func.func @transform_2(%arg0: i32) -> (i32, i32) {
    %c0_i32 = arith.constant 0 : i32
    %c0_i32_0 = arith.constant 0 : i32
    %c0_i32_1 = arith.constant 0 : i32
    return %c0_i32, %c0_i32_0 : i32, i32
  }
  func.func @transform_3(%arg0: i32) -> (i32, i32) {
    %c0_i32 = arith.constant 0 : i32
    %c0_i32_0 = arith.constant 0 : i32
    %c0_i32_1 = arith.constant 0 : i32
    return %c0_i32, %c0_i32_0 : i32, i32
  }
  func.func @transform_4(%arg0: i32) -> (i32, i32) {
    %c0_i32 = arith.constant 0 : i32
    %c0_i32_0 = arith.constant 0 : i32
    %c0_i32_1 = arith.constant 0 : i32
    return %c0_i32, %c0_i32_0 : i32, i32
  }
  func.func @transform_5(%arg0: i32) -> (i32, i32) {
    %c0_i32 = arith.constant 0 : i32
    %c0_i32_0 = arith.constant 0 : i32
    %c0_i32_1 = arith.constant 0 : i32
    return %c0_i32, %c0_i32_0 : i32, i32
  }
  func.func @transform_6(%arg0: i32) -> (i32, i32) {
    %c0_i32 = arith.constant 0 : i32
    %c0_i32_0 = arith.constant 0 : i32
    %c0_i32_1 = arith.constant 0 : i32
    return %c0_i32, %c0_i32_0 : i32, i32
  }
  func.func @transform_7(%arg0: i32) -> (i32, i32) {
    %c0_i32 = arith.constant 0 : i32
    %c0_i32_0 = arith.constant 0 : i32
    %c0_i32_1 = arith.constant 0 : i32
    return %c0_i32, %c0_i32_0 : i32, i32
  }
  func.func @transform_8(%arg0: i32) -> (i32, i32) {
    %c0_i32 = arith.constant 0 : i32
    %c0_i32_0 = arith.constant 0 : i32
    %c0_i32_1 = arith.constant 0 : i32
    return %c0_i32, %c0_i32_0 : i32, i32
  }
  func.func @transform_9(%arg0: i32) -> (i32, i32) {
    %c0_i32 = arith.constant 0 : i32
    %c0_i32_0 = arith.constant 0 : i32
    return %arg0, %c0_i32 : i32, i32
  }
}

</mosaic_0001>

<llo_original>
// kernel: tpu_custom_call.1
$region0: #{tpu_custom_call.1}
  #allocation0 [shape = 'u32[]', space=smem, size = 0x4, offset = 0x4, fixed_abs, tag = 'smem constant byte address 0x4 - core index']
  #allocation1 [shape = 'u32[72,128]{1,0:T(1,128)}', space=vmem, size = 0x9000, scoped, tag = 'internal scratch']
  %s0 = inlined_call_operand.vmem [shape: f32[1024,8], index: 0, kind: input, shape index: {}]
  %s1 = inlined_call_operand.vmem [shape: bf16[8,128], index: 1, kind: input, shape index: {}]
  %s2 = inlined_call_operand.vmem [shape: f32[1,128], index: 2, kind: input, shape index: {}]
  %s3 = inlined_call_operand.vmem [shape: bf16[128,256], index: 3, kind: input, shape index: {}]
  %s4 = inlined_call_operand.vmem [shape: f32[1,256], index: 4, kind: input, shape index: {}]
  %s5 = inlined_call_operand.vmem [shape: bf16[256,256], index: 5, kind: input, shape index: {}]
  %s6 = inlined_call_operand.vmem [shape: f32[1,256], index: 6, kind: input, shape index: {}]
  %s7 = inlined_call_operand.vmem [shape: bf16[256,128], index: 7, kind: input, shape index: {}]
  %s8 = inlined_call_operand.vmem [shape: f32[1,128], index: 8, kind: input, shape index: {}]
  %s9 = inlined_call_operand.hbm [shape: f32[1024,128], index: 9, kind: output, shape index: {}]
  %s10 = sld [smem:[#allocation0]]
  $region69: #{tpu_custom_call.1} parent=0
    _
  %s12 = ssub.s32 1, %s10
  %s13 = scalar_select 0, %s12, %s10
  $region1: #{tpu_custom_call.1} parent=0
    #allocation2 [shape = 'u8[524288]{0}', space=vmem, size = 0x80000, scoped, tag = 'output window, operand 0']
    #allocation3 [shape = 's32[2]{0}', space=sflag, size = 0x8, scoped, tag = 'scoped memory for tpu_custom_call.1']
    %14 = vsyncpa [#allocation3], 0
    %s15 = scalar_lea.sflag [#allocation3], 1
    %16 = vsyncpa %s15, 0
    loop: start=0, step=1, limit=4
    $region2: #{tpu_custom_call.1} parent=1 // loop_pre_header
      _
    $region3: #{tpu_custom_call.1} parent=1 // loop_header
      %s18 = sphi 0, %s22
      %p19 = scmp.ge.s32.totalorder %s18, 4
      %s28 = sphi 0, %s30
      %s31 = sphi 0, %s28
      %s32 = sphi 0, %s31
      %s48 = sphi 0, %s32
      %s52 = sphi 0, %s52
      %s54 = sphi 0, %s52
      %s55 = sphi 0, %s54
      %s69 = sphi 0, %s55
      %s73 = sphi 0, %s73
      %s75 = sphi 0, %s73
      %s76 = sphi 0, %s75
      %s90 = sphi 0, %s76
      %s94 = sphi 0, %s94
      %s96 = sphi 0, %s94
      %s97 = sphi 0, %s96
      %s111 = sphi 0, %s97
      %s115 = sphi 0, %s115
      %s117 = sphi 0, %s115
      %s118 = sphi 0, %s117
      %s132 = sphi 0, %s118
      %s136 = sphi 0, %s136
      %s138 = sphi 0, %s136
      %s139 = sphi 0, %s138
      %s153 = sphi 0, %s139
      %s157 = sphi 0, %s157
      %s159 = sphi 0, %s157
      %s160 = sphi 0, %s159
      %s174 = sphi 0, %s160
      %s178 = sphi 0, %s178
      %s180 = sphi 0, %s178
      %s181 = sphi 0, %s180
      %s195 = sphi 0, %s181
      %s199 = sphi 0, %s199
      %s201 = sphi 0, %s199
      %s202 = sphi 0, %s201
      %s216 = sphi 0, %s202
      %s222 = sphi 0, %s224
      %s225 = sphi 0, %s222
      %s226 = sphi 0, %s225
      %s242 = sphi 0, %s226
    $region4: #{tpu_custom_call.1} parent=1 // loop_header_branch
      %21 = sbr.rel (%p19) target = $region8
    $region5: #{tpu_custom_call.1} parent=1 // loop_body
      %s23 = ssub.s32 %s18, 1
      %s24 = ssub.s32 %s18, 2
      %s25 = sadd.s32 %s18, 1
      %s26 = ssub.s32 %s18, %s25
      %p27 = scmp.eq.s32.totalorder %s26, 0
      %s29 = sadd.s32 %s28, 1
      %s30 = scalar_select %p27, %s28, %s29
      %p33 = pneg %p27
      %p34 = scmp.eq.s32.totalorder %s18, 1
      %p35 = por %p33, %p34
      %p36 = scmp.ne.s32.totalorder %s28, %s31
      %p37 = scmp.eq.s32.totalorder %s18, 0
      %p38 = por %p36, %p37
      %p39 = scmp.ne.s32.totalorder %s28, %s31
      %p40 = scmp.eq.s32.totalorder %s23, 1
      %p41 = por %p39, %p40
      %p42 = scmp.ne.s32.totalorder %s31, %s32
      %p43 = scmp.eq.s32.totalorder %s23, 0
      %p44 = por %p42, %p43
      %p45 = scmp.ne.s32.totalorder %s31, %s32
      %p46 = scmp.eq.s32.totalorder %s24, 1
      %p47 = por %p45, %p46
      %p49 = scmp.ne.s32.totalorder %s32, %s48
      %p50 = scmp.eq.s32.totalorder %s24, 0
      %p51 = por %p49, %p50
      %s53 = sadd.s32 %s52, 1
      %p56 = scmp.eq.s32.totalorder %s18, 1
      %p57 = scmp.ne.s32.totalorder %s52, %s54
      %p58 = scmp.eq.s32.totalorder %s18, 0
      %p59 = por %p57, %p58
      %p60 = scmp.ne.s32.totalorder %s52, %s54
      %p61 = scmp.eq.s32.totalorder %s23, 1
      %p62 = por %p60, %p61
      %p63 = scmp.ne.s32.totalorder %s54, %s55
      %p64 = scmp.eq.s32.totalorder %s23, 0
      %p65 = por %p63, %p64
      %p66 = scmp.ne.s32.totalorder %s54, %s55
      %p67 = scmp.eq.s32.totalorder %s24, 1
      %p68 = por %p66, %p67
      %p70 = scmp.ne.s32.totalorder %s55, %s69
      %p71 = scmp.eq.s32.totalorder %s24, 0
      %p72 = por %p70, %p71
      %s74 = sadd.s32 %s73, 1
      %p77 = scmp.eq.s32.totalorder %s18, 1
      %p78 = scmp.ne.s32.totalorder %s73, %s75
      %p79 = scmp.eq.s32.totalorder %s18, 0
      %p80 = por %p78, %p79
      %p81 = scmp.ne.s32.totalorder %s73, %s75
      %p82 = scmp.eq.s32.totalorder %s23, 1
      %p83 = por %p81, %p82
      %p84 = scmp.ne.s32.totalorder %s75, %s76
      %p85 = scmp.eq.s32.totalorder %s23, 0
      %p86 = por %p84, %p85
      %p87 = scmp.ne.s32.totalorder %s75, %s76
      %p88 = scmp.eq.s32.totalorder %s24, 1
      %p89 = por %p87, %p88
      %p91 = scmp.ne.s32.totalorder %s76, %s90
      %p92 = scmp.eq.s32.totalorder %s24, 0
      %p93 = por %p91, %p92
      %s95 = sadd.s32 %s94, 1
      %p98 = scmp.eq.s32.totalorder %s18, 1
      %p99 = scmp.ne.s32.totalorder %s94, %s96
      %p100 = scmp.eq.s32.totalorder %s18, 0
      %p101 = por %p99, %p100
      %p102 = scmp.ne.s32.totalorder %s94, %s96
      %p103 = scmp.eq.s32.totalorder %s23, 1
      %p104 = por %p102, %p103
      %p105 = scmp.ne.s32.totalorder %s96, %s97
      %p106 = scmp.eq.s32.totalorder %s23, 0
      %p107 = por %p105, %p106
      %p108 = scmp.ne.s32.totalorder %s96, %s97
      %p109 = scmp.eq.s32.totalorder %s24, 1
      %p110 = por %p108, %p109
      %p112 = scmp.ne.s32.totalorder %s97, %s111
      %p113 = scmp.eq.s32.totalorder %s24, 0
      %p114 = por %p112, %p113
      %s116 = sadd.s32 %s115, 1
      %p119 = scmp.eq.s32.totalorder %s18, 1
      %p120 = scmp.ne.s32.totalorder %s115, %s117
      %p121 = scmp.eq.s32.totalorder %s18, 0
      %p122 = por %p120, %p121
      %p123 = scmp.ne.s32.totalorder %s115, %s117
      %p124 = scmp.eq.s32.totalorder %s23, 1
      %p125 = por %p123, %p124
      %p126 = scmp.ne.s32.totalorder %s117, %s118
      %p127 = scmp.eq.s32.totalorder %s23, 0
      %p128 = por %p126, %p127
      %p129 = scmp.ne.s32.totalorder %s117, %s118
      %p130 = scmp.eq.s32.totalorder %s24, 1
      %p131 = por %p129, %p130
      %p133 = scmp.ne.s32.totalorder %s118, %s132
      %p134 = scmp.eq.s32.totalorder %s24, 0
      %p135 = por %p133, %p134
      %s137 = sadd.s32 %s136, 1
      %p140 = scmp.eq.s32.totalorder %s18, 1
      %p141 = scmp.ne.s32.totalorder %s136, %s138
      %p142 = scmp.eq.s32.totalorder %s18, 0
      %p143 = por %p141, %p142
      %p144 = scmp.ne.s32.totalorder %s136, %s138
      %p145 = scmp.eq.s32.totalorder %s23, 1
      %p146 = por %p144, %p145
      %p147 = scmp.ne.s32.totalorder %s138, %s139
      %p148 = scmp.eq.s32.totalorder %s23, 0
      %p149 = por %p147, %p148
      %p150 = scmp.ne.s32.totalorder %s138, %s139
      %p151 = scmp.eq.s32.totalorder %s24, 1
      %p152 = por %p150, %p151
      %p154 = scmp.ne.s32.totalorder %s139, %s153
      %p155 = scmp.eq.s32.totalorder %s24, 0
      %p156 = por %p154, %p155
      %s158 = sadd.s32 %s157, 1
      %p161 = scmp.eq.s32.totalorder %s18, 1
      %p162 = scmp.ne.s32.totalorder %s157, %s159
      %p163 = scmp.eq.s32.totalorder %s18, 0
      %p164 = por %p162, %p163
      %p165 = scmp.ne.s32.totalorder %s157, %s159
      %p166 = scmp.eq.s32.totalorder %s23, 1
      %p167 = por %p165, %p166
      %p168 = scmp.ne.s32.totalorder %s159, %s160
      %p169 = scmp.eq.s32.totalorder %s23, 0
      %p170 = por %p168, %p169
      %p171 = scmp.ne.s32.totalorder %s159, %s160
      %p172 = scmp.eq.s32.totalorder %s24, 1
      %p173 = por %p171, %p172
      %p175 = scmp.ne.s32.totalorder %s160, %s174
      %p176 = scmp.eq.s32.totalorder %s24, 0
      %p177 = por %p175, %p176
      %s179 = sadd.s32 %s178, 1
      %p182 = scmp.eq.s32.totalorder %s18, 1
      %p183 = scmp.ne.s32.totalorder %s178, %s180
      %p184 = scmp.eq.s32.totalorder %s18, 0
      %p185 = por %p183, %p184
      %p186 = scmp.ne.s32.totalorder %s178, %s180
      %p187 = scmp.eq.s32.totalorder %s23, 1
      %p188 = por %p186, %p187
      %p189 = scmp.ne.s32.totalorder %s180, %s181
      %p190 = scmp.eq.s32.totalorder %s23, 0
      %p191 = por %p189, %p190
      %p192 = scmp.ne.s32.totalorder %s180, %s181
      %p193 = scmp.eq.s32.totalorder %s24, 1
      %p194 = por %p192, %p193
      %p196 = scmp.ne.s32.totalorder %s181, %s195
      %p197 = scmp.eq.s32.totalorder %s24, 0
      %p198 = por %p196, %p197
      %s200 = sadd.s32 %s199, 1
      %p203 = scmp.eq.s32.totalorder %s18, 1
      %p204 = scmp.ne.s32.totalorder %s199, %s201
      %p205 = scmp.eq.s32.totalorder %s18, 0
      %p206 = por %p204, %p205
      %p207 = scmp.ne.s32.totalorder %s199, %s201
      %p208 = scmp.eq.s32.totalorder %s23, 1
      %p209 = por %p207, %p208
      %p210 = scmp.ne.s32.totalorder %s201, %s202
      %p211 = scmp.eq.s32.totalorder %s23, 0
      %p212 = por %p210, %p211
      %p213 = scmp.ne.s32.totalorder %s201, %s202
      %p214 = scmp.eq.s32.totalorder %s24, 1
      %p215 = por %p213, %p214
      %p217 = scmp.ne.s32.totalorder %s202, %s216
      %p218 = scmp.eq.s32.totalorder %s24, 0
      %p219 = por %p217, %p218
      %s220 = ssub.s32 %s18, %s25
      %p221 = scmp.eq.s32.totalorder %s220, 0
      %s223 = sadd.s32 %s222, 1
      %s224 = scalar_select %p221, %s222, %s223
      %p227 = pneg %p221
      %p228 = scmp.eq.s32.totalorder %s18, 1
      %p229 = por %p227, %p228
      %p230 = scmp.ne.s32.totalorder %s222, %s225
      %p231 = scmp.eq.s32.totalorder %s18, 0
      %p232 = por %p230, %p231
      %p233 = scmp.ne.s32.totalorder %s222, %s225
      %p234 = scmp.eq.s32.totalorder %s23, 1
      %p235 = por %p233, %p234
      %p236 = scmp.ne.s32.totalorder %s225, %s226
      %p237 = scmp.eq.s32.totalorder %s23, 0
      %p238 = por %p236, %p237
      %p239 = scmp.ne.s32.totalorder %s225, %s226
      %p240 = scmp.eq.s32.totalorder %s24, 1
      %p241 = por %p239, %p240
      %p243 = scmp.ne.s32.totalorder %s226, %s242
      %p244 = scmp.eq.s32.totalorder %s24, 0
      %p245 = por %p243, %p244
      %p246 = scmp.le.s32.totalorder 1, %s18
      %p247 = scmp.lt.s32.totalorder %s18, 3
      %p248 = pnand %p246, %p247
      %p249 = pneg %p248
      // Predicated region
      $region9: #{tpu_custom_call.1} parent=5 // pred_check
        _
      $region10: #{tpu_custom_call.1} parent=5 // pred_check_branch
        %251 = sbr.rel (%p248) target = $region12
      $region11: #{tpu_custom_call.1} parent=5 // pred_region
        %s252 = ssub.s32 %s18, 1
        // Predicated region
        $region13: #{tpu_custom_call.1} parent=11 // pred_check
          %p253 = pneg %p65
        $region14: #{tpu_custom_call.1} parent=11 // pred_check_branch
          %255 = sbr.rel (%p253) target = $region16
        $region15: #{tpu_custom_call.1} parent=11 // pred_region
          _
        $region16: #{tpu_custom_call.1} parent=11 // pred_fallthru
          _
        // Predicated region
        $region17: #{tpu_custom_call.1} parent=11 // pred_check
          %p256 = pneg %p86
        $region18: #{tpu_custom_call.1} parent=11 // pred_check_branch
          %258 = sbr.rel (%p256) target = $region20
        $region19: #{tpu_custom_call.1} parent=11 // pred_region
          _
        $region20: #{tpu_custom_call.1} parent=11 // pred_fallthru
          _
        // Predicated region
        $region21: #{tpu_custom_call.1} parent=11 // pred_check
          %p259 = pneg %p107
        $region22: #{tpu_custom_call.1} parent=11 // pred_check_branch
          %261 = sbr.rel (%p259) target = $region24
        $region23: #{tpu_custom_call.1} parent=11 // pred_region
          _
        $region24: #{tpu_custom_call.1} parent=11 // pred_fallthru
          _
        // Predicated region
        $region25: #{tpu_custom_call.1} parent=11 // pred_check
          %p262 = pneg %p128
        $region26: #{tpu_custom_call.1} parent=11 // pred_check_branch
          %264 = sbr.rel (%p262) target = $region28
        $region27: #{tpu_custom_call.1} parent=11 // pred_region
          _
        $region28: #{tpu_custom_call.1} parent=11 // pred_fallthru
          _
        // Predicated region
        $region29: #{tpu_custom_call.1} parent=11 // pred_check
          %p265 = pneg %p149
        $region30: #{tpu_custom_call.1} parent=11 // pred_check_branch
          %267 = sbr.rel (%p265) target = $region32
        $region31: #{tpu_custom_call.1} parent=11 // pred_region
          _
        $region32: #{tpu_custom_call.1} parent=11 // pred_fallthru
          _
        // Predicated region
        $region33: #{tpu_custom_call.1} parent=11 // pred_check
          %p268 = pneg %p170
        $region34: #{tpu_custom_call.1} parent=11 // pred_check_branch
          %270 = sbr.rel (%p268) target = $region36
        $region35: #{tpu_custom_call.1} parent=11 // pred_region
          _
        $region36: #{tpu_custom_call.1} parent=11 // pred_fallthru
          _
        // Predicated region
        $region37: #{tpu_custom_call.1} parent=11 // pred_check
          %p271 = pneg %p191
        $region38: #{tpu_custom_call.1} parent=11 // pred_check_branch
          %273 = sbr.rel (%p271) target = $region40
        $region39: #{tpu_custom_call.1} parent=11 // pred_region
          _
        $region40: #{tpu_custom_call.1} parent=11 // pred_fallthru
          _
        // Predicated region
        $region41: #{tpu_custom_call.1} parent=11 // pred_check
          %p274 = pneg %p212
        $region42: #{tpu_custom_call.1} parent=11 // pred_check_branch
          %276 = sbr.rel (%p274) target = $region44
        $region43: #{tpu_custom_call.1} parent=11 // pred_region
          _
        $region44: #{tpu_custom_call.1} parent=11 // pred_fallthru
          _
      $region12: #{tpu_custom_call.1} parent=5 // pred_fallthru
        _
      %p277 = scmp.lt.s32.totalorder %s18, 2
      // Predicated region
      $region45: #{tpu_custom_call.1} parent=5 // pred_check
        %p278 = pneg %p277
      $region46: #{tpu_custom_call.1} parent=5 // pred_check_branch
        %280 = sbr.rel (%p278) target = $region48
      $region47: #{tpu_custom_call.1} parent=5 // pred_region
        // Predicated region
        $region49: #{tpu_custom_call.1} parent=47 // pred_check
          %p281 = pneg %p38
        $region50: #{tpu_custom_call.1} parent=47 // pred_check_branch
          %283 = sbr.rel (%p281) target = $region52
        $region51: #{tpu_custom_call.1} parent=47 // pred_region
          %s284 = smul.u32 64, %s18
          %p285 = scmp.lt.s32.totalorder %s284, 127
          %s286 = scalar_select %p285, %s284, 127
          %s287 = smul.addr %s286, 8
          %s288 = scalar_lea.vmem %s0, %s287
          %s289 = smul.u32 64, %s18
        $region52: #{tpu_custom_call.1} parent=47 // pred_fallthru
          _
      $region48: #{tpu_custom_call.1} parent=5 // pred_fallthru
        _
      %p290 = scmp.le.s32.totalorder 1, %s18
      %p291 = scmp.lt.s32.totalorder %s18, 3
      %p292 = pnand %p290, %p291
      %p293 = pneg %p292
      // Predicated region
      $region53: #{tpu_custom_call.1} parent=5 // pred_check
        _
      $region54: #{tpu_custom_call.1} parent=5 // pred_check_branch
        %295 = sbr.rel (%p292) target = $region56
      $region55: #{tpu_custom_call.1} parent=5 // pred_region
        %s296 = ssub.s32 %s18, 1
        %s297 = smul.u32 64, %s23
        %p298 = scmp.lt.s32.totalorder %s297, 127
        %s299 = scalar_select %p298, %s297, 127
        %s300 = smul.addr %s299, 8
        %s301 = scalar_lea.vmem %s0, %s300
        %p302 = pneg %p44
        %p303 = pneg %p41
        %p304 = pneg %p65
        %p305 = pneg %p62
        %p306 = pneg %p86
        %p307 = pneg %p83
        %p308 = pneg %p107
        %p309 = pneg %p104
        %p310 = pneg %p128
        %p311 = pneg %p125
        %p312 = pneg %p149
        %p313 = pneg %p146
        %p314 = pneg %p170
        %p315 = pneg %p167
        %p316 = pneg %p191
        %p317 = pneg %p188
        %p318 = pneg %p212
        %p319 = pneg %p209
        %p320 = pneg %p238
        %p321 = pneg %p235
        %s322 = sand.u32 %s225, 1
        %s323 = scalar_lea.sflag [#allocation3], %s322
        %s324 = sand.u32 %s225, 1
        %s325 = smul.addr %s324, 512
        %s326 = scalar_lea.vmem [#allocation2], %s325
        %s327 = smul.u32 64, %s23
        %p328 = scmp.lt.s32.totalorder %s327, 127
        %s329 = scalar_select %p328, %s327, 127
        %s330 = smul.addr %s329, 8
        %s331 = scalar_lea.vmem %s0, %s330
        %s332 = smul.u32 64, %s23
        %s333 = smul.u32 64, %s23
        %v335 = vld [vmem:[%s331] sm:$0xff]
        %v336 = vld [vmem:[%s331 + $0x8] sm:$0xff]
        %v337 = vld [vmem:[%s331 + $0x10] sm:$0xff]
        %v338 = vld [vmem:[%s331 + $0x18] sm:$0xff]
        %v339 = vld [vmem:[%s331 + $0x20] sm:$0xff]
        %v340 = vld [vmem:[%s331 + $0x28] sm:$0xff]
        %v341 = vld [vmem:[%s331 + $0x30] sm:$0xff]
        %v342 = vld [vmem:[%s331 + $0x38] sm:$0xff]
        %v343 = vld [vmem:[%s331 + $0x40] sm:$0xff]
        %v344 = vld [vmem:[%s331 + $0x48] sm:$0xff]
        %v345 = vld [vmem:[%s331 + $0x50] sm:$0xff]
        %v346 = vld [vmem:[%s331 + $0x58] sm:$0xff]
        %v347 = vld [vmem:[%s331 + $0x60] sm:$0xff]
        %v348 = vld [vmem:[%s331 + $0x68] sm:$0xff]
        %v349 = vld [vmem:[%s331 + $0x70] sm:$0xff]
        %v350 = vld [vmem:[%s331 + $0x78] sm:$0xff]
        %v351 = vld [vmem:[%s331 + $0x80] sm:$0xff]
        %v352 = vld [vmem:[%s331 + $0x88] sm:$0xff]
        %v353 = vld [vmem:[%s331 + $0x90] sm:$0xff]
        %v354 = vld [vmem:[%s331 + $0x98] sm:$0xff]
        %v355 = vld [vmem:[%s331 + $0xa0] sm:$0xff]
        %v356 = vld [vmem:[%s331 + $0xa8] sm:$0xff]
        %v357 = vld [vmem:[%s331 + $0xb0] sm:$0xff]
        %v358 = vld [vmem:[%s331 + $0xb8] sm:$0xff]
        %v359 = vld [vmem:[%s331 + $0xc0] sm:$0xff]
        %v360 = vld [vmem:[%s331 + $0xc8] sm:$0xff]
        %v361 = vld [vmem:[%s331 + $0xd0] sm:$0xff]
        %v362 = vld [vmem:[%s331 + $0xd8] sm:$0xff]
        %v363 = vld [vmem:[%s331 + $0xe0] sm:$0xff]
        %v364 = vld [vmem:[%s331 + $0xe8] sm:$0xff]
        %v365 = vld [vmem:[%s331 + $0xf0] sm:$0xff]
        %v366 = vld [vmem:[%s331 + $0xf8] sm:$0xff]
        %v367 = vld [vmem:[%s331 + $0x100] sm:$0xff]
        %v368 = vld [vmem:[%s331 + $0x108] sm:$0xff]
        %v369 = vld [vmem:[%s331 + $0x110] sm:$0xff]
        %v370 = vld [vmem:[%s331 + $0x118] sm:$0xff]
        %v371 = vld [vmem:[%s331 + $0x120] sm:$0xff]
        %v372 = vld [vmem:[%s331 + $0x128] sm:$0xff]
        %v373 = vld [vmem:[%s331 + $0x130] sm:$0xff]
        %v374 = vld [vmem:[%s331 + $0x138] sm:$0xff]
        %v375 = vld [vmem:[%s331 + $0x140] sm:$0xff]
        %v376 = vld [vmem:[%s331 + $0x148] sm:$0xff]
        %v377 = vld [vmem:[%s331 + $0x150] sm:$0xff]
        %v378 = vld [vmem:[%s331 + $0x158] sm:$0xff]
        %v379 = vld [vmem:[%s331 + $0x160] sm:$0xff]
        %v380 = vld [vmem:[%s331 + $0x168] sm:$0xff]
        %v381 = vld [vmem:[%s331 + $0x170] sm:$0xff]
        %v382 = vld [vmem:[%s331 + $0x178] sm:$0xff]
        %v383 = vld [vmem:[%s331 + $0x180] sm:$0xff]
        %v384 = vld [vmem:[%s331 + $0x188] sm:$0xff]
        %v385 = vld [vmem:[%s331 + $0x190] sm:$0xff]
        %v386 = vld [vmem:[%s331 + $0x198] sm:$0xff]
        %v387 = vld [vmem:[%s331 + $0x1a0] sm:$0xff]
        %v388 = vld [vmem:[%s331 + $0x1a8] sm:$0xff]
        %v389 = vld [vmem:[%s331 + $0x1b0] sm:$0xff]
        %v390 = vld [vmem:[%s331 + $0x1b8] sm:$0xff]
        %v391 = vld [vmem:[%s331 + $0x1c0] sm:$0xff]
        %v392 = vld [vmem:[%s331 + $0x1c8] sm:$0xff]
        %v393 = vld [vmem:[%s331 + $0x1d0] sm:$0xff]
        %v394 = vld [vmem:[%s331 + $0x1d8] sm:$0xff]
        %v395 = vld [vmem:[%s331 + $0x1e0] sm:$0xff]
        %v396 = vld [vmem:[%s331 + $0x1e8] sm:$0xff]
        %v397 = vld [vmem:[%s331 + $0x1f0] sm:$0xff]
        %v398 = vld [vmem:[%s331 + $0x1f8] sm:$0xff]
        %v399 = vpack.c.bf16 %v336, %v335
        %v400 = vpack.c.bf16 %v338, %v337
        %v401 = vpack.c.bf16 %v340, %v339
        %v402 = vpack.c.bf16 %v342, %v341
        %v403 = vpack.c.bf16 %v344, %v343
        %v404 = vpack.c.bf16 %v346, %v345
        %v405 = vpack.c.bf16 %v348, %v347
        %v406 = vpack.c.bf16 %v350, %v349
        %v407 = vpack.c.bf16 %v352, %v351
        %v408 = vpack.c.bf16 %v354, %v353
        %v409 = vpack.c.bf16 %v356, %v355
        %v410 = vpack.c.bf16 %v358, %v357
        %v411 = vpack.c.bf16 %v360, %v359
        %v412 = vpack.c.bf16 %v362, %v361
        %v413 = vpack.c.bf16 %v364, %v363
        %v414 = vpack.c.bf16 %v366, %v365
        %v415 = vpack.c.bf16 %v368, %v367
        %v416 = vpack.c.bf16 %v370, %v369
        %v417 = vpack.c.bf16 %v372, %v371
        %v418 = vpack.c.bf16 %v374, %v373
        %v419 = vpack.c.bf16 %v376, %v375
        %v420 = vpack.c.bf16 %v378, %v377
        %v421 = vpack.c.bf16 %v380, %v379
        %v422 = vpack.c.bf16 %v382, %v381
        %v423 = vpack.c.bf16 %v384, %v383
        %v424 = vpack.c.bf16 %v386, %v385
        %v425 = vpack.c.bf16 %v388, %v387
        %v426 = vpack.c.bf16 %v390, %v389
        %v427 = vpack.c.bf16 %v392, %v391
        %v428 = vpack.c.bf16 %v394, %v393
        %v429 = vpack.c.bf16 %v396, %v395
        %v430 = vpack.c.bf16 %v398, %v397
        %v431 = vld [vmem:[%s1] sm:$0xf]
        %v432 = vld [vmem:[%s2] sm:$0x1]
        %v434 = vperm.slane %v432, 0
        %vm436 = vcmask 64512
        %v438 = vsel %vm436, %v399, 0
        %v441 = vsel %vm436, %v400, 0
        %v444 = vsel %vm436, %v401, 0
        %v447 = vsel %vm436, %v402, 0
        %v450 = vsel %vm436, %v403, 0
        %v453 = vsel %vm436, %v404, 0
        %v456 = vsel %vm436, %v405, 0
        %v459 = vsel %vm436, %v406, 0
        %v462 = vsel %vm436, %v407, 0
        %v465 = vsel %vm436, %v408, 0
        %v468 = vsel %vm436, %v409, 0
        %v471 = vsel %vm436, %v410, 0
        %v474 = vsel %vm436, %v411, 0
        %v477 = vsel %vm436, %v412, 0
        %v480 = vsel %vm436, %v413, 0
        %v483 = vsel %vm436, %v414, 0
        %v486 = vsel %vm436, %v415, 0
        %v489 = vsel %vm436, %v416, 0
        %v492 = vsel %vm436, %v417, 0
        %v495 = vsel %vm436, %v418, 0
        %v498 = vsel %vm436, %v419, 0
        %v501 = vsel %vm436, %v420, 0
        %v504 = vsel %vm436, %v421, 0
        %v507 = vsel %vm436, %v422, 0
        %v510 = vsel %vm436, %v423, 0
        %v513 = vsel %vm436, %v424, 0
        %v516 = vsel %vm436, %v425, 0
        %v519 = vsel %vm436, %v426, 0
        %v522 = vsel %vm436, %v427, 0
        %v525 = vsel %vm436, %v428, 0
        %v528 = vsel %vm436, %v429, 0
        %v531 = vsel %vm436, %v430, 0
        %vm533 = vcmask 1043456
        %v535 = vsel %vm533, %v431, 0
        %537 = vmatpush.bf16.msra.mxu0 0
        %538 = vmatpush.bf16.msra.mxu0 0
        %539 = vmatpush.bf16.msra.mxu0 0
        %540 = vmatpush.bf16.msra.mxu0 0
        %541 = vmatpush.bf16.msra.mxu0 0
        %542 = vmatpush.bf16.msra.mxu0 0
        %543 = vmatpush.bf16.msra.mxu0 0
        %544 = vmatpush.bf16.msra.mxu0 %v535
        %545 = vmatmul.bf16.gmra.mxu0 %v438
        %v546 = vpop.f32.mrf.mxu0
        %v547 = vadd.f32 %v434, %v546
        %v548 = vpop.f32.mrf.mxu0
        %v549 = vadd.f32 %v434, %v548
        %550 = vmatmul.bf16.gmra.mxu0 %v441
        %v551 = vpop.f32.mrf.mxu0
        %v552 = vadd.f32 %v434, %v551
        %v553 = vpop.f32.mrf.mxu0
        %v554 = vadd.f32 %v434, %v553
        %555 = vmatmul.bf16.gmra.mxu0 %v444
        %v556 = vpop.f32.mrf.mxu0
        %v557 = vadd.f32 %v434, %v556
        %v558 = vpop.f32.mrf.mxu0
        %v559 = vadd.f32 %v434, %v558
        %560 = vmatmul.bf16.gmra.mxu0 %v447
        %v561 = vpop.f32.mrf.mxu0
        %v562 = vadd.f32 %v434, %v561
        %v563 = vpop.f32.mrf.mxu0
        %v564 = vadd.f32 %v434, %v563
        %565 = vmatmul.bf16.gmra.mxu0 %v450
        %v566 = vpop.f32.mrf.mxu0
        %v567 = vadd.f32 %v434, %v566
        %v568 = vpop.f32.mrf.mxu0
        %v569 = vadd.f32 %v434, %v568
        %570 = vmatmul.bf16.gmra.mxu0 %v453
        %v571 = vpop.f32.mrf.mxu0
        %v572 = vadd.f32 %v434, %v571
        %v573 = vpop.f32.mrf.mxu0
        %v574 = vadd.f32 %v434, %v573
        %575 = vmatmul.bf16.gmra.mxu0 %v456
        %v576 = vpop.f32.mrf.mxu0
        %v577 = vadd.f32 %v434, %v576
        %v578 = vpop.f32.mrf.mxu0
        %v579 = vadd.f32 %v434, %v578
        %580 = vmatmul.bf16.gmra.mxu0 %v459
        %v581 = vpop.f32.mrf.mxu0
        %v582 = vadd.f32 %v434, %v581
        %v583 = vpop.f32.mrf.mxu0
        %v584 = vadd.f32 %v434, %v583
        %585 = vmatmul.bf16.gmra.mxu0 %v462
        %v586 = vpop.f32.mrf.mxu0
        %v587 = vadd.f32 %v434, %v586
        %v588 = vpop.f32.mrf.mxu0
        %v589 = vadd.f32 %v434, %v588
        %590 = vmatmul.bf16.gmra.mxu0 %v465
        %v591 = vpop.f32.mrf.mxu0
        %v592 = vadd.f32 %v434, %v591
        %v593 = vpop.f32.mrf.mxu0
        %v594 = vadd.f32 %v434, %v593
        %595 = vmatmul.bf16.gmra.mxu0 %v468
        %v596 = vpop.f32.mrf.mxu0
        %v597 = vadd.f32 %v434, %v596
        %v598 = vpop.f32.mrf.mxu0
        %v599 = vadd.f32 %v434, %v598
        %600 = vmatmul.bf16.gmra.mxu0 %v471
        %v601 = vpop.f32.mrf.mxu0
        %v602 = vadd.f32 %v434, %v601
        %v603 = vpop.f32.mrf.mxu0
        %v604 = vadd.f32 %v434, %v603
        %605 = vmatmul.bf16.gmra.mxu0 %v474
        %v606 = vpop.f32.mrf.mxu0
        %v607 = vadd.f32 %v434, %v606
        %v608 = vpop.f32.mrf.mxu0
        %v609 = vadd.f32 %v434, %v608
        %610 = vmatmul.bf16.gmra.mxu0 %v477
        %v611 = vpop.f32.mrf.mxu0
        %v612 = vadd.f32 %v434, %v611
        %v613 = vpop.f32.mrf.mxu0
        %v614 = vadd.f32 %v434, %v613
        %615 = vmatmul.bf16.gmra.mxu0 %v480
        %v616 = vpop.f32.mrf.mxu0
        %v617 = vadd.f32 %v434, %v616
        %v618 = vpop.f32.mrf.mxu0
        %v619 = vadd.f32 %v434, %v618
        %620 = vmatmul.bf16.gmra.mxu0 %v483
        %v621 = vpop.f32.mrf.mxu0
        %v622 = vadd.f32 %v434, %v621
        %v623 = vpop.f32.mrf.mxu0
        %v624 = vadd.f32 %v434, %v623
        %625 = vmatmul.bf16.gmra.mxu0 %v486
        %v626 = vpop.f32.mrf.mxu0
        %v627 = vadd.f32 %v434, %v626
        %v628 = vpop.f32.mrf.mxu0
        %v629 = vadd.f32 %v434, %v628
        %630 = vmatmul.bf16.gmra.mxu0 %v489
        %v631 = vpop.f32.mrf.mxu0
        %v632 = vadd.f32 %v434, %v631
        %v633 = vpop.f32.mrf.mxu0
        %v634 = vadd.f32 %v434, %v633
        %635 = vmatmul.bf16.gmra.mxu0 %v492
        %v636 = vpop.f32.mrf.mxu0
        %v637 = vadd.f32 %v434, %v636
        %v638 = vpop.f32.mrf.mxu0
        %v639 = vadd.f32 %v434, %v638
        %640 = vmatmul.bf16.gmra.mxu0 %v495
        %v641 = vpop.f32.mrf.mxu0
        %v642 = vadd.f32 %v434, %v641
        %v643 = vpop.f32.mrf.mxu0
        %v644 = vadd.f32 %v434, %v643
        %645 = vmatmul.bf16.gmra.mxu0 %v498
        %v646 = vpop.f32.mrf.mxu0
        %v647 = vadd.f32 %v434, %v646
        %v648 = vpop.f32.mrf.mxu0
        %v649 = vadd.f32 %v434, %v648
        %650 = vmatmul.bf16.gmra.mxu0 %v501
        %v651 = vpop.f32.mrf.mxu0
        %v652 = vadd.f32 %v434, %v651
        %v653 = vpop.f32.mrf.mxu0
        %v654 = vadd.f32 %v434, %v653
        %655 = vmatmul.bf16.gmra.mxu0 %v504
        %v656 = vpop.f32.mrf.mxu0
        %v657 = vadd.f32 %v434, %v656
        %v658 = vpop.f32.mrf.mxu0
        %v659 = vadd.f32 %v434, %v658
        %660 = vmatmul.bf16.gmra.mxu0 %v507
        %v661 = vpop.f32.mrf.mxu0
        %v662 = vadd.f32 %v434, %v661
        %v663 = vpop.f32.mrf.mxu0
        %v664 = vadd.f32 %v434, %v663
        %665 = vmatmul.bf16.gmra.mxu0 %v510
        %v666 = vpop.f32.mrf.mxu0
        %v667 = vadd.f32 %v434, %v666
        %v668 = vpop.f32.mrf.mxu0
        %v669 = vadd.f32 %v434, %v668
        %670 = vmatmul.bf16.gmra.mxu0 %v513
        %v671 = vpop.f32.mrf.mxu0
        %v672 = vadd.f32 %v434, %v671
        %v673 = vpop.f32.mrf.mxu0
        %v674 = vadd.f32 %v434, %v673
        %675 = vmatmul.bf16.gmra.mxu0 %v516
        %v676 = vpop.f32.mrf.mxu0
        %v677 = vadd.f32 %v434, %v676
        %v678 = vpop.f32.mrf.mxu0
        %v679 = vadd.f32 %v434, %v678
        %680 = vmatmul.bf16.gmra.mxu0 %v519
        %v681 = vpop.f32.mrf.mxu0
        %v682 = vadd.f32 %v434, %v681
        %v683 = vpop.f32.mrf.mxu0
        %v684 = vadd.f32 %v434, %v683
        %685 = vmatmul.bf16.gmra.mxu0 %v522
        %v686 = vpop.f32.mrf.mxu0
        %v687 = vadd.f32 %v434, %v686
        %v688 = vpop.f32.mrf.mxu0
        %v689 = vadd.f32 %v434, %v688
        %690 = vmatmul.bf16.gmra.mxu0 %v525
        %v691 = vpop.f32.mrf.mxu0
        %v692 = vadd.f32 %v434, %v691
        %v693 = vpop.f32.mrf.mxu0
        %v694 = vadd.f32 %v434, %v693
        %695 = vmatmul.bf16.gmra.mxu0 %v528
        %v696 = vpop.f32.mrf.mxu0
        %v697 = vadd.f32 %v434, %v696
        %v698 = vpop.f32.mrf.mxu0
        %v699 = vadd.f32 %v434, %v698
        %700 = vmatmul.bf16.gmra.mxu0 %v531
        %v701 = vpop.f32.mrf.mxu0
        %v702 = vadd.f32 %v434, %v701
        %v703 = vpop.f32.mrf.mxu0
        %v704 = vadd.f32 %v434, %v703
        %705 = vdwg.mxu0
        %v706 = vmax.f32 %v547, 0.0
        %v707 = vmax.f32 %v549, 0.0
        %v708 = vmax.f32 %v552, 0.0
        %v709 = vmax.f32 %v554, 0.0
        %v710 = vmax.f32 %v557, 0.0
        %v711 = vmax.f32 %v559, 0.0
        %v712 = vmax.f32 %v562, 0.0
        %v713 = vmax.f32 %v564, 0.0
        %v714 = vmax.f32 %v567, 0.0
        %v715 = vmax.f32 %v569, 0.0
        %v716 = vmax.f32 %v572, 0.0
        %v717 = vmax.f32 %v574, 0.0
        %v718 = vmax.f32 %v577, 0.0
        %v719 = vmax.f32 %v579, 0.0
        %v720 = vmax.f32 %v582, 0.0
        %v721 = vmax.f32 %v584, 0.0
        %v722 = vmax.f32 %v587, 0.0
        %v723 = vmax.f32 %v589, 0.0
        %v724 = vmax.f32 %v592, 0.0
        %v725 = vmax.f32 %v594, 0.0
        %v726 = vmax.f32 %v597, 0.0
        %v727 = vmax.f32 %v599, 0.0
        %v728 = vmax.f32 %v602, 0.0
        %v729 = vmax.f32 %v604, 0.0
        %v730 = vmax.f32 %v607, 0.0
        %v731 = vmax.f32 %v609, 0.0
        %v732 = vmax.f32 %v612, 0.0
        %v733 = vmax.f32 %v614, 0.0
        %v734 = vmax.f32 %v617, 0.0
        %v735 = vmax.f32 %v619, 0.0
        %v736 = vmax.f32 %v622, 0.0
        %v737 = vmax.f32 %v624, 0.0
        %v738 = vmax.f32 %v627, 0.0
        %v739 = vmax.f32 %v629, 0.0
        %v740 = vmax.f32 %v632, 0.0
        %v741 = vmax.f32 %v634, 0.0
        %v742 = vmax.f32 %v637, 0.0
        %v743 = vmax.f32 %v639, 0.0
        %v744 = vmax.f32 %v642, 0.0
        %v745 = vmax.f32 %v644, 0.0
        %v746 = vmax.f32 %v647, 0.0
        %v747 = vmax.f32 %v649, 0.0
        %v748 = vmax.f32 %v652, 0.0
        %v749 = vmax.f32 %v654, 0.0
        %v750 = vmax.f32 %v657, 0.0
        %v751 = vmax.f32 %v659, 0.0
        %v752 = vmax.f32 %v662, 0.0
        %v753 = vmax.f32 %v664, 0.0
        %v754 = vmax.f32 %v667, 0.0
        %v755 = vmax.f32 %v669, 0.0
        %v756 = vmax.f32 %v672, 0.0
        %v757 = vmax.f32 %v674, 0.0
        %v758 = vmax.f32 %v677, 0.0
        %v759 = vmax.f32 %v679, 0.0
        %v760 = vmax.f32 %v682, 0.0
        %v761 = vmax.f32 %v684, 0.0
        %v762 = vmax.f32 %v687, 0.0
        %v763 = vmax.f32 %v689, 0.0
        %v764 = vmax.f32 %v692, 0.0
        %v765 = vmax.f32 %v694, 0.0
        %v766 = vmax.f32 %v697, 0.0
        %v767 = vmax.f32 %v699, 0.0
        %v768 = vmax.f32 %v702, 0.0
        %v769 = vmax.f32 %v704, 0.0
        %v770 = vpack.c.bf16 %v707, %v706
        %v771 = vpack.c.bf16 %v709, %v708
        %v772 = vpack.c.bf16 %v711, %v710
        %v773 = vpack.c.bf16 %v713, %v712
        %v774 = vpack.c.bf16 %v715, %v714
        %v775 = vpack.c.bf16 %v717, %v716
        %v776 = vpack.c.bf16 %v719, %v718
        %v777 = vpack.c.bf16 %v721, %v720
        %v778 = vpack.c.bf16 %v723, %v722
        %v779 = vpack.c.bf16 %v725, %v724
        %v780 = vpack.c.bf16 %v727, %v726
        %v781 = vpack.c.bf16 %v729, %v728
        %v782 = vpack.c.bf16 %v731, %v730
        %v783 = vpack.c.bf16 %v733, %v732
        %v784 = vpack.c.bf16 %v735, %v734
        %v785 = vpack.c.bf16 %v737, %v736
        %v786 = vpack.c.bf16 %v739, %v738
        %v787 = vpack.c.bf16 %v741, %v740
        %v788 = vpack.c.bf16 %v743, %v742
        %v789 = vpack.c.bf16 %v745, %v744
        %v790 = vpack.c.bf16 %v747, %v746
        %v791 = vpack.c.bf16 %v749, %v748
        %v792 = vpack.c.bf16 %v751, %v750
        %v793 = vpack.c.bf16 %v753, %v752
        %v794 = vpack.c.bf16 %v755, %v754
        %v795 = vpack.c.bf16 %v757, %v756
        %v796 = vpack.c.bf16 %v759, %v758
        %v797 = vpack.c.bf16 %v761, %v760
        %v798 = vpack.c.bf16 %v763, %v762
        %v799 = vpack.c.bf16 %v765, %v764
        %v800 = vpack.c.bf16 %v767, %v766
        %v801 = vpack.c.bf16 %v769, %v768
        %v802 = vld [vmem:[%s3] sm:$0xff]
        %v803 = vld [vmem:[%s3 + $0x8] sm:$0xff]
        %v804 = vld [vmem:[%s3 + $0x10] sm:$0xff]
        %v805 = vld [vmem:[%s3 + $0x18] sm:$0xff]
        %v806 = vld [vmem:[%s3 + $0x20] sm:$0xff]
        %v807 = vld [vmem:[%s3 + $0x28] sm:$0xff]
        %v808 = vld [vmem:[%s3 + $0x30] sm:$0xff]
        %v809 = vld [vmem:[%s3 + $0x38] sm:$0xff]
        %v810 = vld [vmem:[%s3 + $0x40] sm:$0xff]
        %v811 = vld [vmem:[%s3 + $0x48] sm:$0xff]
        %v812 = vld [vmem:[%s3 + $0x50] sm:$0xff]
        %v813 = vld [vmem:[%s3 + $0x58] sm:$0xff]
        %v814 = vld [vmem:[%s3 + $0x60] sm:$0xff]
        %v815 = vld [vmem:[%s3 + $0x68] sm:$0xff]
        %v816 = vld [vmem:[%s3 + $0x70] sm:$0xff]
        %v817 = vld [vmem:[%s3 + $0x78] sm:$0xff]
        %v818 = vld [vmem:[%s4] sm:$0x3]
        %v820 = vperm.slane %v818, 0
        %v821 = vperm.slane %v818, 1
        %v840 = vunpack.c.l.b16 %v802
        %v841 = vunpack.c.h.b16 %v802
        %v842 = vunpack.c.l.b16 %v803
        %v843 = vunpack.c.h.b16 %v803
        %v844 = vunpack.c.l.b16 %v804
        %v845 = vunpack.c.h.b16 %v804
        %v846 = vunpack.c.l.b16 %v805
        %v847 = vunpack.c.h.b16 %v805
        %v848 = vunpack.c.l.b16 %v806
        %v849 = vunpack.c.h.b16 %v806
        %v850 = vunpack.c.l.b16 %v807
        %v851 = vunpack.c.h.b16 %v807
        %v852 = vunpack.c.l.b16 %v808
        %v853 = vunpack.c.h.b16 %v808
        %v854 = vunpack.c.l.b16 %v809
        %v855 = vunpack.c.h.b16 %v809
        %v856 = vunpack.c.l.b16 %v810
        %v857 = vunpack.c.h.b16 %v810
        %v858 = vunpack.c.l.b16 %v811
        %v859 = vunpack.c.h.b16 %v811
        %v860 = vunpack.c.l.b16 %v812
        %v861 = vunpack.c.h.b16 %v812
        %v862 = vunpack.c.l.b16 %v813
        %v863 = vunpack.c.h.b16 %v813
        %v864 = vunpack.c.l.b16 %v814
        %v865 = vunpack.c.h.b16 %v814
        %v866 = vunpack.c.l.b16 %v815
        %v867 = vunpack.c.h.b16 %v815
        %v868 = vunpack.c.l.b16 %v816
        %v869 = vunpack.c.h.b16 %v816
        %v870 = vunpack.c.l.b16 %v817
        %v871 = vunpack.c.h.b16 %v817
        %v872 = vpack.c.b16 %v842, %v840
        %v873 = vpack.c.b16 %v843, %v841
        %v874 = vpack.c.b16 %v846, %v844
        %v875 = vpack.c.b16 %v847, %v845
        %v876 = vpack.c.b16 %v850, %v848
        %v877 = vpack.c.b16 %v851, %v849
        %v878 = vpack.c.b16 %v854, %v852
        %v879 = vpack.c.b16 %v855, %v853
        %v880 = vpack.c.b16 %v858, %v856
        %v881 = vpack.c.b16 %v859, %v857
        %v882 = vpack.c.b16 %v862, %v860
        %v883 = vpack.c.b16 %v863, %v861
        %v884 = vpack.c.b16 %v866, %v864
        %v885 = vpack.c.b16 %v867, %v865
        %v886 = vpack.c.b16 %v870, %v868
        %v887 = vpack.c.b16 %v871, %v869
        %904 = vmatpush.bf16.msra.mxu0 %v886
        %905 = vmatpush.bf16.msra.mxu0 %v884
        %906 = vmatpush.bf16.msra.mxu0 %v882
        %907 = vmatpush.bf16.msra.mxu0 %v880
        %908 = vmatpush.bf16.msra.mxu0 %v878
        %909 = vmatpush.bf16.msra.mxu0 %v876
        %910 = vmatpush.bf16.msra.mxu0 %v874
        %911 = vmatpush.bf16.msra.mxu0 %v872
        %912 = vmatmul.bf16.gmra.mxu0 %v770
        %v913 = vpop.f32.mrf.mxu0
        %v914 = vadd.f32 %v820, %v913
        %v915 = vpop.f32.mrf.mxu0
        %v916 = vadd.f32 %v820, %v915
        %917 = vmatmul.bf16.gmra.mxu0 %v771
        %v918 = vpop.f32.mrf.mxu0
        %v919 = vadd.f32 %v820, %v918
        %v920 = vpop.f32.mrf.mxu0
        %v921 = vadd.f32 %v820, %v920
        %922 = vmatmul.bf16.gmra.mxu0 %v772
        %v923 = vpop.f32.mrf.mxu0
        %v924 = vadd.f32 %v820, %v923
        %v925 = vpop.f32.mrf.mxu0
        %v926 = vadd.f32 %v820, %v925
        %927 = vmatmul.bf16.gmra.mxu0 %v773
        %v928 = vpop.f32.mrf.mxu0
        %v929 = vadd.f32 %v820, %v928
        %v930 = vpop.f32.mrf.mxu0
        %v931 = vadd.f32 %v820, %v930
        %932 = vmatmul.bf16.gmra.mxu0 %v774
        %v933 = vpop.f32.mrf.mxu0
        %v934 = vadd.f32 %v820, %v933
        %v935 = vpop.f32.mrf.mxu0
        %v936 = vadd.f32 %v820, %v935
        %937 = vmatmul.bf16.gmra.mxu0 %v775
        %v938 = vpop.f32.mrf.mxu0
        %v939 = vadd.f32 %v820, %v938
        %v940 = vpop.f32.mrf.mxu0
        %v941 = vadd.f32 %v820, %v940
        %942 = vmatmul.bf16.gmra.mxu0 %v776
        %v943 = vpop.f32.mrf.mxu0
        %v944 = vadd.f32 %v820, %v943
        %v945 = vpop.f32.mrf.mxu0
        %v946 = vadd.f32 %v820, %v945
        %947 = vmatmul.bf16.gmra.mxu0 %v777
        %v948 = vpop.f32.mrf.mxu0
        %v949 = vadd.f32 %v820, %v948
        %v950 = vpop.f32.mrf.mxu0
        %v951 = vadd.f32 %v820, %v950
        %952 = vmatmul.bf16.gmra.mxu0 %v778
        %v953 = vpop.f32.mrf.mxu0
        %v954 = vadd.f32 %v820, %v953
        %v955 = vpop.f32.mrf.mxu0
        %v956 = vadd.f32 %v820, %v955
        %957 = vmatmul.bf16.gmra.mxu0 %v779
        %v958 = vpop.f32.mrf.mxu0
        %v959 = vadd.f32 %v820, %v958
        %v960 = vpop.f32.mrf.mxu0
        %v961 = vadd.f32 %v820, %v960
        %962 = vmatmul.bf16.gmra.mxu0 %v780
        %v963 = vpop.f32.mrf.mxu0
        %v964 = vadd.f32 %v820, %v963
        %v965 = vpop.f32.mrf.mxu0
        %v966 = vadd.f32 %v820, %v965
        %967 = vmatmul.bf16.gmra.mxu0 %v781
        %v968 = vpop.f32.mrf.mxu0
        %v969 = vadd.f32 %v820, %v968
        %v970 = vpop.f32.mrf.mxu0
        %v971 = vadd.f32 %v820, %v970
        %972 = vmatmul.bf16.gmra.mxu0 %v782
        %v973 = vpop.f32.mrf.mxu0
        %v974 = vadd.f32 %v820, %v973
        %v975 = vpop.f32.mrf.mxu0
        %v976 = vadd.f32 %v820, %v975
        %977 = vmatmul.bf16.gmra.mxu0 %v783
        %v978 = vpop.f32.mrf.mxu0
        %v979 = vadd.f32 %v820, %v978
        %v980 = vpop.f32.mrf.mxu0
        %v981 = vadd.f32 %v820, %v980
        %982 = vmatmul.bf16.gmra.mxu0 %v784
        %v983 = vpop.f32.mrf.mxu0
        %v984 = vadd.f32 %v820, %v983
        %v985 = vpop.f32.mrf.mxu0
        %v986 = vadd.f32 %v820, %v985
        %987 = vmatmul.bf16.gmra.mxu0 %v785
        %v988 = vpop.f32.mrf.mxu0
        %v989 = vadd.f32 %v820, %v988
        %v990 = vpop.f32.mrf.mxu0
        %v991 = vadd.f32 %v820, %v990
        %992 = vmatmul.bf16.gmra.mxu0 %v786
        %v993 = vpop.f32.mrf.mxu0
        %v994 = vadd.f32 %v820, %v993
        %v995 = vpop.f32.mrf.mxu0
        %v996 = vadd.f32 %v820, %v995
        %997 = vmatmul.bf16.gmra.mxu0 %v787
        %v998 = vpop.f32.mrf.mxu0
        %v999 = vadd.f32 %v820, %v998
        %v1000 = vpop.f32.mrf.mxu0
        %v1001 = vadd.f32 %v820, %v1000
        %1002 = vmatmul.bf16.gmra.mxu0 %v788
        %v1003 = vpop.f32.mrf.mxu0
        %v1004 = vadd.f32 %v820, %v1003
        %v1005 = vpop.f32.mrf.mxu0
        %v1006 = vadd.f32 %v820, %v1005
        %1007 = vmatmul.bf16.gmra.mxu0 %v789
        %v1008 = vpop.f32.mrf.mxu0
        %v1009 = vadd.f32 %v820, %v1008
        %v1010 = vpop.f32.mrf.mxu0
        %v1011 = vadd.f32 %v820, %v1010
        %1012 = vmatmul.bf16.gmra.mxu0 %v790
        %v1013 = vpop.f32.mrf.mxu0
        %v1014 = vadd.f32 %v820, %v1013
        %v1015 = vpop.f32.mrf.mxu0
        %v1016 = vadd.f32 %v820, %v1015
        %1017 = vmatmul.bf16.gmra.mxu0 %v791
        %v1018 = vpop.f32.mrf.mxu0
        %v1019 = vadd.f32 %v820, %v1018
        %v1020 = vpop.f32.mrf.mxu0
        %v1021 = vadd.f32 %v820, %v1020
        %1022 = vmatmul.bf16.gmra.mxu0 %v792
        %v1023 = vpop.f32.mrf.mxu0
        %v1024 = vadd.f32 %v820, %v1023
        %v1025 = vpop.f32.mrf.mxu0
        %v1026 = vadd.f32 %v820, %v1025
        %1027 = vmatmul.bf16.gmra.mxu0 %v793
        %v1028 = vpop.f32.mrf.mxu0
        %v1029 = vadd.f32 %v820, %v1028
        %v1030 = vpop.f32.mrf.mxu0
        %v1031 = vadd.f32 %v820, %v1030
        %1032 = vmatmul.bf16.gmra.mxu0 %v794
        %v1033 = vpop.f32.mrf.mxu0
        %v1034 = vadd.f32 %v820, %v1033
        %v1035 = vpop.f32.mrf.mxu0
        %v1036 = vadd.f32 %v820, %v1035
        %1037 = vmatmul.bf16.gmra.mxu0 %v795
        %v1038 = vpop.f32.mrf.mxu0
        %v1039 = vadd.f32 %v820, %v1038
        %v1040 = vpop.f32.mrf.mxu0
        %v1041 = vadd.f32 %v820, %v1040
        %1042 = vmatmul.bf16.gmra.mxu0 %v796
        %v1043 = vpop.f32.mrf.mxu0
        %v1044 = vadd.f32 %v820, %v1043
        %v1045 = vpop.f32.mrf.mxu0
        %v1046 = vadd.f32 %v820, %v1045
        %1047 = vmatmul.bf16.gmra.mxu0 %v797
        %v1048 = vpop.f32.mrf.mxu0
        %v1049 = vadd.f32 %v820, %v1048
        %v1050 = vpop.f32.mrf.mxu0
        %v1051 = vadd.f32 %v820, %v1050
        %1052 = vmatmul.bf16.gmra.mxu0 %v798
        %v1053 = vpop.f32.mrf.mxu0
        %v1054 = vadd.f32 %v820, %v1053
        %v1055 = vpop.f32.mrf.mxu0
        %v1056 = vadd.f32 %v820, %v1055
        %1057 = vmatmul.bf16.gmra.mxu0 %v799
        %v1058 = vpop.f32.mrf.mxu0
        %v1059 = vadd.f32 %v820, %v1058
        %v1060 = vpop.f32.mrf.mxu0
        %v1061 = vadd.f32 %v820, %v1060
        %1062 = vmatmul.bf16.gmra.mxu0 %v800
        %v1063 = vpop.f32.mrf.mxu0
        %v1064 = vadd.f32 %v820, %v1063
        %v1065 = vpop.f32.mrf.mxu0
        %v1066 = vadd.f32 %v820, %v1065
        %1067 = vmatmul.bf16.gmra.mxu0 %v801
        %v1068 = vpop.f32.mrf.mxu0
        %v1069 = vadd.f32 %v820, %v1068
        %v1070 = vpop.f32.mrf.mxu0
        %v1071 = vadd.f32 %v820, %v1070
        %1072 = vdwg.mxu0
        %1073 = vmatpush.bf16.msra.mxu0 %v887
        %1074 = vmatpush.bf16.msra.mxu0 %v885
        %1075 = vmatpush.bf16.msra.mxu0 %v883
        %1076 = vmatpush.bf16.msra.mxu0 %v881
        %1077 = vmatpush.bf16.msra.mxu0 %v879
        %1078 = vmatpush.bf16.msra.mxu0 %v877
        %1079 = vmatpush.bf16.msra.mxu0 %v875
        %1080 = vmatpush.bf16.msra.mxu0 %v873
        %1081 = vmatmul.bf16.gmra.mxu0 %v770
        %v1082 = vpop.f32.mrf.mxu0
        %v1083 = vadd.f32 %v821, %v1082
        %v1084 = vpop.f32.mrf.mxu0
        %v1085 = vadd.f32 %v821, %v1084
        %1086 = vmatmul.bf16.gmra.mxu0 %v771
        %v1087 = vpop.f32.mrf.mxu0
        %v1088 = vadd.f32 %v821, %v1087
        %v1089 = vpop.f32.mrf.mxu0
        %v1090 = vadd.f32 %v821, %v1089
        %1091 = vmatmul.bf16.gmra.mxu0 %v772
        %v1092 = vpop.f32.mrf.mxu0
        %v1093 = vadd.f32 %v821, %v1092
        %v1094 = vpop.f32.mrf.mxu0
        %v1095 = vadd.f32 %v821, %v1094
        %1096 = vmatmul.bf16.gmra.mxu0 %v773
        %v1097 = vpop.f32.mrf.mxu0
        %v1098 = vadd.f32 %v821, %v1097
        %v1099 = vpop.f32.mrf.mxu0
        %v1100 = vadd.f32 %v821, %v1099
        %1101 = vmatmul.bf16.gmra.mxu0 %v774
        %v1102 = vpop.f32.mrf.mxu0
        %v1103 = vadd.f32 %v821, %v1102
        %v1104 = vpop.f32.mrf.mxu0
        %v1105 = vadd.f32 %v821, %v1104
        %1106 = vmatmul.bf16.gmra.mxu0 %v775
        %v1107 = vpop.f32.mrf.mxu0
        %v1108 = vadd.f32 %v821, %v1107
        %v1109 = vpop.f32.mrf.mxu0
        %v1110 = vadd.f32 %v821, %v1109
        %1111 = vmatmul.bf16.gmra.mxu0 %v776
        %v1112 = vpop.f32.mrf.mxu0
        %v1113 = vadd.f32 %v821, %v1112
        %v1114 = vpop.f32.mrf.mxu0
        %v1115 = vadd.f32 %v821, %v1114
        %1116 = vmatmul.bf16.gmra.mxu0 %v777
        %v1117 = vpop.f32.mrf.mxu0
        %v1118 = vadd.f32 %v821, %v1117
        %v1119 = vpop.f32.mrf.mxu0
        %v1120 = vadd.f32 %v821, %v1119
        %1121 = vmatmul.bf16.gmra.mxu0 %v778
        %v1122 = vpop.f32.mrf.mxu0
        %v1123 = vadd.f32 %v821, %v1122
        %v1124 = vpop.f32.mrf.mxu0
        %v1125 = vadd.f32 %v821, %v1124
        %1126 = vmatmul.bf16.gmra.mxu0 %v779
        %v1127 = vpop.f32.mrf.mxu0
        %v1128 = vadd.f32 %v821, %v1127
        %v1129 = vpop.f32.mrf.mxu0
        %v1130 = vadd.f32 %v821, %v1129
        %1131 = vmatmul.bf16.gmra.mxu0 %v780
        %v1132 = vpop.f32.mrf.mxu0
        %v1133 = vadd.f32 %v821, %v1132
        %v1134 = vpop.f32.mrf.mxu0
        %v1135 = vadd.f32 %v821, %v1134
        %1136 = vmatmul.bf16.gmra.mxu0 %v781
        %v1137 = vpop.f32.mrf.mxu0
        %v1138 = vadd.f32 %v821, %v1137
        %v1139 = vpop.f32.mrf.mxu0
        %v1140 = vadd.f32 %v821, %v1139
        %1141 = vmatmul.bf16.gmra.mxu0 %v782
        %v1142 = vpop.f32.mrf.mxu0
        %v1143 = vadd.f32 %v821, %v1142
        %v1144 = vpop.f32.mrf.mxu0
        %v1145 = vadd.f32 %v821, %v1144
        %1146 = vmatmul.bf16.gmra.mxu0 %v783
        %v1147 = vpop.f32.mrf.mxu0
        %v1148 = vadd.f32 %v821, %v1147
        %v1149 = vpop.f32.mrf.mxu0
        %v1150 = vadd.f32 %v821, %v1149
        %1151 = vmatmul.bf16.gmra.mxu0 %v784
        %v1152 = vpop.f32.mrf.mxu0
        %v1153 = vadd.f32 %v821, %v1152
        %v1154 = vpop.f32.mrf.mxu0
        %v1155 = vadd.f32 %v821, %v1154
        %1156 = vmatmul.bf16.gmra.mxu0 %v785
        %v1157 = vpop.f32.mrf.mxu0
        %v1158 = vadd.f32 %v821, %v1157
        %v1159 = vpop.f32.mrf.mxu0
        %v1160 = vadd.f32 %v821, %v1159
        %1161 = vmatmul.bf16.gmra.mxu0 %v786
        %v1162 = vpop.f32.mrf.mxu0
        %v1163 = vadd.f32 %v821, %v1162
        %v1164 = vpop.f32.mrf.mxu0
        %v1165 = vadd.f32 %v821, %v1164
        %1166 = vmatmul.bf16.gmra.mxu0 %v787
        %v1167 = vpop.f32.mrf.mxu0
        %v1168 = vadd.f32 %v821, %v1167
        %v1169 = vpop.f32.mrf.mxu0
        %v1170 = vadd.f32 %v821, %v1169
        %1171 = vmatmul.bf16.gmra.mxu0 %v788
        %v1172 = vpop.f32.mrf.mxu0
        %v1173 = vadd.f32 %v821, %v1172
        %v1174 = vpop.f32.mrf.mxu0
        %v1175 = vadd.f32 %v821, %v1174
        %1176 = vmatmul.bf16.gmra.mxu0 %v789
        %v1177 = vpop.f32.mrf.mxu0
        %v1178 = vadd.f32 %v821, %v1177
        %v1179 = vpop.f32.mrf.mxu0
        %v1180 = vadd.f32 %v821, %v1179
        %1181 = vmatmul.bf16.gmra.mxu0 %v790
        %v1182 = vpop.f32.mrf.mxu0
        %v1183 = vadd.f32 %v821, %v1182
        %v1184 = vpop.f32.mrf.mxu0
        %v1185 = vadd.f32 %v821, %v1184
        %1186 = vmatmul.bf16.gmra.mxu0 %v791
        %v1187 = vpop.f32.mrf.mxu0
        %v1188 = vadd.f32 %v821, %v1187
        %v1189 = vpop.f32.mrf.mxu0
        %v1190 = vadd.f32 %v821, %v1189
        %1191 = vmatmul.bf16.gmra.mxu0 %v792
        %v1192 = vpop.f32.mrf.mxu0
        %v1193 = vadd.f32 %v821, %v1192
        %v1194 = vpop.f32.mrf.mxu0
        %v1195 = vadd.f32 %v821, %v1194
        %1196 = vmatmul.bf16.gmra.mxu0 %v793
        %v1197 = vpop.f32.mrf.mxu0
        %v1198 = vadd.f32 %v821, %v1197
        %v1199 = vpop.f32.mrf.mxu0
        %v1200 = vadd.f32 %v821, %v1199
        %1201 = vmatmul.bf16.gmra.mxu0 %v794
        %v1202 = vpop.f32.mrf.mxu0
        %v1203 = vadd.f32 %v821, %v1202
        %v1204 = vpop.f32.mrf.mxu0
        %v1205 = vadd.f32 %v821, %v1204
        %1206 = vmatmul.bf16.gmra.mxu0 %v795
        %v1207 = vpop.f32.mrf.mxu0
        %v1208 = vadd.f32 %v821, %v1207
        %v1209 = vpop.f32.mrf.mxu0
        %v1210 = vadd.f32 %v821, %v1209
        %1211 = vmatmul.bf16.gmra.mxu0 %v796
        %v1212 = vpop.f32.mrf.mxu0
        %v1213 = vadd.f32 %v821, %v1212
        %v1214 = vpop.f32.mrf.mxu0
        %v1215 = vadd.f32 %v821, %v1214
        %1216 = vmatmul.bf16.gmra.mxu0 %v797
        %v1217 = vpop.f32.mrf.mxu0
        %v1218 = vadd.f32 %v821, %v1217
        %v1219 = vpop.f32.mrf.mxu0
        %v1220 = vadd.f32 %v821, %v1219
        %1221 = vmatmul.bf16.gmra.mxu0 %v798
        %v1222 = vpop.f32.mrf.mxu0
        %v1223 = vadd.f32 %v821, %v1222
        %v1224 = vpop.f32.mrf.mxu0
        %v1225 = vadd.f32 %v821, %v1224
        %1226 = vmatmul.bf16.gmra.mxu0 %v799
        %v1227 = vpop.f32.mrf.mxu0
        %v1228 = vadd.f32 %v821, %v1227
        %v1229 = vpop.f32.mrf.mxu0
        %v1230 = vadd.f32 %v821, %v1229
        %1231 = vmatmul.bf16.gmra.mxu0 %v800
        %v1232 = vpop.f32.mrf.mxu0
        %v1233 = vadd.f32 %v821, %v1232
        %v1234 = vpop.f32.mrf.mxu0
        %v1235 = vadd.f32 %v821, %v1234
        %1236 = vmatmul.bf16.gmra.mxu0 %v801
        %v1237 = vpop.f32.mrf.mxu0
        %v1238 = vadd.f32 %v821, %v1237
        %v1239 = vpop.f32.mrf.mxu0
        %v1240 = vadd.f32 %v821, %v1239
        %1241 = vdwg.mxu0
        %v1242 = vmax.f32 %v914, 0.0
        %v1243 = vmax.f32 %v1083, 0.0
        %v1244 = vmax.f32 %v916, 0.0
        %v1245 = vmax.f32 %v1085, 0.0
        %v1246 = vmax.f32 %v919, 0.0
        %v1247 = vmax.f32 %v1088, 0.0
        %v1248 = vmax.f32 %v921, 0.0
        %v1249 = vmax.f32 %v1090, 0.0
        %v1250 = vmax.f32 %v924, 0.0
        %v1251 = vmax.f32 %v1093, 0.0
        %v1252 = vmax.f32 %v926, 0.0
        %v1253 = vmax.f32 %v1095, 0.0
        %v1254 = vmax.f32 %v929, 0.0
        %v1255 = vmax.f32 %v1098, 0.0
        %v1256 = vmax.f32 %v931, 0.0
        %v1257 = vmax.f32 %v1100, 0.0
        %v1258 = vmax.f32 %v934, 0.0
        %v1259 = vmax.f32 %v1103, 0.0
        %v1260 = vmax.f32 %v936, 0.0
        %v1261 = vmax.f32 %v1105, 0.0
        %v1262 = vmax.f32 %v939, 0.0
        %v1263 = vmax.f32 %v1108, 0.0
        %v1264 = vmax.f32 %v941, 0.0
        %v1265 = vmax.f32 %v1110, 0.0
        %v1266 = vmax.f32 %v944, 0.0
        %v1267 = vmax.f32 %v1113, 0.0
        %v1268 = vmax.f32 %v946, 0.0
        %v1269 = vmax.f32 %v1115, 0.0
        %v1270 = vmax.f32 %v949, 0.0
        %v1271 = vmax.f32 %v1118, 0.0
        %v1272 = vmax.f32 %v951, 0.0
        %v1273 = vmax.f32 %v1120, 0.0
        %v1274 = vmax.f32 %v954, 0.0
        %v1275 = vmax.f32 %v1123, 0.0
        %v1276 = vmax.f32 %v956, 0.0
        %v1277 = vmax.f32 %v1125, 0.0
        %v1278 = vmax.f32 %v959, 0.0
        %v1279 = vmax.f32 %v1128, 0.0
        %v1280 = vmax.f32 %v961, 0.0
        %v1281 = vmax.f32 %v1130, 0.0
        %v1282 = vmax.f32 %v964, 0.0
        %v1283 = vmax.f32 %v1133, 0.0
        %v1284 = vmax.f32 %v966, 0.0
        %v1285 = vmax.f32 %v1135, 0.0
        %v1286 = vmax.f32 %v969, 0.0
        %v1287 = vmax.f32 %v1138, 0.0
        %v1288 = vmax.f32 %v971, 0.0
        %v1289 = vmax.f32 %v1140, 0.0
        %v1290 = vmax.f32 %v974, 0.0
        %v1291 = vmax.f32 %v1143, 0.0
        %v1292 = vmax.f32 %v976, 0.0
        %v1293 = vmax.f32 %v1145, 0.0
        %v1294 = vmax.f32 %v979, 0.0
        %v1295 = vmax.f32 %v1148, 0.0
        %v1296 = vmax.f32 %v981, 0.0
        %v1297 = vmax.f32 %v1150, 0.0
        %v1298 = vmax.f32 %v984, 0.0
        %v1299 = vmax.f32 %v1153, 0.0
        %v1300 = vmax.f32 %v986, 0.0
        %v1301 = vmax.f32 %v1155, 0.0
        %v1302 = vmax.f32 %v989, 0.0
        %v1303 = vmax.f32 %v1158, 0.0
        %v1304 = vmax.f32 %v991, 0.0
        %v1305 = vmax.f32 %v1160, 0.0
        %v1306 = vmax.f32 %v994, 0.0
        %v1307 = vmax.f32 %v1163, 0.0
        %v1308 = vmax.f32 %v996, 0.0
        %v1309 = vmax.f32 %v1165, 0.0
        %v1310 = vmax.f32 %v999, 0.0
        %v1311 = vmax.f32 %v1168, 0.0
        %v1312 = vmax.f32 %v1001, 0.0
        %v1313 = vmax.f32 %v1170, 0.0
        %v1314 = vmax.f32 %v1004, 0.0
        %v1315 = vmax.f32 %v1173, 0.0
        %v1316 = vmax.f32 %v1006, 0.0
        %v1317 = vmax.f32 %v1175, 0.0
        %v1318 = vmax.f32 %v1009, 0.0
        %v1319 = vmax.f32 %v1178, 0.0
        %v1320 = vmax.f32 %v1011, 0.0
        %v1321 = vmax.f32 %v1180, 0.0
        %v1322 = vmax.f32 %v1014, 0.0
        %v1323 = vmax.f32 %v1183, 0.0
        %v1324 = vmax.f32 %v1016, 0.0
        %v1325 = vmax.f32 %v1185, 0.0
        %v1326 = vmax.f32 %v1019, 0.0
        %v1327 = vmax.f32 %v1188, 0.0
        %v1328 = vmax.f32 %v1021, 0.0
        %v1329 = vmax.f32 %v1190, 0.0
        %v1330 = vmax.f32 %v1024, 0.0
        %v1331 = vmax.f32 %v1193, 0.0
        %v1332 = vmax.f32 %v1026, 0.0
        %v1333 = vmax.f32 %v1195, 0.0
        %v1334 = vmax.f32 %v1029, 0.0
        %v1335 = vmax.f32 %v1198, 0.0
        %v1336 = vmax.f32 %v1031, 0.0
        %v1337 = vmax.f32 %v1200, 0.0
        %v1338 = vmax.f32 %v1034, 0.0
        %v1339 = vmax.f32 %v1203, 0.0
        %v1340 = vmax.f32 %v1036, 0.0
        %v1341 = vmax.f32 %v1205, 0.0
        %v1342 = vmax.f32 %v1039, 0.0
        %v1343 = vmax.f32 %v1208, 0.0
        %v1344 = vmax.f32 %v1041, 0.0
        %v1345 = vmax.f32 %v1210, 0.0
        %v1346 = vmax.f32 %v1044, 0.0
        %v1347 = vmax.f32 %v1213, 0.0
        %v1348 = vmax.f32 %v1046, 0.0
        %v1349 = vmax.f32 %v1215, 0.0
        %v1350 = vmax.f32 %v1049, 0.0
        %v1351 = vmax.f32 %v1218, 0.0
        %v1352 = vmax.f32 %v1051, 0.0
        %v1353 = vmax.f32 %v1220, 0.0
        %v1354 = vmax.f32 %v1054, 0.0
        %v1355 = vmax.f32 %v1223, 0.0
        %v1356 = vmax.f32 %v1056, 0.0
        %v1357 = vmax.f32 %v1225, 0.0
        %v1358 = vmax.f32 %v1059, 0.0
        %v1359 = vmax.f32 %v1228, 0.0
        %v1360 = vmax.f32 %v1061, 0.0
        %v1361 = vmax.f32 %v1230, 0.0
        %v1362 = vmax.f32 %v1064, 0.0
        %v1363 = vmax.f32 %v1233, 0.0
        %v1364 = vmax.f32 %v1066, 0.0
        %v1365 = vmax.f32 %v1235, 0.0
        %v1366 = vmax.f32 %v1069, 0.0
        %v1367 = vmax.f32 %v1238, 0.0
        %v1368 = vmax.f32 %v1071, 0.0
        %v1369 = vmax.f32 %v1240, 0.0
        %v1370 = vpack.c.bf16 %v1244, %v1242
        %v1371 = vpack.c.bf16 %v1245, %v1243
        %v1372 = vpack.c.bf16 %v1248, %v1246
        %v1373 = vpack.c.bf16 %v1249, %v1247
        %v1374 = vpack.c.bf16 %v1252, %v1250
        %v1375 = vpack.c.bf16 %v1253, %v1251
        %v1376 = vpack.c.bf16 %v1256, %v1254
        %v1377 = vpack.c.bf16 %v1257, %v1255
        %v1378 = vpack.c.bf16 %v1260, %v1258
        %v1379 = vpack.c.bf16 %v1261, %v1259
        %v1380 = vpack.c.bf16 %v1264, %v1262
        %v1381 = vpack.c.bf16 %v1265, %v1263
        %v1382 = vpack.c.bf16 %v1268, %v1266
        %v1383 = vpack.c.bf16 %v1269, %v1267
        %v1384 = vpack.c.bf16 %v1272, %v1270
        %v1385 = vpack.c.bf16 %v1273, %v1271
        %v1386 = vpack.c.bf16 %v1276, %v1274
        %v1387 = vpack.c.bf16 %v1277, %v1275
        %v1388 = vpack.c.bf16 %v1280, %v1278
        %v1389 = vpack.c.bf16 %v1281, %v1279
        %v1390 = vpack.c.bf16 %v1284, %v1282
        %v1391 = vpack.c.bf16 %v1285, %v1283
        %v1392 = vpack.c.bf16 %v1288, %v1286
        %v1393 = vpack.c.bf16 %v1289, %v1287
        %v1394 = vpack.c.bf16 %v1292, %v1290
        %v1395 = vpack.c.bf16 %v1293, %v1291
        %v1396 = vpack.c.bf16 %v1296, %v1294
        %v1397 = vpack.c.bf16 %v1297, %v1295
        %v1398 = vpack.c.bf16 %v1300, %v1298
        %v1399 = vpack.c.bf16 %v1301, %v1299
        %v1400 = vpack.c.bf16 %v1304, %v1302
        %v1401 = vpack.c.bf16 %v1305, %v1303
        %v1402 = vpack.c.bf16 %v1308, %v1306
        %v1403 = vpack.c.bf16 %v1309, %v1307
        %v1404 = vpack.c.bf16 %v1312, %v1310
        %v1405 = vpack.c.bf16 %v1313, %v1311
        %v1406 = vpack.c.bf16 %v1316, %v1314
        %v1407 = vpack.c.bf16 %v1317, %v1315
        %v1408 = vpack.c.bf16 %v1320, %v1318
        %v1409 = vpack.c.bf16 %v1321, %v1319
        %v1410 = vpack.c.bf16 %v1324, %v1322
        %v1411 = vpack.c.bf16 %v1325, %v1323
        %v1412 = vpack.c.bf16 %v1328, %v1326
        %v1413 = vpack.c.bf16 %v1329, %v1327
        %v1414 = vpack.c.bf16 %v1332, %v1330
        %v1415 = vpack.c.bf16 %v1333, %v1331
        %v1416 = vpack.c.bf16 %v1336, %v1334
        %v1417 = vpack.c.bf16 %v1337, %v1335
        %v1418 = vpack.c.bf16 %v1340, %v1338
        %v1419 = vpack.c.bf16 %v1341, %v1339
        %v1420 = vpack.c.bf16 %v1344, %v1342
        %v1421 = vpack.c.bf16 %v1345, %v1343
        %v1422 = vpack.c.bf16 %v1348, %v1346
        %v1423 = vpack.c.bf16 %v1349, %v1347
        %v1424 = vpack.c.bf16 %v1352, %v1350
        %v1425 = vpack.c.bf16 %v1353, %v1351
        %v1426 = vpack.c.bf16 %v1356, %v1354
        %v1427 = vpack.c.bf16 %v1357, %v1355
        %v1428 = vpack.c.bf16 %v1360, %v1358
        %v1429 = vpack.c.bf16 %v1361, %v1359
        %v1430 = vpack.c.bf16 %v1364, %v1362
        %v1431 = vpack.c.bf16 %v1365, %v1363
        %v1432 = vpack.c.bf16 %v1368, %v1366
        %v1433 = vpack.c.bf16 %v1369, %v1367
        %v1434 = vld [vmem:[%s5] sm:$0xff]
        %v1435 = vld [vmem:[%s5 + $0x8] sm:$0xff]
        %v1436 = vld [vmem:[%s5 + $0x10] sm:$0xff]
        %v1437 = vld [vmem:[%s5 + $0x18] sm:$0xff]
        %v1438 = vld [vmem:[%s5 + $0x20] sm:$0xff]
        %v1439 = vld [vmem:[%s5 + $0x28] sm:$0xff]
        %v1440 = vld [vmem:[%s5 + $0x30] sm:$0xff]
        %v1441 = vld [vmem:[%s5 + $0x38] sm:$0xff]
        %v1442 = vld [vmem:[%s5 + $0x40] sm:$0xff]
        %v1443 = vld [vmem:[%s5 + $0x48] sm:$0xff]
        %v1444 = vld [vmem:[%s5 + $0x50] sm:$0xff]
        %v1445 = vld [vmem:[%s5 + $0x58] sm:$0xff]
        %v1446 = vld [vmem:[%s5 + $0x60] sm:$0xff]
        %v1447 = vld [vmem:[%s5 + $0x68] sm:$0xff]
        %v1448 = vld [vmem:[%s5 + $0x70] sm:$0xff]
        %v1449 = vld [vmem:[%s5 + $0x78] sm:$0xff]
        %v1450 = vld [vmem:[%s5 + $0x80] sm:$0xff]
        %v1451 = vld [vmem:[%s5 + $0x88] sm:$0xff]
        %v1452 = vld [vmem:[%s5 + $0x90] sm:$0xff]
        %v1453 = vld [vmem:[%s5 + $0x98] sm:$0xff]
        %v1454 = vld [vmem:[%s5 + $0xa0] sm:$0xff]
        %v1455 = vld [vmem:[%s5 + $0xa8] sm:$0xff]
        %v1456 = vld [vmem:[%s5 + $0xb0] sm:$0xff]
        %v1457 = vld [vmem:[%s5 + $0xb8] sm:$0xff]
        %v1458 = vld [vmem:[%s5 + $0xc0] sm:$0xff]
        %v1459 = vld [vmem:[%s5 + $0xc8] sm:$0xff]
        %v1460 = vld [vmem:[%s5 + $0xd0] sm:$0xff]
        %v1461 = vld [vmem:[%s5 + $0xd8] sm:$0xff]
        %v1462 = vld [vmem:[%s5 + $0xe0] sm:$0xff]
        %v1463 = vld [vmem:[%s5 + $0xe8] sm:$0xff]
        %v1464 = vld [vmem:[%s5 + $0xf0] sm:$0xff]
        %v1465 = vld [vmem:[%s5 + $0xf8] sm:$0xff]
        %v1466 = vld [vmem:[%s6] sm:$0x3]
        %v1468 = vperm.slane %v1466, 0
        %v1469 = vperm.slane %v1466, 1
        %v1504 = vunpack.c.l.b16 %v1434
        %v1505 = vunpack.c.h.b16 %v1434
        %v1506 = vunpack.c.l.b16 %v1435
        %v1507 = vunpack.c.h.b16 %v1435
        %v1508 = vunpack.c.l.b16 %v1436
        %v1509 = vunpack.c.h.b16 %v1436
        %v1510 = vunpack.c.l.b16 %v1437
        %v1511 = vunpack.c.h.b16 %v1437
        %v1512 = vunpack.c.l.b16 %v1438
        %v1513 = vunpack.c.h.b16 %v1438
        %v1514 = vunpack.c.l.b16 %v1439
        %v1515 = vunpack.c.h.b16 %v1439
        %v1516 = vunpack.c.l.b16 %v1440
        %v1517 = vunpack.c.h.b16 %v1440
        %v1518 = vunpack.c.l.b16 %v1441
        %v1519 = vunpack.c.h.b16 %v1441
        %v1520 = vunpack.c.l.b16 %v1442
        %v1521 = vunpack.c.h.b16 %v1442
        %v1522 = vunpack.c.l.b16 %v1443
        %v1523 = vunpack.c.h.b16 %v1443
        %v1524 = vunpack.c.l.b16 %v1444
        %v1525 = vunpack.c.h.b16 %v1444
        %v1526 = vunpack.c.l.b16 %v1445
        %v1527 = vunpack.c.h.b16 %v1445
        %v1528 = vunpack.c.l.b16 %v1446
        %v1529 = vunpack.c.h.b16 %v1446
        %v1530 = vunpack.c.l.b16 %v1447
        %v1531 = vunpack.c.h.b16 %v1447
        %v1532 = vunpack.c.l.b16 %v1448
        %v1533 = vunpack.c.h.b16 %v1448
        %v1534 = vunpack.c.l.b16 %v1449
        %v1535 = vunpack.c.h.b16 %v1449
        %v1536 = vunpack.c.l.b16 %v1450
        %v1537 = vunpack.c.h.b16 %v1450
        %v1538 = vunpack.c.l.b16 %v1451
        %v1539 = vunpack.c.h.b16 %v1451
        %v1540 = vunpack.c.l.b16 %v1452
        %v1541 = vunpack.c.h.b16 %v1452
        %v1542 = vunpack.c.l.b16 %v1453
        %v1543 = vunpack.c.h.b16 %v1453
        %v1544 = vunpack.c.l.b16 %v1454
        %v1545 = vunpack.c.h.b16 %v1454
        %v1546 = vunpack.c.l.b16 %v1455
        %v1547 = vunpack.c.h.b16 %v1455
        %v1548 = vunpack.c.l.b16 %v1456
        %v1549 = vunpack.c.h.b16 %v1456
        %v1550 = vunpack.c.l.b16 %v1457
        %v1551 = vunpack.c.h.b16 %v1457
        %v1552 = vunpack.c.l.b16 %v1458
        %v1553 = vunpack.c.h.b16 %v1458
        %v1554 = vunpack.c.l.b16 %v1459
        %v1555 = vunpack.c.h.b16 %v1459
        %v1556 = vunpack.c.l.b16 %v1460
        %v1557 = vunpack.c.h.b16 %v1460
        %v1558 = vunpack.c.l.b16 %v1461
        %v1559 = vunpack.c.h.b16 %v1461
        %v1560 = vunpack.c.l.b16 %v1462
        %v1561 = vunpack.c.h.b16 %v1462
        %v1562 = vunpack.c.l.b16 %v1463
        %v1563 = vunpack.c.h.b16 %v1463
        %v1564 = vunpack.c.l.b16 %v1464
        %v1565 = vunpack.c.h.b16 %v1464
        %v1566 = vunpack.c.l.b16 %v1465
        %v1567 = vunpack.c.h.b16 %v1465
        %v1568 = vpack.c.b16 %v1506, %v1504
        %v1569 = vpack.c.b16 %v1507, %v1505
        %v1570 = vpack.c.b16 %v1510, %v1508
        %v1571 = vpack.c.b16 %v1511, %v1509
        %v1572 = vpack.c.b16 %v1514, %v1512
        %v1573 = vpack.c.b16 %v1515, %v1513
        %v1574 = vpack.c.b16 %v1518, %v1516
        %v1575 = vpack.c.b16 %v1519, %v1517
        %v1576 = vpack.c.b16 %v1522, %v1520
        %v1577 = vpack.c.b16 %v1523, %v1521
        %v1578 = vpack.c.b16 %v1526, %v1524
        %v1579 = vpack.c.b16 %v1527, %v1525
        %v1580 = vpack.c.b16 %v1530, %v1528
        %v1581 = vpack.c.b16 %v1531, %v1529
        %v1582 = vpack.c.b16 %v1534, %v1532
        %v1583 = vpack.c.b16 %v1535, %v1533
        %v1584 = vpack.c.b16 %v1538, %v1536
        %v1585 = vpack.c.b16 %v1539, %v1537
        %v1586 = vpack.c.b16 %v1542, %v1540
        %v1587 = vpack.c.b16 %v1543, %v1541
        %v1588 = vpack.c.b16 %v1546, %v1544
        %v1589 = vpack.c.b16 %v1547, %v1545
        %v1590 = vpack.c.b16 %v1550, %v1548
        %v1591 = vpack.c.b16 %v1551, %v1549
        %v1592 = vpack.c.b16 %v1554, %v1552
        %v1593 = vpack.c.b16 %v1555, %v1553
        %v1594 = vpack.c.b16 %v1558, %v1556
        %v1595 = vpack.c.b16 %v1559, %v1557
        %v1596 = vpack.c.b16 %v1562, %v1560
        %v1597 = vpack.c.b16 %v1563, %v1561
        %v1598 = vpack.c.b16 %v1566, %v1564
        %v1599 = vpack.c.b16 %v1567, %v1565
        %1632 = vmatpush.bf16.msra.mxu0 %v1582
        %1633 = vmatpush.bf16.msra.mxu0 %v1580
        %1634 = vmatpush.bf16.msra.mxu0 %v1578
        %1635 = vmatpush.bf16.msra.mxu0 %v1576
        %1636 = vmatpush.bf16.msra.mxu0 %v1574
        %1637 = vmatpush.bf16.msra.mxu0 %v1572
        %1638 = vmatpush.bf16.msra.mxu0 %v1570
        %1639 = vmatpush.bf16.msra.mxu0 %v1568
        %1640 = vmatmul.bf16.gmra.mxu0 %v1370
        %v1641 = vpop.f32.mrf.mxu0
        %v1642 = vadd.f32 %v1468, %v1641
        %v1643 = vpop.f32.mrf.mxu0
        %v1644 = vadd.f32 %v1468, %v1643
        %1645 = vmatmul.bf16.gmra.mxu0 %v1372
        %v1646 = vpop.f32.mrf.mxu0
        %v1647 = vadd.f32 %v1468, %v1646
        %v1648 = vpop.f32.mrf.mxu0
        %v1649 = vadd.f32 %v1468, %v1648
        %1650 = vmatmul.bf16.gmra.mxu0 %v1374
        %v1651 = vpop.f32.mrf.mxu0
        %v1652 = vadd.f32 %v1468, %v1651
        %v1653 = vpop.f32.mrf.mxu0
        %v1654 = vadd.f32 %v1468, %v1653
        %1655 = vmatmul.bf16.gmra.mxu0 %v1376
        %v1656 = vpop.f32.mrf.mxu0
        %v1657 = vadd.f32 %v1468, %v1656
        %v1658 = vpop.f32.mrf.mxu0
        %v1659 = vadd.f32 %v1468, %v1658
        %1660 = vmatmul.bf16.gmra.mxu0 %v1378
        %v1661 = vpop.f32.mrf.mxu0
        %v1662 = vadd.f32 %v1468, %v1661
        %v1663 = vpop.f32.mrf.mxu0
        %v1664 = vadd.f32 %v1468, %v1663
        %1665 = vmatmul.bf16.gmra.mxu0 %v1380
        %v1666 = vpop.f32.mrf.mxu0
        %v1667 = vadd.f32 %v1468, %v1666
        %v1668 = vpop.f32.mrf.mxu0
        %v1669 = vadd.f32 %v1468, %v1668
        %1670 = vmatmul.bf16.gmra.mxu0 %v1382
        %v1671 = vpop.f32.mrf.mxu0
        %v1672 = vadd.f32 %v1468, %v1671
        %v1673 = vpop.f32.mrf.mxu0
        %v1674 = vadd.f32 %v1468, %v1673
        %1675 = vmatmul.bf16.gmra.mxu0 %v1384
        %v1676 = vpop.f32.mrf.mxu0
        %v1677 = vadd.f32 %v1468, %v1676
        %v1678 = vpop.f32.mrf.mxu0
        %v1679 = vadd.f32 %v1468, %v1678
        %1680 = vmatmul.bf16.gmra.mxu0 %v1386
        %v1681 = vpop.f32.mrf.mxu0
        %v1682 = vadd.f32 %v1468, %v1681
        %v1683 = vpop.f32.mrf.mxu0
        %v1684 = vadd.f32 %v1468, %v1683
        %1685 = vmatmul.bf16.gmra.mxu0 %v1388
        %v1686 = vpop.f32.mrf.mxu0
        %v1687 = vadd.f32 %v1468, %v1686
        %v1688 = vpop.f32.mrf.mxu0
        %v1689 = vadd.f32 %v1468, %v1688
        %1690 = vmatmul.bf16.gmra.mxu0 %v1390
        %v1691 = vpop.f32.mrf.mxu0
        %v1692 = vadd.f32 %v1468, %v1691
        %v1693 = vpop.f32.mrf.mxu0
        %v1694 = vadd.f32 %v1468, %v1693
        %1695 = vmatmul.bf16.gmra.mxu0 %v1392
        %v1696 = vpop.f32.mrf.mxu0
        %v1697 = vadd.f32 %v1468, %v1696
        %v1698 = vpop.f32.mrf.mxu0
        %v1699 = vadd.f32 %v1468, %v1698
        %1700 = vmatmul.bf16.gmra.mxu0 %v1394
        %v1701 = vpop.f32.mrf.mxu0
        %v1702 = vadd.f32 %v1468, %v1701
        %v1703 = vpop.f32.mrf.mxu0
        %v1704 = vadd.f32 %v1468, %v1703
        %1705 = vmatmul.bf16.gmra.mxu0 %v1396
        %v1706 = vpop.f32.mrf.mxu0
        %v1707 = vadd.f32 %v1468, %v1706
        %v1708 = vpop.f32.mrf.mxu0
        %v1709 = vadd.f32 %v1468, %v1708
        %1710 = vmatmul.bf16.gmra.mxu0 %v1398
        %v1711 = vpop.f32.mrf.mxu0
        %v1712 = vadd.f32 %v1468, %v1711
        %v1713 = vpop.f32.mrf.mxu0
        %v1714 = vadd.f32 %v1468, %v1713
        %1715 = vmatmul.bf16.gmra.mxu0 %v1400
        %v1716 = vpop.f32.mrf.mxu0
        %v1717 = vadd.f32 %v1468, %v1716
        %v1718 = vpop.f32.mrf.mxu0
        %v1719 = vadd.f32 %v1468, %v1718
        %1720 = vmatmul.bf16.gmra.mxu0 %v1402
        %v1721 = vpop.f32.mrf.mxu0
        %v1722 = vadd.f32 %v1468, %v1721
        %v1723 = vpop.f32.mrf.mxu0
        %v1724 = vadd.f32 %v1468, %v1723
        %1725 = vmatmul.bf16.gmra.mxu0 %v1404
        %v1726 = vpop.f32.mrf.mxu0
        %v1727 = vadd.f32 %v1468, %v1726
        %v1728 = vpop.f32.mrf.mxu0
        %v1729 = vadd.f32 %v1468, %v1728
        %1730 = vmatmul.bf16.gmra.mxu0 %v1406
        %v1731 = vpop.f32.mrf.mxu0
        %v1732 = vadd.f32 %v1468, %v1731
        %v1733 = vpop.f32.mrf.mxu0
        %v1734 = vadd.f32 %v1468, %v1733
        %1735 = vmatmul.bf16.gmra.mxu0 %v1408
        %v1736 = vpop.f32.mrf.mxu0
        %v1737 = vadd.f32 %v1468, %v1736
        %v1738 = vpop.f32.mrf.mxu0
        %v1739 = vadd.f32 %v1468, %v1738
        %1740 = vmatmul.bf16.gmra.mxu0 %v1410
        %v1741 = vpop.f32.mrf.mxu0
        %v1742 = vadd.f32 %v1468, %v1741
        %v1743 = vpop.f32.mrf.mxu0
        %v1744 = vadd.f32 %v1468, %v1743
        %1745 = vmatmul.bf16.gmra.mxu0 %v1412
        %v1746 = vpop.f32.mrf.mxu0
        %v1747 = vadd.f32 %v1468, %v1746
        %v1748 = vpop.f32.mrf.mxu0
        %v1749 = vadd.f32 %v1468, %v1748
        %1750 = vmatmul.bf16.gmra.mxu0 %v1414
        %v1751 = vpop.f32.mrf.mxu0
        %v1752 = vadd.f32 %v1468, %v1751
        %v1753 = vpop.f32.mrf.mxu0
        %v1754 = vadd.f32 %v1468, %v1753
        %1755 = vmatmul.bf16.gmra.mxu0 %v1416
        %v1756 = vpop.f32.mrf.mxu0
        %v1757 = vadd.f32 %v1468, %v1756
        %v1758 = vpop.f32.mrf.mxu0
        %v1759 = vadd.f32 %v1468, %v1758
        %1760 = vmatmul.bf16.gmra.mxu0 %v1418
        %v1761 = vpop.f32.mrf.mxu0
        %v1762 = vadd.f32 %v1468, %v1761
        %v1763 = vpop.f32.mrf.mxu0
        %v1764 = vadd.f32 %v1468, %v1763
        %1765 = vmatmul.bf16.gmra.mxu0 %v1420
        %v1766 = vpop.f32.mrf.mxu0
        %v1767 = vadd.f32 %v1468, %v1766
        %v1768 = vpop.f32.mrf.mxu0
        %v1769 = vadd.f32 %v1468, %v1768
        %1770 = vmatmul.bf16.gmra.mxu0 %v1422
        %v1771 = vpop.f32.mrf.mxu0
        %v1772 = vadd.f32 %v1468, %v1771
        %v1773 = vpop.f32.mrf.mxu0
        %v1774 = vadd.f32 %v1468, %v1773
        %1775 = vmatmul.bf16.gmra.mxu0 %v1424
        %v1776 = vpop.f32.mrf.mxu0
        %v1777 = vadd.f32 %v1468, %v1776
        %v1778 = vpop.f32.mrf.mxu0
        %v1779 = vadd.f32 %v1468, %v1778
        %1780 = vmatmul.bf16.gmra.mxu0 %v1426
        %v1781 = vpop.f32.mrf.mxu0
        %v1782 = vadd.f32 %v1468, %v1781
        %v1783 = vpop.f32.mrf.mxu0
        %v1784 = vadd.f32 %v1468, %v1783
        %1785 = vmatmul.bf16.gmra.mxu0 %v1428
        %v1786 = vpop.f32.mrf.mxu0
        %v1787 = vadd.f32 %v1468, %v1786
        %v1788 = vpop.f32.mrf.mxu0
        %v1789 = vadd.f32 %v1468, %v1788
        %1790 = vmatmul.bf16.gmra.mxu0 %v1430
        %v1791 = vpop.f32.mrf.mxu0
        %v1792 = vadd.f32 %v1468, %v1791
        %v1793 = vpop.f32.mrf.mxu0
        %v1794 = vadd.f32 %v1468, %v1793
        %1795 = vmatmul.bf16.gmra.mxu0 %v1432
        %v1796 = vpop.f32.mrf.mxu0
        %v1797 = vadd.f32 %v1468, %v1796
        %v1798 = vpop.f32.mrf.mxu0
        %v1799 = vadd.f32 %v1468, %v1798
        %1800 = vdwg.mxu0
        %1801 = vmatpush.bf16.msra.mxu0 %v1598
        %1802 = vmatpush.bf16.msra.mxu0 %v1596
        %1803 = vmatpush.bf16.msra.mxu0 %v1594
        %1804 = vmatpush.bf16.msra.mxu0 %v1592
        %1805 = vmatpush.bf16.msra.mxu0 %v1590
        %1806 = vmatpush.bf16.msra.mxu0 %v1588
        %1807 = vmatpush.bf16.msra.mxu0 %v1586
        %1808 = vmatpush.bf16.msra.mxu0 %v1584
        %1809 = vmatmul.bf16.gmra.mxu0 %v1371
        %v1810 = vpop.f32.mrf.mxu0
        %v1811 = vadd.f32 %v1642, %v1810
        %v1812 = vpop.f32.mrf.mxu0
        %v1813 = vadd.f32 %v1644, %v1812
        %1814 = vmatmul.bf16.gmra.mxu0 %v1373
        %v1815 = vpop.f32.mrf.mxu0
        %v1816 = vadd.f32 %v1647, %v1815
        %v1817 = vpop.f32.mrf.mxu0
        %v1818 = vadd.f32 %v1649, %v1817
        %1819 = vmatmul.bf16.gmra.mxu0 %v1375
        %v1820 = vpop.f32.mrf.mxu0
        %v1821 = vadd.f32 %v1652, %v1820
        %v1822 = vpop.f32.mrf.mxu0
        %v1823 = vadd.f32 %v1654, %v1822
        %1824 = vmatmul.bf16.gmra.mxu0 %v1377
        %v1825 = vpop.f32.mrf.mxu0
        %v1826 = vadd.f32 %v1657, %v1825
        %v1827 = vpop.f32.mrf.mxu0
        %v1828 = vadd.f32 %v1659, %v1827
        %1829 = vmatmul.bf16.gmra.mxu0 %v1379
        %v1830 = vpop.f32.mrf.mxu0
        %v1831 = vadd.f32 %v1662, %v1830
        %v1832 = vpop.f32.mrf.mxu0
        %v1833 = vadd.f32 %v1664, %v1832
        %1834 = vmatmul.bf16.gmra.mxu0 %v1381
        %v1835 = vpop.f32.mrf.mxu0
        %v1836 = vadd.f32 %v1667, %v1835
        %v1837 = vpop.f32.mrf.mxu0
        %v1838 = vadd.f32 %v1669, %v1837
        %1839 = vmatmul.bf16.gmra.mxu0 %v1383
        %v1840 = vpop.f32.mrf.mxu0
        %v1841 = vadd.f32 %v1672, %v1840
        %v1842 = vpop.f32.mrf.mxu0
        %v1843 = vadd.f32 %v1674, %v1842
        %1844 = vmatmul.bf16.gmra.mxu0 %v1385
        %v1845 = vpop.f32.mrf.mxu0
        %v1846 = vadd.f32 %v1677, %v1845
        %v1847 = vpop.f32.mrf.mxu0
        %v1848 = vadd.f32 %v1679, %v1847
        %1849 = vmatmul.bf16.gmra.mxu0 %v1387
        %v1850 = vpop.f32.mrf.mxu0
        %v1851 = vadd.f32 %v1682, %v1850
        %v1852 = vpop.f32.mrf.mxu0
        %v1853 = vadd.f32 %v1684, %v1852
        %1854 = vmatmul.bf16.gmra.mxu0 %v1389
        %v1855 = vpop.f32.mrf.mxu0
        %v1856 = vadd.f32 %v1687, %v1855
        %v1857 = vpop.f32.mrf.mxu0
        %v1858 = vadd.f32 %v1689, %v1857
        %1859 = vmatmul.bf16.gmra.mxu0 %v1391
        %v1860 = vpop.f32.mrf.mxu0
        %v1861 = vadd.f32 %v1692, %v1860
        %v1862 = vpop.f32.mrf.mxu0
        %v1863 = vadd.f32 %v1694, %v1862
        %1864 = vmatmul.bf16.gmra.mxu0 %v1393
        %v1865 = vpop.f32.mrf.mxu0
        %v1866 = vadd.f32 %v1697, %v1865
        %v1867 = vpop.f32.mrf.mxu0
        %v1868 = vadd.f32 %v1699, %v1867
        %1869 = vmatmul.bf16.gmra.mxu0 %v1395
        %v1870 = vpop.f32.mrf.mxu0
        %v1871 = vadd.f32 %v1702, %v1870
        %v1872 = vpop.f32.mrf.mxu0
        %v1873 = vadd.f32 %v1704, %v1872
        %1874 = vmatmul.bf16.gmra.mxu0 %v1397
        %v1875 = vpop.f32.mrf.mxu0
        %v1876 = vadd.f32 %v1707, %v1875
        %v1877 = vpop.f32.mrf.mxu0
        %v1878 = vadd.f32 %v1709, %v1877
        %1879 = vmatmul.bf16.gmra.mxu0 %v1399
        %v1880 = vpop.f32.mrf.mxu0
        %v1881 = vadd.f32 %v1712, %v1880
        %v1882 = vpop.f32.mrf.mxu0
        %v1883 = vadd.f32 %v1714, %v1882
        %1884 = vmatmul.bf16.gmra.mxu0 %v1401
        %v1885 = vpop.f32.mrf.mxu0
        %v1886 = vadd.f32 %v1717, %v1885
        %v1887 = vpop.f32.mrf.mxu0
        %v1888 = vadd.f32 %v1719, %v1887
        %1889 = vmatmul.bf16.gmra.mxu0 %v1403
        %v1890 = vpop.f32.mrf.mxu0
        %v1891 = vadd.f32 %v1722, %v1890
        %v1892 = vpop.f32.mrf.mxu0
        %v1893 = vadd.f32 %v1724, %v1892
        %1894 = vmatmul.bf16.gmra.mxu0 %v1405
        %v1895 = vpop.f32.mrf.mxu0
        %v1896 = vadd.f32 %v1727, %v1895
        %v1897 = vpop.f32.mrf.mxu0
        %v1898 = vadd.f32 %v1729, %v1897
        %1899 = vmatmul.bf16.gmra.mxu0 %v1407
        %v1900 = vpop.f32.mrf.mxu0
        %v1901 = vadd.f32 %v1732, %v1900
        %v1902 = vpop.f32.mrf.mxu0
        %v1903 = vadd.f32 %v1734, %v1902
        %1904 = vmatmul.bf16.gmra.mxu0 %v1409
        %v1905 = vpop.f32.mrf.mxu0
        %v1906 = vadd.f32 %v1737, %v1905
        %v1907 = vpop.f32.mrf.mxu0
        %v1908 = vadd.f32 %v1739, %v1907
        %1909 = vmatmul.bf16.gmra.mxu0 %v1411
        %v1910 = vpop.f32.mrf.mxu0
        %v1911 = vadd.f32 %v1742, %v1910
        %v1912 = vpop.f32.mrf.mxu0
        %v1913 = vadd.f32 %v1744, %v1912
        %1914 = vmatmul.bf16.gmra.mxu0 %v1413
        %v1915 = vpop.f32.mrf.mxu0
        %v1916 = vadd.f32 %v1747, %v1915
        %v1917 = vpop.f32.mrf.mxu0
        %v1918 = vadd.f32 %v1749, %v1917
        %1919 = vmatmul.bf16.gmra.mxu0 %v1415
        %v1920 = vpop.f32.mrf.mxu0
        %v1921 = vadd.f32 %v1752, %v1920
        %v1922 = vpop.f32.mrf.mxu0
        %v1923 = vadd.f32 %v1754, %v1922
        %1924 = vmatmul.bf16.gmra.mxu0 %v1417
        %v1925 = vpop.f32.mrf.mxu0
        %v1926 = vadd.f32 %v1757, %v1925
        %v1927 = vpop.f32.mrf.mxu0
        %v1928 = vadd.f32 %v1759, %v1927
        %1929 = vmatmul.bf16.gmra.mxu0 %v1419
        %v1930 = vpop.f32.mrf.mxu0
        %v1931 = vadd.f32 %v1762, %v1930
        %v1932 = vpop.f32.mrf.mxu0
        %v1933 = vadd.f32 %v1764, %v1932
        %1934 = vmatmul.bf16.gmra.mxu0 %v1421
        %v1935 = vpop.f32.mrf.mxu0
        %v1936 = vadd.f32 %v1767, %v1935
        %v1937 = vpop.f32.mrf.mxu0
        %v1938 = vadd.f32 %v1769, %v1937
        %1939 = vmatmul.bf16.gmra.mxu0 %v1423
        %v1940 = vpop.f32.mrf.mxu0
        %v1941 = vadd.f32 %v1772, %v1940
        %v1942 = vpop.f32.mrf.mxu0
        %v1943 = vadd.f32 %v1774, %v1942
        %1944 = vmatmul.bf16.gmra.mxu0 %v1425
        %v1945 = vpop.f32.mrf.mxu0
        %v1946 = vadd.f32 %v1777, %v1945
        %v1947 = vpop.f32.mrf.mxu0
        %v1948 = vadd.f32 %v1779, %v1947
        %1949 = vmatmul.bf16.gmra.mxu0 %v1427
        %v1950 = vpop.f32.mrf.mxu0
        %v1951 = vadd.f32 %v1782, %v1950
        %v1952 = vpop.f32.mrf.mxu0
        %v1953 = vadd.f32 %v1784, %v1952
        %1954 = vmatmul.bf16.gmra.mxu0 %v1429
        %v1955 = vpop.f32.mrf.mxu0
        %v1956 = vadd.f32 %v1787, %v1955
        %v1957 = vpop.f32.mrf.mxu0
        %v1958 = vadd.f32 %v1789, %v1957
        %1959 = vmatmul.bf16.gmra.mxu0 %v1431
        %v1960 = vpop.f32.mrf.mxu0
        %v1961 = vadd.f32 %v1792, %v1960
        %v1962 = vpop.f32.mrf.mxu0
        %v1963 = vadd.f32 %v1794, %v1962
        %1964 = vmatmul.bf16.gmra.mxu0 %v1433
        %v1965 = vpop.f32.mrf.mxu0
        %v1966 = vadd.f32 %v1797, %v1965
        %v1967 = vpop.f32.mrf.mxu0
        %v1968 = vadd.f32 %v1799, %v1967
        %1969 = vdwg.mxu0
        %1970 = vmatpush.bf16.msra.mxu0 %v1583
        %1971 = vmatpush.bf16.msra.mxu0 %v1581
        %1972 = vmatpush.bf16.msra.mxu0 %v1579
        %1973 = vmatpush.bf16.msra.mxu0 %v1577
        %1974 = vmatpush.bf16.msra.mxu0 %v1575
        %1975 = vmatpush.bf16.msra.mxu0 %v1573
        %1976 = vmatpush.bf16.msra.mxu0 %v1571
        %1977 = vmatpush.bf16.msra.mxu0 %v1569
        %1978 = vmatmul.bf16.gmra.mxu0 %v1370
        %v1979 = vpop.f32.mrf.mxu0
        %v1980 = vadd.f32 %v1469, %v1979
        %v1981 = vpop.f32.mrf.mxu0
        %v1982 = vadd.f32 %v1469, %v1981
        %1983 = vmatmul.bf16.gmra.mxu0 %v1372
        %v1984 = vpop.f32.mrf.mxu0
        %v1985 = vadd.f32 %v1469, %v1984
        %v1986 = vpop.f32.mrf.mxu0
        %v1987 = vadd.f32 %v1469, %v1986
        %1988 = vmatmul.bf16.gmra.mxu0 %v1374
        %v1989 = vpop.f32.mrf.mxu0
        %v1990 = vadd.f32 %v1469, %v1989
        %v1991 = vpop.f32.mrf.mxu0
        %v1992 = vadd.f32 %v1469, %v1991
        %1993 = vmatmul.bf16.gmra.mxu0 %v1376
        %v1994 = vpop.f32.mrf.mxu0
        %v1995 = vadd.f32 %v1469, %v1994
        %v1996 = vpop.f32.mrf.mxu0
        %v1997 = vadd.f32 %v1469, %v1996
        %1998 = vmatmul.bf16.gmra.mxu0 %v1378
        %v1999 = vpop.f32.mrf.mxu0
        %v2000 = vadd.f32 %v1469, %v1999
        %v2001 = vpop.f32.mrf.mxu0
        %v2002 = vadd.f32 %v1469, %v2001
        %2003 = vmatmul.bf16.gmra.mxu0 %v1380
        %v2004 = vpop.f32.mrf.mxu0
        %v2005 = vadd.f32 %v1469, %v2004
        %v2006 = vpop.f32.mrf.mxu0
        %v2007 = vadd.f32 %v1469, %v2006
        %2008 = vmatmul.bf16.gmra.mxu0 %v1382
        %v2009 = vpop.f32.mrf.mxu0
        %v2010 = vadd.f32 %v1469, %v2009
        %v2011 = vpop.f32.mrf.mxu0
        %v2012 = vadd.f32 %v1469, %v2011
        %2013 = vmatmul.bf16.gmra.mxu0 %v1384
        %v2014 = vpop.f32.mrf.mxu0
        %v2015 = vadd.f32 %v1469, %v2014
        %v2016 = vpop.f32.mrf.mxu0
        %v2017 = vadd.f32 %v1469, %v2016
        %2018 = vmatmul.bf16.gmra.mxu0 %v1386
        %v2019 = vpop.f32.mrf.mxu0
        %v2020 = vadd.f32 %v1469, %v2019
        %v2021 = vpop.f32.mrf.mxu0
        %v2022 = vadd.f32 %v1469, %v2021
        %2023 = vmatmul.bf16.gmra.mxu0 %v1388
        %v2024 = vpop.f32.mrf.mxu0
        %v2025 = vadd.f32 %v1469, %v2024
        %v2026 = vpop.f32.mrf.mxu0
        %v2027 = vadd.f32 %v1469, %v2026
        %2028 = vmatmul.bf16.gmra.mxu0 %v1390
        %v2029 = vpop.f32.mrf.mxu0
        %v2030 = vadd.f32 %v1469, %v2029
        %v2031 = vpop.f32.mrf.mxu0
        %v2032 = vadd.f32 %v1469, %v2031
        %2033 = vmatmul.bf16.gmra.mxu0 %v1392
        %v2034 = vpop.f32.mrf.mxu0
        %v2035 = vadd.f32 %v1469, %v2034
        %v2036 = vpop.f32.mrf.mxu0
        %v2037 = vadd.f32 %v1469, %v2036
        %2038 = vmatmul.bf16.gmra.mxu0 %v1394
        %v2039 = vpop.f32.mrf.mxu0
        %v2040 = vadd.f32 %v1469, %v2039
        %v2041 = vpop.f32.mrf.mxu0
        %v2042 = vadd.f32 %v1469, %v2041
        %2043 = vmatmul.bf16.gmra.mxu0 %v1396
        %v2044 = vpop.f32.mrf.mxu0
        %v2045 = vadd.f32 %v1469, %v2044
        %v2046 = vpop.f32.mrf.mxu0
        %v2047 = vadd.f32 %v1469, %v2046
        %2048 = vmatmul.bf16.gmra.mxu0 %v1398
        %v2049 = vpop.f32.mrf.mxu0
        %v2050 = vadd.f32 %v1469, %v2049
        %v2051 = vpop.f32.mrf.mxu0
        %v2052 = vadd.f32 %v1469, %v2051
        %2053 = vmatmul.bf16.gmra.mxu0 %v1400
        %v2054 = vpop.f32.mrf.mxu0
        %v2055 = vadd.f32 %v1469, %v2054
        %v2056 = vpop.f32.mrf.mxu0
        %v2057 = vadd.f32 %v1469, %v2056
        %2058 = vmatmul.bf16.gmra.mxu0 %v1402
        %v2059 = vpop.f32.mrf.mxu0
        %v2060 = vadd.f32 %v1469, %v2059
        %v2061 = vpop.f32.mrf.mxu0
        %v2062 = vadd.f32 %v1469, %v2061
        %2063 = vmatmul.bf16.gmra.mxu0 %v1404
        %v2064 = vpop.f32.mrf.mxu0
        %v2065 = vadd.f32 %v1469, %v2064
        %v2066 = vpop.f32.mrf.mxu0
        %v2067 = vadd.f32 %v1469, %v2066
        %2068 = vmatmul.bf16.gmra.mxu0 %v1406
        %v2069 = vpop.f32.mrf.mxu0
        %v2070 = vadd.f32 %v1469, %v2069
        %v2071 = vpop.f32.mrf.mxu0
        %v2072 = vadd.f32 %v1469, %v2071
        %2073 = vmatmul.bf16.gmra.mxu0 %v1408
        %v2074 = vpop.f32.mrf.mxu0
        %v2075 = vadd.f32 %v1469, %v2074
        %v2076 = vpop.f32.mrf.mxu0
        %v2077 = vadd.f32 %v1469, %v2076
        %2078 = vmatmul.bf16.gmra.mxu0 %v1410
        %v2079 = vpop.f32.mrf.mxu0
        %v2080 = vadd.f32 %v1469, %v2079
        %v2081 = vpop.f32.mrf.mxu0
        %v2082 = vadd.f32 %v1469, %v2081
        %2083 = vmatmul.bf16.gmra.mxu0 %v1412
        %v2084 = vpop.f32.mrf.mxu0
        %v2085 = vadd.f32 %v1469, %v2084
        %v2086 = vpop.f32.mrf.mxu0
        %v2087 = vadd.f32 %v1469, %v2086
        %2088 = vmatmul.bf16.gmra.mxu0 %v1414
        %v2089 = vpop.f32.mrf.mxu0
        %v2090 = vadd.f32 %v1469, %v2089
        %v2091 = vpop.f32.mrf.mxu0
        %v2092 = vadd.f32 %v1469, %v2091
        %2093 = vmatmul.bf16.gmra.mxu0 %v1416
        %v2094 = vpop.f32.mrf.mxu0
        %v2095 = vadd.f32 %v1469, %v2094
        %v2096 = vpop.f32.mrf.mxu0
        %v2097 = vadd.f32 %v1469, %v2096
        %2098 = vmatmul.bf16.gmra.mxu0 %v1418
        %v2099 = vpop.f32.mrf.mxu0
        %v2100 = vadd.f32 %v1469, %v2099
        %v2101 = vpop.f32.mrf.mxu0
        %v2102 = vadd.f32 %v1469, %v2101
        %2103 = vmatmul.bf16.gmra.mxu0 %v1420
        %v2104 = vpop.f32.mrf.mxu0
        %v2105 = vadd.f32 %v1469, %v2104
        %v2106 = vpop.f32.mrf.mxu0
        %v2107 = vadd.f32 %v1469, %v2106
        %2108 = vmatmul.bf16.gmra.mxu0 %v1422
        %v2109 = vpop.f32.mrf.mxu0
        %v2110 = vadd.f32 %v1469, %v2109
        %v2111 = vpop.f32.mrf.mxu0
        %v2112 = vadd.f32 %v1469, %v2111
        %2113 = vmatmul.bf16.gmra.mxu0 %v1424
        %v2114 = vpop.f32.mrf.mxu0
        %v2115 = vadd.f32 %v1469, %v2114
        %v2116 = vpop.f32.mrf.mxu0
        %v2117 = vadd.f32 %v1469, %v2116
        %2118 = vmatmul.bf16.gmra.mxu0 %v1426
        %v2119 = vpop.f32.mrf.mxu0
        %v2120 = vadd.f32 %v1469, %v2119
        %v2121 = vpop.f32.mrf.mxu0
        %v2122 = vadd.f32 %v1469, %v2121
        %2123 = vmatmul.bf16.gmra.mxu0 %v1428
        %v2124 = vpop.f32.mrf.mxu0
        %v2125 = vadd.f32 %v1469, %v2124
        %v2126 = vpop.f32.mrf.mxu0
        %v2127 = vadd.f32 %v1469, %v2126
        %2128 = vmatmul.bf16.gmra.mxu0 %v1430
        %v2129 = vpop.f32.mrf.mxu0
        %v2130 = vadd.f32 %v1469, %v2129
        %v2131 = vpop.f32.mrf.mxu0
        %v2132 = vadd.f32 %v1469, %v2131
        %2133 = vmatmul.bf16.gmra.mxu0 %v1432
        %v2134 = vpop.f32.mrf.mxu0
        %v2135 = vadd.f32 %v1469, %v2134
        %v2136 = vpop.f32.mrf.mxu0
        %v2137 = vadd.f32 %v1469, %v2136
        %2138 = vdwg.mxu0
        %2139 = vmatpush.bf16.msra.mxu0 %v1599
        %2140 = vmatpush.bf16.msra.mxu0 %v1597
        %2141 = vmatpush.bf16.msra.mxu0 %v1595
        %2142 = vmatpush.bf16.msra.mxu0 %v1593
        %2143 = vmatpush.bf16.msra.mxu0 %v1591
        %2144 = vmatpush.bf16.msra.mxu0 %v1589
        %2145 = vmatpush.bf16.msra.mxu0 %v1587
        %2146 = vmatpush.bf16.msra.mxu0 %v1585
        %2147 = vmatmul.bf16.gmra.mxu0 %v1371
        %v2148 = vpop.f32.mrf.mxu0
        %v2149 = vadd.f32 %v1980, %v2148
        %v2150 = vpop.f32.mrf.mxu0
        %v2151 = vadd.f32 %v1982, %v2150
        %2152 = vmatmul.bf16.gmra.mxu0 %v1373
        %v2153 = vpop.f32.mrf.mxu0
        %v2154 = vadd.f32 %v1985, %v2153
        %v2155 = vpop.f32.mrf.mxu0
        %v2156 = vadd.f32 %v1987, %v2155
        %2157 = vmatmul.bf16.gmra.mxu0 %v1375
        %v2158 = vpop.f32.mrf.mxu0
        %v2159 = vadd.f32 %v1990, %v2158
        %v2160 = vpop.f32.mrf.mxu0
        %v2161 = vadd.f32 %v1992, %v2160
        %2162 = vmatmul.bf16.gmra.mxu0 %v1377
        %v2163 = vpop.f32.mrf.mxu0
        %v2164 = vadd.f32 %v1995, %v2163
        %v2165 = vpop.f32.mrf.mxu0
        %v2166 = vadd.f32 %v1997, %v2165
        %2167 = vmatmul.bf16.gmra.mxu0 %v1379
        %v2168 = vpop.f32.mrf.mxu0
        %v2169 = vadd.f32 %v2000, %v2168
        %v2170 = vpop.f32.mrf.mxu0
        %v2171 = vadd.f32 %v2002, %v2170
        %2172 = vmatmul.bf16.gmra.mxu0 %v1381
        %v2173 = vpop.f32.mrf.mxu0
        %v2174 = vadd.f32 %v2005, %v2173
        %v2175 = vpop.f32.mrf.mxu0
        %v2176 = vadd.f32 %v2007, %v2175
        %2177 = vmatmul.bf16.gmra.mxu0 %v1383
        %v2178 = vpop.f32.mrf.mxu0
        %v2179 = vadd.f32 %v2010, %v2178
        %v2180 = vpop.f32.mrf.mxu0
        %v2181 = vadd.f32 %v2012, %v2180
        %2182 = vmatmul.bf16.gmra.mxu0 %v1385
        %v2183 = vpop.f32.mrf.mxu0
        %v2184 = vadd.f32 %v2015, %v2183
        %v2185 = vpop.f32.mrf.mxu0
        %v2186 = vadd.f32 %v2017, %v2185
        %2187 = vmatmul.bf16.gmra.mxu0 %v1387
        %v2188 = vpop.f32.mrf.mxu0
        %v2189 = vadd.f32 %v2020, %v2188
        %v2190 = vpop.f32.mrf.mxu0
        %v2191 = vadd.f32 %v2022, %v2190
        %2192 = vmatmul.bf16.gmra.mxu0 %v1389
        %v2193 = vpop.f32.mrf.mxu0
        %v2194 = vadd.f32 %v2025, %v2193
        %v2195 = vpop.f32.mrf.mxu0
        %v2196 = vadd.f32 %v2027, %v2195
        %2197 = vmatmul.bf16.gmra.mxu0 %v1391
        %v2198 = vpop.f32.mrf.mxu0
        %v2199 = vadd.f32 %v2030, %v2198
        %v2200 = vpop.f32.mrf.mxu0
        %v2201 = vadd.f32 %v2032, %v2200
        %2202 = vmatmul.bf16.gmra.mxu0 %v1393
        %v2203 = vpop.f32.mrf.mxu0
        %v2204 = vadd.f32 %v2035, %v2203
        %v2205 = vpop.f32.mrf.mxu0
        %v2206 = vadd.f32 %v2037, %v2205
        %2207 = vmatmul.bf16.gmra.mxu0 %v1395
        %v2208 = vpop.f32.mrf.mxu0
        %v2209 = vadd.f32 %v2040, %v2208
        %v2210 = vpop.f32.mrf.mxu0
        %v2211 = vadd.f32 %v2042, %v2210
        %2212 = vmatmul.bf16.gmra.mxu0 %v1397
        %v2213 = vpop.f32.mrf.mxu0
        %v2214 = vadd.f32 %v2045, %v2213
        %v2215 = vpop.f32.mrf.mxu0
        %v2216 = vadd.f32 %v2047, %v2215
        %2217 = vmatmul.bf16.gmra.mxu0 %v1399
        %v2218 = vpop.f32.mrf.mxu0
        %v2219 = vadd.f32 %v2050, %v2218
        %v2220 = vpop.f32.mrf.mxu0
        %v2221 = vadd.f32 %v2052, %v2220
        %2222 = vmatmul.bf16.gmra.mxu0 %v1401
        %v2223 = vpop.f32.mrf.mxu0
        %v2224 = vadd.f32 %v2055, %v2223
        %v2225 = vpop.f32.mrf.mxu0
        %v2226 = vadd.f32 %v2057, %v2225
        %2227 = vmatmul.bf16.gmra.mxu0 %v1403
        %v2228 = vpop.f32.mrf.mxu0
        %v2229 = vadd.f32 %v2060, %v2228
        %v2230 = vpop.f32.mrf.mxu0
        %v2231 = vadd.f32 %v2062, %v2230
        %2232 = vmatmul.bf16.gmra.mxu0 %v1405
        %v2233 = vpop.f32.mrf.mxu0
        %v2234 = vadd.f32 %v2065, %v2233
        %v2235 = vpop.f32.mrf.mxu0
        %v2236 = vadd.f32 %v2067, %v2235
        %2237 = vmatmul.bf16.gmra.mxu0 %v1407
        %v2238 = vpop.f32.mrf.mxu0
        %v2239 = vadd.f32 %v2070, %v2238
        %v2240 = vpop.f32.mrf.mxu0
        %v2241 = vadd.f32 %v2072, %v2240
        %2242 = vmatmul.bf16.gmra.mxu0 %v1409
        %v2243 = vpop.f32.mrf.mxu0
        %v2244 = vadd.f32 %v2075, %v2243
        %v2245 = vpop.f32.mrf.mxu0
        %v2246 = vadd.f32 %v2077, %v2245
        %2247 = vmatmul.bf16.gmra.mxu0 %v1411
        %v2248 = vpop.f32.mrf.mxu0
        %v2249 = vadd.f32 %v2080, %v2248
        %v2250 = vpop.f32.mrf.mxu0
        %v2251 = vadd.f32 %v2082, %v2250
        %2252 = vmatmul.bf16.gmra.mxu0 %v1413
        %v2253 = vpop.f32.mrf.mxu0
        %v2254 = vadd.f32 %v2085, %v2253
        %v2255 = vpop.f32.mrf.mxu0
        %v2256 = vadd.f32 %v2087, %v2255
        %2257 = vmatmul.bf16.gmra.mxu0 %v1415
        %v2258 = vpop.f32.mrf.mxu0
        %v2259 = vadd.f32 %v2090, %v2258
        %v2260 = vpop.f32.mrf.mxu0
        %v2261 = vadd.f32 %v2092, %v2260
        %2262 = vmatmul.bf16.gmra.mxu0 %v1417
        %v2263 = vpop.f32.mrf.mxu0
        %v2264 = vadd.f32 %v2095, %v2263
        %v2265 = vpop.f32.mrf.mxu0
        %v2266 = vadd.f32 %v2097, %v2265
        %2267 = vmatmul.bf16.gmra.mxu0 %v1419
        %v2268 = vpop.f32.mrf.mxu0
        %v2269 = vadd.f32 %v2100, %v2268
        %v2270 = vpop.f32.mrf.mxu0
        %v2271 = vadd.f32 %v2102, %v2270
        %2272 = vmatmul.bf16.gmra.mxu0 %v1421
        %v2273 = vpop.f32.mrf.mxu0
        %v2274 = vadd.f32 %v2105, %v2273
        %v2275 = vpop.f32.mrf.mxu0
        %v2276 = vadd.f32 %v2107, %v2275
        %2277 = vmatmul.bf16.gmra.mxu0 %v1423
        %v2278 = vpop.f32.mrf.mxu0
        %v2279 = vadd.f32 %v2110, %v2278
        %v2280 = vpop.f32.mrf.mxu0
        %v2281 = vadd.f32 %v2112, %v2280
        %2282 = vmatmul.bf16.gmra.mxu0 %v1425
        %v2283 = vpop.f32.mrf.mxu0
        %v2284 = vadd.f32 %v2115, %v2283
        %v2285 = vpop.f32.mrf.mxu0
        %v2286 = vadd.f32 %v2117, %v2285
        %2287 = vmatmul.bf16.gmra.mxu0 %v1427
        %v2288 = vpop.f32.mrf.mxu0
        %v2289 = vadd.f32 %v2120, %v2288
        %v2290 = vpop.f32.mrf.mxu0
        %v2291 = vadd.f32 %v2122, %v2290
        %2292 = vmatmul.bf16.gmra.mxu0 %v1429
        %v2293 = vpop.f32.mrf.mxu0
        %v2294 = vadd.f32 %v2125, %v2293
        %v2295 = vpop.f32.mrf.mxu0
        %v2296 = vadd.f32 %v2127, %v2295
        %2297 = vmatmul.bf16.gmra.mxu0 %v1431
        %v2298 = vpop.f32.mrf.mxu0
        %v2299 = vadd.f32 %v2130, %v2298
        %v2300 = vpop.f32.mrf.mxu0
        %v2301 = vadd.f32 %v2132, %v2300
        %2302 = vmatmul.bf16.gmra.mxu0 %v1433
        %v2303 = vpop.f32.mrf.mxu0
        %v2304 = vadd.f32 %v2135, %v2303
        %v2305 = vpop.f32.mrf.mxu0
        %v2306 = vadd.f32 %v2137, %v2305
        %2307 = vdwg.mxu0
        %v2308 = vmax.f32 %v1811, 0.0
        %v2309 = vmax.f32 %v2149, 0.0
        %v2310 = vmax.f32 %v1813, 0.0
        %v2311 = vmax.f32 %v2151, 0.0
        %v2312 = vmax.f32 %v1816, 0.0
        %v2313 = vmax.f32 %v2154, 0.0
        %v2314 = vmax.f32 %v1818, 0.0
        %v2315 = vmax.f32 %v2156, 0.0
        %v2316 = vmax.f32 %v1821, 0.0
        %v2317 = vmax.f32 %v2159, 0.0
        %v2318 = vmax.f32 %v1823, 0.0
        %v2319 = vmax.f32 %v2161, 0.0
        %v2320 = vmax.f32 %v1826, 0.0
        %v2321 = vmax.f32 %v2164, 0.0
        %v2322 = vmax.f32 %v1828, 0.0
        %v2323 = vmax.f32 %v2166, 0.0
        %v2324 = vmax.f32 %v1831, 0.0
        %v2325 = vmax.f32 %v2169, 0.0
        %v2326 = vmax.f32 %v1833, 0.0
        %v2327 = vmax.f32 %v2171, 0.0
        %v2328 = vmax.f32 %v1836, 0.0
        %v2329 = vmax.f32 %v2174, 0.0
        %v2330 = vmax.f32 %v1838, 0.0
        %v2331 = vmax.f32 %v2176, 0.0
        %v2332 = vmax.f32 %v1841, 0.0
        %v2333 = vmax.f32 %v2179, 0.0
        %v2334 = vmax.f32 %v1843, 0.0
        %v2335 = vmax.f32 %v2181, 0.0
        %v2336 = vmax.f32 %v1846, 0.0
        %v2337 = vmax.f32 %v2184, 0.0
        %v2338 = vmax.f32 %v1848, 0.0
        %v2339 = vmax.f32 %v2186, 0.0
        %v2340 = vmax.f32 %v1851, 0.0
        %v2341 = vmax.f32 %v2189, 0.0
        %v2342 = vmax.f32 %v1853, 0.0
        %v2343 = vmax.f32 %v2191, 0.0
        %v2344 = vmax.f32 %v1856, 0.0
        %v2345 = vmax.f32 %v2194, 0.0
        %v2346 = vmax.f32 %v1858, 0.0
        %v2347 = vmax.f32 %v2196, 0.0
        %v2348 = vmax.f32 %v1861, 0.0
        %v2349 = vmax.f32 %v2199, 0.0
        %v2350 = vmax.f32 %v1863, 0.0
        %v2351 = vmax.f32 %v2201, 0.0
        %v2352 = vmax.f32 %v1866, 0.0
        %v2353 = vmax.f32 %v2204, 0.0
        %v2354 = vmax.f32 %v1868, 0.0
        %v2355 = vmax.f32 %v2206, 0.0
        %v2356 = vmax.f32 %v1871, 0.0
        %v2357 = vmax.f32 %v2209, 0.0
        %v2358 = vmax.f32 %v1873, 0.0
        %v2359 = vmax.f32 %v2211, 0.0
        %v2360 = vmax.f32 %v1876, 0.0
        %v2361 = vmax.f32 %v2214, 0.0
        %v2362 = vmax.f32 %v1878, 0.0
        %v2363 = vmax.f32 %v2216, 0.0
        %v2364 = vmax.f32 %v1881, 0.0
        %v2365 = vmax.f32 %v2219, 0.0
        %v2366 = vmax.f32 %v1883, 0.0
        %v2367 = vmax.f32 %v2221, 0.0
        %v2368 = vmax.f32 %v1886, 0.0
        %v2369 = vmax.f32 %v2224, 0.0
        %v2370 = vmax.f32 %v1888, 0.0
        %v2371 = vmax.f32 %v2226, 0.0
        %v2372 = vmax.f32 %v1891, 0.0
        %v2373 = vmax.f32 %v2229, 0.0
        %v2374 = vmax.f32 %v1893, 0.0
        %v2375 = vmax.f32 %v2231, 0.0
        %v2376 = vmax.f32 %v1896, 0.0
        %v2377 = vmax.f32 %v2234, 0.0
        %v2378 = vmax.f32 %v1898, 0.0
        %v2379 = vmax.f32 %v2236, 0.0
        %v2380 = vmax.f32 %v1901, 0.0
        %v2381 = vmax.f32 %v2239, 0.0
        %v2382 = vmax.f32 %v1903, 0.0
        %v2383 = vmax.f32 %v2241, 0.0
        %v2384 = vmax.f32 %v1906, 0.0
        %v2385 = vmax.f32 %v2244, 0.0
        %v2386 = vmax.f32 %v1908, 0.0
        %v2387 = vmax.f32 %v2246, 0.0
        %v2388 = vmax.f32 %v1911, 0.0
        %v2389 = vmax.f32 %v2249, 0.0
        %v2390 = vmax.f32 %v1913, 0.0
        %v2391 = vmax.f32 %v2251, 0.0
        %v2392 = vmax.f32 %v1916, 0.0
        %v2393 = vmax.f32 %v2254, 0.0
        %v2394 = vmax.f32 %v1918, 0.0
        %v2395 = vmax.f32 %v2256, 0.0
        %v2396 = vmax.f32 %v1921, 0.0
        %v2397 = vmax.f32 %v2259, 0.0
        %v2398 = vmax.f32 %v1923, 0.0
        %v2399 = vmax.f32 %v2261, 0.0
        %v2400 = vmax.f32 %v1926, 0.0
        %v2401 = vmax.f32 %v2264, 0.0
        %v2402 = vmax.f32 %v1928, 0.0
        %v2403 = vmax.f32 %v2266, 0.0
        %v2404 = vmax.f32 %v1931, 0.0
        %v2405 = vmax.f32 %v2269, 0.0
        %v2406 = vmax.f32 %v1933, 0.0
        %v2407 = vmax.f32 %v2271, 0.0
        %v2408 = vmax.f32 %v1936, 0.0
        %v2409 = vmax.f32 %v2274, 0.0
        %v2410 = vmax.f32 %v1938, 0.0
        %v2411 = vmax.f32 %v2276, 0.0
        %v2412 = vmax.f32 %v1941, 0.0
        %v2413 = vmax.f32 %v2279, 0.0
        %v2414 = vmax.f32 %v1943, 0.0
        %v2415 = vmax.f32 %v2281, 0.0
        %v2416 = vmax.f32 %v1946, 0.0
        %v2417 = vmax.f32 %v2284, 0.0
        %v2418 = vmax.f32 %v1948, 0.0
        %v2419 = vmax.f32 %v2286, 0.0
        %v2420 = vmax.f32 %v1951, 0.0
        %v2421 = vmax.f32 %v2289, 0.0
        %v2422 = vmax.f32 %v1953, 0.0
        %v2423 = vmax.f32 %v2291, 0.0
        %v2424 = vmax.f32 %v1956, 0.0
        %v2425 = vmax.f32 %v2294, 0.0
        %v2426 = vmax.f32 %v1958, 0.0
        %v2427 = vmax.f32 %v2296, 0.0
        %v2428 = vmax.f32 %v1961, 0.0
        %v2429 = vmax.f32 %v2299, 0.0
        %v2430 = vmax.f32 %v1963, 0.0
        %v2431 = vmax.f32 %v2301, 0.0
        %v2432 = vmax.f32 %v1966, 0.0
        %v2433 = vmax.f32 %v2304, 0.0
        %v2434 = vmax.f32 %v1968, 0.0
        %v2435 = vmax.f32 %v2306, 0.0
        %v2436 = vpack.c.bf16 %v2310, %v2308
        %v2437 = vpack.c.bf16 %v2311, %v2309
        %v2438 = vpack.c.bf16 %v2314, %v2312
        %v2439 = vpack.c.bf16 %v2315, %v2313
        %v2440 = vpack.c.bf16 %v2318, %v2316
        %v2441 = vpack.c.bf16 %v2319, %v2317
        %v2442 = vpack.c.bf16 %v2322, %v2320
        %v2443 = vpack.c.bf16 %v2323, %v2321
        %v2444 = vpack.c.bf16 %v2326, %v2324
        %v2445 = vpack.c.bf16 %v2327, %v2325
        %v2446 = vpack.c.bf16 %v2330, %v2328
        %v2447 = vpack.c.bf16 %v2331, %v2329
        %v2448 = vpack.c.bf16 %v2334, %v2332
        %v2449 = vpack.c.bf16 %v2335, %v2333
        %v2450 = vpack.c.bf16 %v2338, %v2336
        %v2451 = vpack.c.bf16 %v2339, %v2337
        %v2452 = vpack.c.bf16 %v2342, %v2340
        %v2453 = vpack.c.bf16 %v2343, %v2341
        %v2454 = vpack.c.bf16 %v2346, %v2344
        %v2455 = vpack.c.bf16 %v2347, %v2345
        %v2456 = vpack.c.bf16 %v2350, %v2348
        %v2457 = vpack.c.bf16 %v2351, %v2349
        %v2458 = vpack.c.bf16 %v2354, %v2352
        %v2459 = vpack.c.bf16 %v2355, %v2353
        %v2460 = vpack.c.bf16 %v2358, %v2356
        %v2461 = vpack.c.bf16 %v2359, %v2357
        %v2462 = vpack.c.bf16 %v2362, %v2360
        %v2463 = vpack.c.bf16 %v2363, %v2361
        %v2464 = vpack.c.bf16 %v2366, %v2364
        %v2465 = vpack.c.bf16 %v2367, %v2365
        %v2466 = vpack.c.bf16 %v2370, %v2368
        %v2467 = vpack.c.bf16 %v2371, %v2369
        %v2468 = vpack.c.bf16 %v2374, %v2372
        %v2469 = vpack.c.bf16 %v2375, %v2373
        %v2470 = vpack.c.bf16 %v2378, %v2376
        %v2471 = vpack.c.bf16 %v2379, %v2377
        %v2472 = vpack.c.bf16 %v2382, %v2380
        %v2473 = vpack.c.bf16 %v2383, %v2381
        %v2474 = vpack.c.bf16 %v2386, %v2384
        %v2475 = vpack.c.bf16 %v2387, %v2385
        %v2476 = vpack.c.bf16 %v2390, %v2388
        %v2477 = vpack.c.bf16 %v2391, %v2389
        %v2478 = vpack.c.bf16 %v2394, %v2392
        %v2479 = vpack.c.bf16 %v2395, %v2393
        %v2480 = vpack.c.bf16 %v2398, %v2396
        %v2481 = vpack.c.bf16 %v2399, %v2397
        %v2482 = vpack.c.bf16 %v2402, %v2400
        %v2483 = vpack.c.bf16 %v2403, %v2401
        %v2484 = vpack.c.bf16 %v2406, %v2404
        %v2485 = vpack.c.bf16 %v2407, %v2405
        %v2486 = vpack.c.bf16 %v2410, %v2408
        %v2487 = vpack.c.bf16 %v2411, %v2409
        %v2488 = vpack.c.bf16 %v2414, %v2412
        %v2489 = vpack.c.bf16 %v2415, %v2413
        %v2490 = vpack.c.bf16 %v2418, %v2416
        %v2491 = vpack.c.bf16 %v2419, %v2417
        %v2492 = vpack.c.bf16 %v2422, %v2420
        %v2493 = vpack.c.bf16 %v2423, %v2421
        %v2494 = vpack.c.bf16 %v2426, %v2424
        %v2495 = vpack.c.bf16 %v2427, %v2425
        %v2496 = vpack.c.bf16 %v2430, %v2428
        %v2497 = vpack.c.bf16 %v2431, %v2429
        %v2498 = vpack.c.bf16 %v2434, %v2432
        %v2499 = vpack.c.bf16 %v2435, %v2433
        %v2500 = vld [vmem:[%s7] sm:$0xf]
        %v2501 = vld [vmem:[%s7 + $0x4] sm:$0xf]
        %v2502 = vld [vmem:[%s7 + $0x8] sm:$0xf]
        %v2503 = vld [vmem:[%s7 + $0xc] sm:$0xf]
        %v2504 = vld [vmem:[%s7 + $0x10] sm:$0xf]
        %v2505 = vld [vmem:[%s7 + $0x14] sm:$0xf]
        %v2506 = vld [vmem:[%s7 + $0x18] sm:$0xf]
        %v2507 = vld [vmem:[%s7 + $0x1c] sm:$0xf]
        %v2508 = vld [vmem:[%s7 + $0x20] sm:$0xf]
        %v2509 = vld [vmem:[%s7 + $0x24] sm:$0xf]
        %v2510 = vld [vmem:[%s7 + $0x28] sm:$0xf]
        %v2511 = vld [vmem:[%s7 + $0x2c] sm:$0xf]
        %v2512 = vld [vmem:[%s7 + $0x30] sm:$0xf]
        %v2513 = vld [vmem:[%s7 + $0x34] sm:$0xf]
        %v2514 = vld [vmem:[%s7 + $0x38] sm:$0xf]
        %v2515 = vld [vmem:[%s7 + $0x3c] sm:$0xf]
        %v2516 = vld [vmem:[%s7 + $0x40] sm:$0xf]
        %v2517 = vld [vmem:[%s7 + $0x44] sm:$0xf]
        %v2518 = vld [vmem:[%s7 + $0x48] sm:$0xf]
        %v2519 = vld [vmem:[%s7 + $0x4c] sm:$0xf]
        %v2520 = vld [vmem:[%s7 + $0x50] sm:$0xf]
        %v2521 = vld [vmem:[%s7 + $0x54] sm:$0xf]
        %v2522 = vld [vmem:[%s7 + $0x58] sm:$0xf]
        %v2523 = vld [vmem:[%s7 + $0x5c] sm:$0xf]
        %v2524 = vld [vmem:[%s7 + $0x60] sm:$0xf]
        %v2525 = vld [vmem:[%s7 + $0x64] sm:$0xf]
        %v2526 = vld [vmem:[%s7 + $0x68] sm:$0xf]
        %v2527 = vld [vmem:[%s7 + $0x6c] sm:$0xf]
        %v2528 = vld [vmem:[%s7 + $0x70] sm:$0xf]
        %v2529 = vld [vmem:[%s7 + $0x74] sm:$0xf]
        %v2530 = vld [vmem:[%s7 + $0x78] sm:$0xf]
        %v2531 = vld [vmem:[%s7 + $0x7c] sm:$0xf]
        %v2532 = vld [vmem:[%s8] sm:$0x1]
        %v2534 = vperm.slane %v2532, 0
        %v2568 = vunpack.c.l.b16 %v2500
        %v2569 = vunpack.c.l.b16 %v2501
        %v2570 = vunpack.c.l.b16 %v2502
        %v2571 = vunpack.c.l.b16 %v2503
        %v2572 = vunpack.c.l.b16 %v2504
        %v2573 = vunpack.c.l.b16 %v2505
        %v2574 = vunpack.c.l.b16 %v2506
        %v2575 = vunpack.c.l.b16 %v2507
        %v2576 = vunpack.c.l.b16 %v2508
        %v2577 = vunpack.c.l.b16 %v2509
        %v2578 = vunpack.c.l.b16 %v2510
        %v2579 = vunpack.c.l.b16 %v2511
        %v2580 = vunpack.c.l.b16 %v2512
        %v2581 = vunpack.c.l.b16 %v2513
        %v2582 = vunpack.c.l.b16 %v2514
        %v2583 = vunpack.c.l.b16 %v2515
        %v2584 = vunpack.c.l.b16 %v2516
        %v2585 = vunpack.c.l.b16 %v2517
        %v2586 = vunpack.c.l.b16 %v2518
        %v2587 = vunpack.c.l.b16 %v2519
        %v2588 = vunpack.c.l.b16 %v2520
        %v2589 = vunpack.c.l.b16 %v2521
        %v2590 = vunpack.c.l.b16 %v2522
        %v2591 = vunpack.c.l.b16 %v2523
        %v2592 = vunpack.c.l.b16 %v2524
        %v2593 = vunpack.c.l.b16 %v2525
        %v2594 = vunpack.c.l.b16 %v2526
        %v2595 = vunpack.c.l.b16 %v2527
        %v2596 = vunpack.c.l.b16 %v2528
        %v2597 = vunpack.c.l.b16 %v2529
        %v2598 = vunpack.c.l.b16 %v2530
        %v2599 = vunpack.c.l.b16 %v2531
        %v2600 = vpack.c.b16 %v2569, %v2568
        %v2601 = vpack.c.b16 %v2571, %v2570
        %v2602 = vpack.c.b16 %v2573, %v2572
        %v2603 = vpack.c.b16 %v2575, %v2574
        %v2604 = vpack.c.b16 %v2577, %v2576
        %v2605 = vpack.c.b16 %v2579, %v2578
        %v2606 = vpack.c.b16 %v2581, %v2580
        %v2607 = vpack.c.b16 %v2583, %v2582
        %v2608 = vpack.c.b16 %v2585, %v2584
        %v2609 = vpack.c.b16 %v2587, %v2586
        %v2610 = vpack.c.b16 %v2589, %v2588
        %v2611 = vpack.c.b16 %v2591, %v2590
        %v2612 = vpack.c.b16 %v2593, %v2592
        %v2613 = vpack.c.b16 %v2595, %v2594
        %v2614 = vpack.c.b16 %v2597, %v2596
        %v2615 = vpack.c.b16 %v2599, %v2598
        %2632 = vmatpush.bf16.msra.mxu0 %v2607
        %2633 = vmatpush.bf16.msra.mxu0 %v2606
        %2634 = vmatpush.bf16.msra.mxu0 %v2605
        %2635 = vmatpush.bf16.msra.mxu0 %v2604
        %2636 = vmatpush.bf16.msra.mxu0 %v2603
        %2637 = vmatpush.bf16.msra.mxu0 %v2602
        %2638 = vmatpush.bf16.msra.mxu0 %v2601
        %2639 = vmatpush.bf16.msra.mxu0 %v2600
        %2640 = vmatmul.bf16.gmra.mxu0 %v2436
        %v2641 = vpop.f32.mrf.mxu0
        %v2642 = vadd.f32 %v2534, %v2641
        %v2643 = vpop.f32.mrf.mxu0
        %v2644 = vadd.f32 %v2534, %v2643
        %2645 = vmatmul.bf16.gmra.mxu0 %v2438
        %v2646 = vpop.f32.mrf.mxu0
        %v2647 = vadd.f32 %v2534, %v2646
        %v2648 = vpop.f32.mrf.mxu0
        %v2649 = vadd.f32 %v2534, %v2648
        %2650 = vmatmul.bf16.gmra.mxu0 %v2440
        %v2651 = vpop.f32.mrf.mxu0
        %v2652 = vadd.f32 %v2534, %v2651
        %v2653 = vpop.f32.mrf.mxu0
        %v2654 = vadd.f32 %v2534, %v2653
        %2655 = vmatmul.bf16.gmra.mxu0 %v2442
        %v2656 = vpop.f32.mrf.mxu0
        %v2657 = vadd.f32 %v2534, %v2656
        %v2658 = vpop.f32.mrf.mxu0
        %v2659 = vadd.f32 %v2534, %v2658
        %2660 = vmatmul.bf16.gmra.mxu0 %v2444
        %v2661 = vpop.f32.mrf.mxu0
        %v2662 = vadd.f32 %v2534, %v2661
        %v2663 = vpop.f32.mrf.mxu0
        %v2664 = vadd.f32 %v2534, %v2663
        %2665 = vmatmul.bf16.gmra.mxu0 %v2446
        %v2666 = vpop.f32.mrf.mxu0
        %v2667 = vadd.f32 %v2534, %v2666
        %v2668 = vpop.f32.mrf.mxu0
        %v2669 = vadd.f32 %v2534, %v2668
        %2670 = vmatmul.bf16.gmra.mxu0 %v2448
        %v2671 = vpop.f32.mrf.mxu0
        %v2672 = vadd.f32 %v2534, %v2671
        %v2673 = vpop.f32.mrf.mxu0
        %v2674 = vadd.f32 %v2534, %v2673
        %2675 = vmatmul.bf16.gmra.mxu0 %v2450
        %v2676 = vpop.f32.mrf.mxu0
        %v2677 = vadd.f32 %v2534, %v2676
        %v2678 = vpop.f32.mrf.mxu0
        %v2679 = vadd.f32 %v2534, %v2678
        %2680 = vmatmul.bf16.gmra.mxu0 %v2452
        %v2681 = vpop.f32.mrf.mxu0
        %v2682 = vadd.f32 %v2534, %v2681
        %v2683 = vpop.f32.mrf.mxu0
        %v2684 = vadd.f32 %v2534, %v2683
        %2685 = vmatmul.bf16.gmra.mxu0 %v2454
        %v2686 = vpop.f32.mrf.mxu0
        %v2687 = vadd.f32 %v2534, %v2686
        %v2688 = vpop.f32.mrf.mxu0
        %v2689 = vadd.f32 %v2534, %v2688
        %2690 = vmatmul.bf16.gmra.mxu0 %v2456
        %v2691 = vpop.f32.mrf.mxu0
        %v2692 = vadd.f32 %v2534, %v2691
        %v2693 = vpop.f32.mrf.mxu0
        %v2694 = vadd.f32 %v2534, %v2693
        %2695 = vmatmul.bf16.gmra.mxu0 %v2458
        %v2696 = vpop.f32.mrf.mxu0
        %v2697 = vadd.f32 %v2534, %v2696
        %v2698 = vpop.f32.mrf.mxu0
        %v2699 = vadd.f32 %v2534, %v2698
        %2700 = vmatmul.bf16.gmra.mxu0 %v2460
        %v2701 = vpop.f32.mrf.mxu0
        %v2702 = vadd.f32 %v2534, %v2701
        %v2703 = vpop.f32.mrf.mxu0
        %v2704 = vadd.f32 %v2534, %v2703
        %2705 = vmatmul.bf16.gmra.mxu0 %v2462
        %v2706 = vpop.f32.mrf.mxu0
        %v2707 = vadd.f32 %v2534, %v2706
        %v2708 = vpop.f32.mrf.mxu0
        %v2709 = vadd.f32 %v2534, %v2708
        %2710 = vmatmul.bf16.gmra.mxu0 %v2464
        %v2711 = vpop.f32.mrf.mxu0
        %v2712 = vadd.f32 %v2534, %v2711
        %v2713 = vpop.f32.mrf.mxu0
        %v2714 = vadd.f32 %v2534, %v2713
        %2715 = vmatmul.bf16.gmra.mxu0 %v2466
        %v2716 = vpop.f32.mrf.mxu0
        %v2717 = vadd.f32 %v2534, %v2716
        %v2718 = vpop.f32.mrf.mxu0
        %v2719 = vadd.f32 %v2534, %v2718
        %2720 = vmatmul.bf16.gmra.mxu0 %v2468
        %v2721 = vpop.f32.mrf.mxu0
        %v2722 = vadd.f32 %v2534, %v2721
        %v2723 = vpop.f32.mrf.mxu0
        %v2724 = vadd.f32 %v2534, %v2723
        %2725 = vmatmul.bf16.gmra.mxu0 %v2470
        %v2726 = vpop.f32.mrf.mxu0
        %v2727 = vadd.f32 %v2534, %v2726
        %v2728 = vpop.f32.mrf.mxu0
        %v2729 = vadd.f32 %v2534, %v2728
        %2730 = vmatmul.bf16.gmra.mxu0 %v2472
        %v2731 = vpop.f32.mrf.mxu0
        %v2732 = vadd.f32 %v2534, %v2731
        %v2733 = vpop.f32.mrf.mxu0
        %v2734 = vadd.f32 %v2534, %v2733
        %2735 = vmatmul.bf16.gmra.mxu0 %v2474
        %v2736 = vpop.f32.mrf.mxu0
        %v2737 = vadd.f32 %v2534, %v2736
        %v2738 = vpop.f32.mrf.mxu0
        %v2739 = vadd.f32 %v2534, %v2738
        %2740 = vmatmul.bf16.gmra.mxu0 %v2476
        %v2741 = vpop.f32.mrf.mxu0
        %v2742 = vadd.f32 %v2534, %v2741
        %v2743 = vpop.f32.mrf.mxu0
        %v2744 = vadd.f32 %v2534, %v2743
        %2745 = vmatmul.bf16.gmra.mxu0 %v2478
        %v2746 = vpop.f32.mrf.mxu0
        %v2747 = vadd.f32 %v2534, %v2746
        %v2748 = vpop.f32.mrf.mxu0
        %v2749 = vadd.f32 %v2534, %v2748
        %2750 = vmatmul.bf16.gmra.mxu0 %v2480
        %v2751 = vpop.f32.mrf.mxu0
        %v2752 = vadd.f32 %v2534, %v2751
        %v2753 = vpop.f32.mrf.mxu0
        %v2754 = vadd.f32 %v2534, %v2753
        %2755 = vmatmul.bf16.gmra.mxu0 %v2482
        %v2756 = vpop.f32.mrf.mxu0
        %v2757 = vadd.f32 %v2534, %v2756
        %v2758 = vpop.f32.mrf.mxu0
        %v2759 = vadd.f32 %v2534, %v2758
        %2760 = vmatmul.bf16.gmra.mxu0 %v2484
        %v2761 = vpop.f32.mrf.mxu0
        %v2762 = vadd.f32 %v2534, %v2761
        %v2763 = vpop.f32.mrf.mxu0
        %v2764 = vadd.f32 %v2534, %v2763
        %2765 = vmatmul.bf16.gmra.mxu0 %v2486
        %v2766 = vpop.f32.mrf.mxu0
        %v2767 = vadd.f32 %v2534, %v2766
        %v2768 = vpop.f32.mrf.mxu0
        %v2769 = vadd.f32 %v2534, %v2768
        %2770 = vmatmul.bf16.gmra.mxu0 %v2488
        %v2771 = vpop.f32.mrf.mxu0
        %v2772 = vadd.f32 %v2534, %v2771
        %v2773 = vpop.f32.mrf.mxu0
        %v2774 = vadd.f32 %v2534, %v2773
        %2775 = vmatmul.bf16.gmra.mxu0 %v2490
        %v2776 = vpop.f32.mrf.mxu0
        %v2777 = vadd.f32 %v2534, %v2776
        %v2778 = vpop.f32.mrf.mxu0
        %v2779 = vadd.f32 %v2534, %v2778
        %2780 = vmatmul.bf16.gmra.mxu0 %v2492
        %v2781 = vpop.f32.mrf.mxu0
        %v2782 = vadd.f32 %v2534, %v2781
        %v2783 = vpop.f32.mrf.mxu0
        %v2784 = vadd.f32 %v2534, %v2783
        %2785 = vmatmul.bf16.gmra.mxu0 %v2494
        %v2786 = vpop.f32.mrf.mxu0
        %v2787 = vadd.f32 %v2534, %v2786
        %v2788 = vpop.f32.mrf.mxu0
        %v2789 = vadd.f32 %v2534, %v2788
        %2790 = vmatmul.bf16.gmra.mxu0 %v2496
        %v2791 = vpop.f32.mrf.mxu0
        %v2792 = vadd.f32 %v2534, %v2791
        %v2793 = vpop.f32.mrf.mxu0
        %v2794 = vadd.f32 %v2534, %v2793
        %2795 = vmatmul.bf16.gmra.mxu0 %v2498
        %v2796 = vpop.f32.mrf.mxu0
        %v2797 = vadd.f32 %v2534, %v2796
        %v2798 = vpop.f32.mrf.mxu0
        %v2799 = vadd.f32 %v2534, %v2798
        %2800 = vdwg.mxu0
        %2801 = vmatpush.bf16.msra.mxu0 %v2615
        %2802 = vmatpush.bf16.msra.mxu0 %v2614
        %2803 = vmatpush.bf16.msra.mxu0 %v2613
        %2804 = vmatpush.bf16.msra.mxu0 %v2612
        %2805 = vmatpush.bf16.msra.mxu0 %v2611
        %2806 = vmatpush.bf16.msra.mxu0 %v2610
        %2807 = vmatpush.bf16.msra.mxu0 %v2609
        %2808 = vmatpush.bf16.msra.mxu0 %v2608
        %2809 = vmatmul.bf16.gmra.mxu0 %v2437
        %v2810 = vpop.f32.mrf.mxu0
        %v2811 = vadd.f32 %v2642, %v2810
        %v2812 = vpop.f32.mrf.mxu0
        %v2813 = vadd.f32 %v2644, %v2812
        %2814 = vmatmul.bf16.gmra.mxu0 %v2439
        %v2815 = vpop.f32.mrf.mxu0
        %v2816 = vadd.f32 %v2647, %v2815
        %v2817 = vpop.f32.mrf.mxu0
        %v2818 = vadd.f32 %v2649, %v2817
        %2819 = vmatmul.bf16.gmra.mxu0 %v2441
        %v2820 = vpop.f32.mrf.mxu0
        %v2821 = vadd.f32 %v2652, %v2820
        %v2822 = vpop.f32.mrf.mxu0
        %v2823 = vadd.f32 %v2654, %v2822
        %2824 = vmatmul.bf16.gmra.mxu0 %v2443
        %v2825 = vpop.f32.mrf.mxu0
        %v2826 = vadd.f32 %v2657, %v2825
        %v2827 = vpop.f32.mrf.mxu0
        %v2828 = vadd.f32 %v2659, %v2827
        %2829 = vmatmul.bf16.gmra.mxu0 %v2445
        %v2830 = vpop.f32.mrf.mxu0
        %v2831 = vadd.f32 %v2662, %v2830
        %v2832 = vpop.f32.mrf.mxu0
        %v2833 = vadd.f32 %v2664, %v2832
        %2834 = vmatmul.bf16.gmra.mxu0 %v2447
        %v2835 = vpop.f32.mrf.mxu0
        %v2836 = vadd.f32 %v2667, %v2835
        %v2837 = vpop.f32.mrf.mxu0
        %v2838 = vadd.f32 %v2669, %v2837
        %2839 = vmatmul.bf16.gmra.mxu0 %v2449
        %v2840 = vpop.f32.mrf.mxu0
        %v2841 = vadd.f32 %v2672, %v2840
        %v2842 = vpop.f32.mrf.mxu0
        %v2843 = vadd.f32 %v2674, %v2842
        %2844 = vmatmul.bf16.gmra.mxu0 %v2451
        %v2845 = vpop.f32.mrf.mxu0
        %v2846 = vadd.f32 %v2677, %v2845
        %v2847 = vpop.f32.mrf.mxu0
        %v2848 = vadd.f32 %v2679, %v2847
        %2849 = vmatmul.bf16.gmra.mxu0 %v2453
        %v2850 = vpop.f32.mrf.mxu0
        %v2851 = vadd.f32 %v2682, %v2850
        %v2852 = vpop.f32.mrf.mxu0
        %v2853 = vadd.f32 %v2684, %v2852
        %2854 = vmatmul.bf16.gmra.mxu0 %v2455
        %v2855 = vpop.f32.mrf.mxu0
        %v2856 = vadd.f32 %v2687, %v2855
        %v2857 = vpop.f32.mrf.mxu0
        %v2858 = vadd.f32 %v2689, %v2857
        %2859 = vmatmul.bf16.gmra.mxu0 %v2457
        %v2860 = vpop.f32.mrf.mxu0
        %v2861 = vadd.f32 %v2692, %v2860
        %v2862 = vpop.f32.mrf.mxu0
        %v2863 = vadd.f32 %v2694, %v2862
        %2864 = vmatmul.bf16.gmra.mxu0 %v2459
        %v2865 = vpop.f32.mrf.mxu0
        %v2866 = vadd.f32 %v2697, %v2865
        %v2867 = vpop.f32.mrf.mxu0
        %v2868 = vadd.f32 %v2699, %v2867
        %2869 = vmatmul.bf16.gmra.mxu0 %v2461
        %v2870 = vpop.f32.mrf.mxu0
        %v2871 = vadd.f32 %v2702, %v2870
        %v2872 = vpop.f32.mrf.mxu0
        %v2873 = vadd.f32 %v2704, %v2872
        %2874 = vmatmul.bf16.gmra.mxu0 %v2463
        %v2875 = vpop.f32.mrf.mxu0
        %v2876 = vadd.f32 %v2707, %v2875
        %v2877 = vpop.f32.mrf.mxu0
        %v2878 = vadd.f32 %v2709, %v2877
        %2879 = vmatmul.bf16.gmra.mxu0 %v2465
        %v2880 = vpop.f32.mrf.mxu0
        %v2881 = vadd.f32 %v2712, %v2880
        %v2882 = vpop.f32.mrf.mxu0
        %v2883 = vadd.f32 %v2714, %v2882
        %2884 = vmatmul.bf16.gmra.mxu0 %v2467
        %v2885 = vpop.f32.mrf.mxu0
        %v2886 = vadd.f32 %v2717, %v2885
        %v2887 = vpop.f32.mrf.mxu0
        %v2888 = vadd.f32 %v2719, %v2887
        %2889 = vmatmul.bf16.gmra.mxu0 %v2469
        %v2890 = vpop.f32.mrf.mxu0
        %v2891 = vadd.f32 %v2722, %v2890
        %v2892 = vpop.f32.mrf.mxu0
        %v2893 = vadd.f32 %v2724, %v2892
        %2894 = vmatmul.bf16.gmra.mxu0 %v2471
        %v2895 = vpop.f32.mrf.mxu0
        %v2896 = vadd.f32 %v2727, %v2895
        %v2897 = vpop.f32.mrf.mxu0
        %v2898 = vadd.f32 %v2729, %v2897
        %2899 = vmatmul.bf16.gmra.mxu0 %v2473
        %v2900 = vpop.f32.mrf.mxu0
        %v2901 = vadd.f32 %v2732, %v2900
        %v2902 = vpop.f32.mrf.mxu0
        %v2903 = vadd.f32 %v2734, %v2902
        %2904 = vmatmul.bf16.gmra.mxu0 %v2475
        %v2905 = vpop.f32.mrf.mxu0
        %v2906 = vadd.f32 %v2737, %v2905
        %v2907 = vpop.f32.mrf.mxu0
        %v2908 = vadd.f32 %v2739, %v2907
        %2909 = vmatmul.bf16.gmra.mxu0 %v2477
        %v2910 = vpop.f32.mrf.mxu0
        %v2911 = vadd.f32 %v2742, %v2910
        %v2912 = vpop.f32.mrf.mxu0
        %v2913 = vadd.f32 %v2744, %v2912
        %2914 = vmatmul.bf16.gmra.mxu0 %v2479
        %v2915 = vpop.f32.mrf.mxu0
        %v2916 = vadd.f32 %v2747, %v2915
        %v2917 = vpop.f32.mrf.mxu0
        %v2918 = vadd.f32 %v2749, %v2917
        %2919 = vmatmul.bf16.gmra.mxu0 %v2481
        %v2920 = vpop.f32.mrf.mxu0
        %v2921 = vadd.f32 %v2752, %v2920
        %v2922 = vpop.f32.mrf.mxu0
        %v2923 = vadd.f32 %v2754, %v2922
        %2924 = vmatmul.bf16.gmra.mxu0 %v2483
        %v2925 = vpop.f32.mrf.mxu0
        %v2926 = vadd.f32 %v2757, %v2925
        %v2927 = vpop.f32.mrf.mxu0
        %v2928 = vadd.f32 %v2759, %v2927
        %2929 = vmatmul.bf16.gmra.mxu0 %v2485
        %v2930 = vpop.f32.mrf.mxu0
        %v2931 = vadd.f32 %v2762, %v2930
        %v2932 = vpop.f32.mrf.mxu0
        %v2933 = vadd.f32 %v2764, %v2932
        %2934 = vmatmul.bf16.gmra.mxu0 %v2487
        %v2935 = vpop.f32.mrf.mxu0
        %v2936 = vadd.f32 %v2767, %v2935
        %v2937 = vpop.f32.mrf.mxu0
        %v2938 = vadd.f32 %v2769, %v2937
        %2939 = vmatmul.bf16.gmra.mxu0 %v2489
        %v2940 = vpop.f32.mrf.mxu0
        %v2941 = vadd.f32 %v2772, %v2940
        %v2942 = vpop.f32.mrf.mxu0
        %v2943 = vadd.f32 %v2774, %v2942
        %2944 = vmatmul.bf16.gmra.mxu0 %v2491
        %v2945 = vpop.f32.mrf.mxu0
        %v2946 = vadd.f32 %v2777, %v2945
        %v2947 = vpop.f32.mrf.mxu0
        %v2948 = vadd.f32 %v2779, %v2947
        %2949 = vmatmul.bf16.gmra.mxu0 %v2493
        %v2950 = vpop.f32.mrf.mxu0
        %v2951 = vadd.f32 %v2782, %v2950
        %v2952 = vpop.f32.mrf.mxu0
        %v2953 = vadd.f32 %v2784, %v2952
        %2954 = vmatmul.bf16.gmra.mxu0 %v2495
        %v2955 = vpop.f32.mrf.mxu0
        %v2956 = vadd.f32 %v2787, %v2955
        %v2957 = vpop.f32.mrf.mxu0
        %v2958 = vadd.f32 %v2789, %v2957
        %2959 = vmatmul.bf16.gmra.mxu0 %v2497
        %v2960 = vpop.f32.mrf.mxu0
        %v2961 = vadd.f32 %v2792, %v2960
        %v2962 = vpop.f32.mrf.mxu0
        %v2963 = vadd.f32 %v2794, %v2962
        %2964 = vmatmul.bf16.gmra.mxu0 %v2499
        %v2965 = vpop.f32.mrf.mxu0
        %v2966 = vadd.f32 %v2797, %v2965
        %v2967 = vpop.f32.mrf.mxu0
        %v2968 = vadd.f32 %v2799, %v2967
        %2969 = vdwg.mxu0
        %2970 = vmax.xlane.f32.xlu0 %v2811
        %v2971 = vpop.xlane.xlu0 %2970
        %2972 = vmax.xlane.f32.xlu0 %v2813
        %v2973 = vpop.xlane.xlu0 %2972
        %2974 = vmax.xlane.f32.xlu0 %v2816
        %v2975 = vpop.xlane.xlu0 %2974
        %2976 = vmax.xlane.f32.xlu0 %v2818
        %v2977 = vpop.xlane.xlu0 %2976
        %2978 = vmax.xlane.f32.xlu0 %v2821
        %v2979 = vpop.xlane.xlu0 %2978
        %2980 = vmax.xlane.f32.xlu0 %v2823
        %v2981 = vpop.xlane.xlu0 %2980
        %2982 = vmax.xlane.f32.xlu0 %v2826
        %v2983 = vpop.xlane.xlu0 %2982
        %2984 = vmax.xlane.f32.xlu0 %v2828
        %v2985 = vpop.xlane.xlu0 %2984
        %2986 = vmax.xlane.f32.xlu0 %v2831
        %v2987 = vpop.xlane.xlu0 %2986
        %2988 = vmax.xlane.f32.xlu0 %v2833
        %v2989 = vpop.xlane.xlu0 %2988
        %2990 = vmax.xlane.f32.xlu0 %v2836
        %v2991 = vpop.xlane.xlu0 %2990
        %2992 = vmax.xlane.f32.xlu0 %v2838
        %v2993 = vpop.xlane.xlu0 %2992
        %2994 = vmax.xlane.f32.xlu0 %v2841
        %v2995 = vpop.xlane.xlu0 %2994
        %2996 = vmax.xlane.f32.xlu0 %v2843
        %v2997 = vpop.xlane.xlu0 %2996
        %2998 = vmax.xlane.f32.xlu0 %v2846
        %v2999 = vpop.xlane.xlu0 %2998
        %3000 = vmax.xlane.f32.xlu0 %v2848
        %v3001 = vpop.xlane.xlu0 %3000
        %3002 = vmax.xlane.f32.xlu0 %v2851
        %v3003 = vpop.xlane.xlu0 %3002
        %3004 = vmax.xlane.f32.xlu0 %v2853
        %v3005 = vpop.xlane.xlu0 %3004
        %3006 = vmax.xlane.f32.xlu0 %v2856
        %v3007 = vpop.xlane.xlu0 %3006
        %3008 = vmax.xlane.f32.xlu0 %v2858
        %v3009 = vpop.xlane.xlu0 %3008
        %3010 = vmax.xlane.f32.xlu0 %v2861
        %v3011 = vpop.xlane.xlu0 %3010
        %3012 = vmax.xlane.f32.xlu0 %v2863
        %v3013 = vpop.xlane.xlu0 %3012
        %3014 = vmax.xlane.f32.xlu0 %v2866
        %v3015 = vpop.xlane.xlu0 %3014
        %3016 = vmax.xlane.f32.xlu0 %v2868
        %v3017 = vpop.xlane.xlu0 %3016
        %3018 = vmax.xlane.f32.xlu0 %v2871
        %v3019 = vpop.xlane.xlu0 %3018
        %3020 = vmax.xlane.f32.xlu0 %v2873
        %v3021 = vpop.xlane.xlu0 %3020
        %3022 = vmax.xlane.f32.xlu0 %v2876
        %v3023 = vpop.xlane.xlu0 %3022
        %3024 = vmax.xlane.f32.xlu0 %v2878
        %v3025 = vpop.xlane.xlu0 %3024
        %3026 = vmax.xlane.f32.xlu0 %v2881
        %v3027 = vpop.xlane.xlu0 %3026
        %3028 = vmax.xlane.f32.xlu0 %v2883
        %v3029 = vpop.xlane.xlu0 %3028
        %3030 = vmax.xlane.f32.xlu0 %v2886
        %v3031 = vpop.xlane.xlu0 %3030
        %3032 = vmax.xlane.f32.xlu0 %v2888
        %v3033 = vpop.xlane.xlu0 %3032
        %3034 = vmax.xlane.f32.xlu0 %v2891
        %v3035 = vpop.xlane.xlu0 %3034
        %3036 = vmax.xlane.f32.xlu0 %v2893
        %v3037 = vpop.xlane.xlu0 %3036
        %3038 = vmax.xlane.f32.xlu0 %v2896
        %v3039 = vpop.xlane.xlu0 %3038
        %3040 = vmax.xlane.f32.xlu0 %v2898
        %v3041 = vpop.xlane.xlu0 %3040
        %3042 = vmax.xlane.f32.xlu0 %v2901
        %v3043 = vpop.xlane.xlu0 %3042
        %3044 = vmax.xlane.f32.xlu0 %v2903
        %v3045 = vpop.xlane.xlu0 %3044
        %3046 = vmax.xlane.f32.xlu0 %v2906
        %v3047 = vpop.xlane.xlu0 %3046
        %3048 = vmax.xlane.f32.xlu0 %v2908
        %v3049 = vpop.xlane.xlu0 %3048
        %3050 = vmax.xlane.f32.xlu0 %v2911
        %v3051 = vpop.xlane.xlu0 %3050
        %3052 = vmax.xlane.f32.xlu0 %v2913
        %v3053 = vpop.xlane.xlu0 %3052
        %3054 = vmax.xlane.f32.xlu0 %v2916
        %v3055 = vpop.xlane.xlu0 %3054
        %3056 = vmax.xlane.f32.xlu0 %v2918
        %v3057 = vpop.xlane.xlu0 %3056
        %3058 = vmax.xlane.f32.xlu0 %v2921
        %v3059 = vpop.xlane.xlu0 %3058
        %3060 = vmax.xlane.f32.xlu0 %v2923
        %v3061 = vpop.xlane.xlu0 %3060
        %3062 = vmax.xlane.f32.xlu0 %v2926
        %v3063 = vpop.xlane.xlu0 %3062
        %3064 = vmax.xlane.f32.xlu0 %v2928
        %v3065 = vpop.xlane.xlu0 %3064
        %3066 = vmax.xlane.f32.xlu0 %v2931
        %v3067 = vpop.xlane.xlu0 %3066
        %3068 = vmax.xlane.f32.xlu0 %v2933
        %v3069 = vpop.xlane.xlu0 %3068
        %3070 = vmax.xlane.f32.xlu0 %v2936
        %v3071 = vpop.xlane.xlu0 %3070
        %3072 = vmax.xlane.f32.xlu0 %v2938
        %v3073 = vpop.xlane.xlu0 %3072
        %3074 = vmax.xlane.f32.xlu0 %v2941
        %v3075 = vpop.xlane.xlu0 %3074
        %3076 = vmax.xlane.f32.xlu0 %v2943
        %v3077 = vpop.xlane.xlu0 %3076
        %3078 = vmax.xlane.f32.xlu0 %v2946
        %v3079 = vpop.xlane.xlu0 %3078
        %3080 = vmax.xlane.f32.xlu0 %v2948
        %v3081 = vpop.xlane.xlu0 %3080
        %3082 = vmax.xlane.f32.xlu0 %v2951
        %v3083 = vpop.xlane.xlu0 %3082
        %3084 = vmax.xlane.f32.xlu0 %v2953
        %v3085 = vpop.xlane.xlu0 %3084
        %3086 = vmax.xlane.f32.xlu0 %v2956
        %v3087 = vpop.xlane.xlu0 %3086
        %3088 = vmax.xlane.f32.xlu0 %v2958
        %v3089 = vpop.xlane.xlu0 %3088
        %3090 = vmax.xlane.f32.xlu0 %v2961
        %v3091 = vpop.xlane.xlu0 %3090
        %3092 = vmax.xlane.f32.xlu0 %v2963
        %v3093 = vpop.xlane.xlu0 %3092
        %3094 = vmax.xlane.f32.xlu0 %v2966
        %v3095 = vpop.xlane.xlu0 %3094
        %3096 = vmax.xlane.f32.xlu0 %v2968
        %v3097 = vpop.xlane.xlu0 %3096
        %v3098 = vsub.f32 %v2811, %v2971
        %v3099 = vsub.f32 %v2813, %v2973
        %v3100 = vsub.f32 %v2816, %v2975
        %v3101 = vsub.f32 %v2818, %v2977
        %v3102 = vsub.f32 %v2821, %v2979
        %v3103 = vsub.f32 %v2823, %v2981
        %v3104 = vsub.f32 %v2826, %v2983
        %v3105 = vsub.f32 %v2828, %v2985
        %v3106 = vsub.f32 %v2831, %v2987
        %v3107 = vsub.f32 %v2833, %v2989
        %v3108 = vsub.f32 %v2836, %v2991
        %v3109 = vsub.f32 %v2838, %v2993
        %v3110 = vsub.f32 %v2841, %v2995
        %v3111 = vsub.f32 %v2843, %v2997
        %v3112 = vsub.f32 %v2846, %v2999
        %v3113 = vsub.f32 %v2848, %v3001
        %v3114 = vsub.f32 %v2851, %v3003
        %v3115 = vsub.f32 %v2853, %v3005
        %v3116 = vsub.f32 %v2856, %v3007
        %v3117 = vsub.f32 %v2858, %v3009
        %v3118 = vsub.f32 %v2861, %v3011
        %v3119 = vsub.f32 %v2863, %v3013
        %v3120 = vsub.f32 %v2866, %v3015
        %v3121 = vsub.f32 %v2868, %v3017
        %v3122 = vsub.f32 %v2871, %v3019
        %v3123 = vsub.f32 %v2873, %v3021
        %v3124 = vsub.f32 %v2876, %v3023
        %v3125 = vsub.f32 %v2878, %v3025
        %v3126 = vsub.f32 %v2881, %v3027
        %v3127 = vsub.f32 %v2883, %v3029
        %v3128 = vsub.f32 %v2886, %v3031
        %v3129 = vsub.f32 %v2888, %v3033
        %v3130 = vsub.f32 %v2891, %v3035
        %v3131 = vsub.f32 %v2893, %v3037
        %v3132 = vsub.f32 %v2896, %v3039
        %v3133 = vsub.f32 %v2898, %v3041
        %v3134 = vsub.f32 %v2901, %v3043
        %v3135 = vsub.f32 %v2903, %v3045
        %v3136 = vsub.f32 %v2906, %v3047
        %v3137 = vsub.f32 %v2908, %v3049
        %v3138 = vsub.f32 %v2911, %v3051
        %v3139 = vsub.f32 %v2913, %v3053
        %v3140 = vsub.f32 %v2916, %v3055
        %v3141 = vsub.f32 %v2918, %v3057
        %v3142 = vsub.f32 %v2921, %v3059
        %v3143 = vsub.f32 %v2923, %v3061
        %v3144 = vsub.f32 %v2926, %v3063
        %v3145 = vsub.f32 %v2928, %v3065
        %v3146 = vsub.f32 %v2931, %v3067
        %v3147 = vsub.f32 %v2933, %v3069
        %v3148 = vsub.f32 %v2936, %v3071
        %v3149 = vsub.f32 %v2938, %v3073
        %v3150 = vsub.f32 %v2941, %v3075
        %v3151 = vsub.f32 %v2943, %v3077
        %v3152 = vsub.f32 %v2946, %v3079
        %v3153 = vsub.f32 %v2948, %v3081
        %v3154 = vsub.f32 %v2951, %v3083
        %v3155 = vsub.f32 %v2953, %v3085
        %v3156 = vsub.f32 %v2956, %v3087
        %v3157 = vsub.f32 %v2958, %v3089
        %v3158 = vsub.f32 %v2961, %v3091
        %v3159 = vsub.f32 %v2963, %v3093
        %v3160 = vsub.f32 %v2966, %v3095
        %v3161 = vsub.f32 %v2968, %v3097
        %v3162 = vmul.f32 %v3098, 1.442695
        %v3163 = vpow.pop %v3162
        %v3164 = vmul.f32 %v3099, 1.442695
        %v3165 = vpow.pop %v3164
        %v3166 = vmul.f32 %v3100, 1.442695
        %v3167 = vpow.pop %v3166
        %v3168 = vmul.f32 %v3101, 1.442695
        %v3169 = vpow.pop %v3168
        %v3170 = vmul.f32 %v3102, 1.442695
        %v3171 = vpow.pop %v3170
        %v3172 = vmul.f32 %v3103, 1.442695
        %v3173 = vpow.pop %v3172
        %v3174 = vmul.f32 %v3104, 1.442695
        %v3175 = vpow.pop %v3174
        %v3176 = vmul.f32 %v3105, 1.442695
        %v3177 = vpow.pop %v3176
        %v3178 = vmul.f32 %v3106, 1.442695
        %v3179 = vpow.pop %v3178
        %v3180 = vmul.f32 %v3107, 1.442695
        %v3181 = vpow.pop %v3180
        %v3182 = vmul.f32 %v3108, 1.442695
        %v3183 = vpow.pop %v3182
        %v3184 = vmul.f32 %v3109, 1.442695
        %v3185 = vpow.pop %v3184
        %v3186 = vmul.f32 %v3110, 1.442695
        %v3187 = vpow.pop %v3186
        %v3188 = vmul.f32 %v3111, 1.442695
        %v3189 = vpow.pop %v3188
        %v3190 = vmul.f32 %v3112, 1.442695
        %v3191 = vpow.pop %v3190
        %v3192 = vmul.f32 %v3113, 1.442695
        %v3193 = vpow.pop %v3192
        %v3194 = vmul.f32 %v3114, 1.442695
        %v3195 = vpow.pop %v3194
        %v3196 = vmul.f32 %v3115, 1.442695
        %v3197 = vpow.pop %v3196
        %v3198 = vmul.f32 %v3116, 1.442695
        %v3199 = vpow.pop %v3198
        %v3200 = vmul.f32 %v3117, 1.442695
        %v3201 = vpow.pop %v3200
        %v3202 = vmul.f32 %v3118, 1.442695
        %v3203 = vpow.pop %v3202
        %v3204 = vmul.f32 %v3119, 1.442695
        %v3205 = vpow.pop %v3204
        %v3206 = vmul.f32 %v3120, 1.442695
        %v3207 = vpow.pop %v3206
        %v3208 = vmul.f32 %v3121, 1.442695
        %v3209 = vpow.pop %v3208
        %v3210 = vmul.f32 %v3122, 1.442695
        %v3211 = vpow.pop %v3210
        %v3212 = vmul.f32 %v3123, 1.442695
        %v3213 = vpow.pop %v3212
        %v3214 = vmul.f32 %v3124, 1.442695
        %v3215 = vpow.pop %v3214
        %v3216 = vmul.f32 %v3125, 1.442695
        %v3217 = vpow.pop %v3216
        %v3218 = vmul.f32 %v3126, 1.442695
        %v3219 = vpow.pop %v3218
        %v3220 = vmul.f32 %v3127, 1.442695
        %v3221 = vpow.pop %v3220
        %v3222 = vmul.f32 %v3128, 1.442695
        %v3223 = vpow.pop %v3222
        %v3224 = vmul.f32 %v3129, 1.442695
        %v3225 = vpow.pop %v3224
        %v3226 = vmul.f32 %v3130, 1.442695
        %v3227 = vpow.pop %v3226
        %v3228 = vmul.f32 %v3131, 1.442695
        %v3229 = vpow.pop %v3228
        %v3230 = vmul.f32 %v3132, 1.442695
        %v3231 = vpow.pop %v3230
        %v3232 = vmul.f32 %v3133, 1.442695
        %v3233 = vpow.pop %v3232
        %v3234 = vmul.f32 %v3134, 1.442695
        %v3235 = vpow.pop %v3234
        %v3236 = vmul.f32 %v3135, 1.442695
        %v3237 = vpow.pop %v3236
        %v3238 = vmul.f32 %v3136, 1.442695
        %v3239 = vpow.pop %v3238
        %v3240 = vmul.f32 %v3137, 1.442695
        %v3241 = vpow.pop %v3240
        %v3242 = vmul.f32 %v3138, 1.442695
        %v3243 = vpow.pop %v3242
        %v3244 = vmul.f32 %v3139, 1.442695
        %v3245 = vpow.pop %v3244
        %v3246 = vmul.f32 %v3140, 1.442695
        %v3247 = vpow.pop %v3246
        %v3248 = vmul.f32 %v3141, 1.442695
        %v3249 = vpow.pop %v3248
        %v3250 = vmul.f32 %v3142, 1.442695
        %v3251 = vpow.pop %v3250
        %v3252 = vmul.f32 %v3143, 1.442695
        %v3253 = vpow.pop %v3252
        %v3254 = vmul.f32 %v3144, 1.442695
        %v3255 = vpow.pop %v3254
        %v3256 = vmul.f32 %v3145, 1.442695
        %v3257 = vpow.pop %v3256
        %v3258 = vmul.f32 %v3146, 1.442695
        %v3259 = vpow.pop %v3258
        %v3260 = vmul.f32 %v3147, 1.442695
        %v3261 = vpow.pop %v3260
        %v3262 = vmul.f32 %v3148, 1.442695
        %v3263 = vpow.pop %v3262
        %v3264 = vmul.f32 %v3149, 1.442695
        %v3265 = vpow.pop %v3264
        %v3266 = vmul.f32 %v3150, 1.442695
        %v3267 = vpow.pop %v3266
        %v3268 = vmul.f32 %v3151, 1.442695
        %v3269 = vpow.pop %v3268
        %v3270 = vmul.f32 %v3152, 1.442695
        %v3271 = vpow.pop %v3270
        %v3272 = vmul.f32 %v3153, 1.442695
        %v3273 = vpow.pop %v3272
        %v3274 = vmul.f32 %v3154, 1.442695
        %v3275 = vpow.pop %v3274
        %v3276 = vmul.f32 %v3155, 1.442695
        %v3277 = vpow.pop %v3276
        %v3278 = vmul.f32 %v3156, 1.442695
        %v3279 = vpow.pop %v3278
        %v3280 = vmul.f32 %v3157, 1.442695
        %v3281 = vpow.pop %v3280
        %v3282 = vmul.f32 %v3158, 1.442695
        %v3283 = vpow.pop %v3282
        %v3284 = vmul.f32 %v3159, 1.442695
        %v3285 = vpow.pop %v3284
        %v3286 = vmul.f32 %v3160, 1.442695
        %v3287 = vpow.pop %v3286
        %v3288 = vmul.f32 %v3161, 1.442695
        %v3289 = vpow.pop %v3288
        %3290 = vadd.xlane.f32.xlu0 %v3163
        %v3291 = vpop.xlane.xlu0 %3290
        %3292 = vadd.xlane.f32.xlu0 %v3165
        %v3293 = vpop.xlane.xlu0 %3292
        %3294 = vadd.xlane.f32.xlu0 %v3167
        %v3295 = vpop.xlane.xlu0 %3294
        %3296 = vadd.xlane.f32.xlu0 %v3169
        %v3297 = vpop.xlane.xlu0 %3296
        %3298 = vadd.xlane.f32.xlu0 %v3171
        %v3299 = vpop.xlane.xlu0 %3298
        %3300 = vadd.xlane.f32.xlu0 %v3173
        %v3301 = vpop.xlane.xlu0 %3300
        %3302 = vadd.xlane.f32.xlu0 %v3175
        %v3303 = vpop.xlane.xlu0 %3302
        %3304 = vadd.xlane.f32.xlu0 %v3177
        %v3305 = vpop.xlane.xlu0 %3304
        %3306 = vadd.xlane.f32.xlu0 %v3179
        %v3307 = vpop.xlane.xlu0 %3306
        %3308 = vadd.xlane.f32.xlu0 %v3181
        %v3309 = vpop.xlane.xlu0 %3308
        %3310 = vadd.xlane.f32.xlu0 %v3183
        %v3311 = vpop.xlane.xlu0 %3310
        %3312 = vadd.xlane.f32.xlu0 %v3185
        %v3313 = vpop.xlane.xlu0 %3312
        %3314 = vadd.xlane.f32.xlu0 %v3187
        %v3315 = vpop.xlane.xlu0 %3314
        %3316 = vadd.xlane.f32.xlu0 %v3189
        %v3317 = vpop.xlane.xlu0 %3316
        %3318 = vadd.xlane.f32.xlu0 %v3191
        %v3319 = vpop.xlane.xlu0 %3318
        %3320 = vadd.xlane.f32.xlu0 %v3193
        %v3321 = vpop.xlane.xlu0 %3320
        %3322 = vadd.xlane.f32.xlu0 %v3195
        %v3323 = vpop.xlane.xlu0 %3322
        %3324 = vadd.xlane.f32.xlu0 %v3197
        %v3325 = vpop.xlane.xlu0 %3324
        %3326 = vadd.xlane.f32.xlu0 %v3199
        %v3327 = vpop.xlane.xlu0 %3326
        %3328 = vadd.xlane.f32.xlu0 %v3201
        %v3329 = vpop.xlane.xlu0 %3328
        %3330 = vadd.xlane.f32.xlu0 %v3203
        %v3331 = vpop.xlane.xlu0 %3330
        %3332 = vadd.xlane.f32.xlu0 %v3205
        %v3333 = vpop.xlane.xlu0 %3332
        %3334 = vadd.xlane.f32.xlu0 %v3207
        %v3335 = vpop.xlane.xlu0 %3334
        %3336 = vadd.xlane.f32.xlu0 %v3209
        %v3337 = vpop.xlane.xlu0 %3336
        %3338 = vadd.xlane.f32.xlu0 %v3211
        %v3339 = vpop.xlane.xlu0 %3338
        %3340 = vadd.xlane.f32.xlu0 %v3213
        %v3341 = vpop.xlane.xlu0 %3340
        %3342 = vadd.xlane.f32.xlu0 %v3215
        %v3343 = vpop.xlane.xlu0 %3342
        %3344 = vadd.xlane.f32.xlu0 %v3217
        %v3345 = vpop.xlane.xlu0 %3344
        %3346 = vadd.xlane.f32.xlu0 %v3219
        %v3347 = vpop.xlane.xlu0 %3346
        %3348 = vadd.xlane.f32.xlu0 %v3221
        %v3349 = vpop.xlane.xlu0 %3348
        %3350 = vadd.xlane.f32.xlu0 %v3223
        %v3351 = vpop.xlane.xlu0 %3350
        %3352 = vadd.xlane.f32.xlu0 %v3225
        %v3353 = vpop.xlane.xlu0 %3352
        %3354 = vadd.xlane.f32.xlu0 %v3227
        %v3355 = vpop.xlane.xlu0 %3354
        %3356 = vadd.xlane.f32.xlu0 %v3229
        %v3357 = vpop.xlane.xlu0 %3356
        %3358 = vadd.xlane.f32.xlu0 %v3231
        %v3359 = vpop.xlane.xlu0 %3358
        %3360 = vadd.xlane.f32.xlu0 %v3233
        %v3361 = vpop.xlane.xlu0 %3360
        %3362 = vadd.xlane.f32.xlu0 %v3235
        %v3363 = vpop.xlane.xlu0 %3362
        %3364 = vadd.xlane.f32.xlu0 %v3237
        %v3365 = vpop.xlane.xlu0 %3364
        %3366 = vadd.xlane.f32.xlu0 %v3239
        %v3367 = vpop.xlane.xlu0 %3366
        %3368 = vadd.xlane.f32.xlu0 %v3241
        %v3369 = vpop.xlane.xlu0 %3368
        %3370 = vadd.xlane.f32.xlu0 %v3243
        %v3371 = vpop.xlane.xlu0 %3370
        %3372 = vadd.xlane.f32.xlu0 %v3245
        %v3373 = vpop.xlane.xlu0 %3372
        %3374 = vadd.xlane.f32.xlu0 %v3247
        %v3375 = vpop.xlane.xlu0 %3374
        %3376 = vadd.xlane.f32.xlu0 %v3249
        %v3377 = vpop.xlane.xlu0 %3376
        %3378 = vadd.xlane.f32.xlu0 %v3251
        %v3379 = vpop.xlane.xlu0 %3378
        %3380 = vadd.xlane.f32.xlu0 %v3253
        %v3381 = vpop.xlane.xlu0 %3380
        %3382 = vadd.xlane.f32.xlu0 %v3255
        %v3383 = vpop.xlane.xlu0 %3382
        %3384 = vadd.xlane.f32.xlu0 %v3257
        %v3385 = vpop.xlane.xlu0 %3384
        %3386 = vadd.xlane.f32.xlu0 %v3259
        %v3387 = vpop.xlane.xlu0 %3386
        %3388 = vadd.xlane.f32.xlu0 %v3261
        %v3389 = vpop.xlane.xlu0 %3388
        %3390 = vadd.xlane.f32.xlu0 %v3263
        %v3391 = vpop.xlane.xlu0 %3390
        %3392 = vadd.xlane.f32.xlu0 %v3265
        %v3393 = vpop.xlane.xlu0 %3392
        %3394 = vadd.xlane.f32.xlu0 %v3267
        %v3395 = vpop.xlane.xlu0 %3394
        %3396 = vadd.xlane.f32.xlu0 %v3269
        %v3397 = vpop.xlane.xlu0 %3396
        %3398 = vadd.xlane.f32.xlu0 %v3271
        %v3399 = vpop.xlane.xlu0 %3398
        %3400 = vadd.xlane.f32.xlu0 %v3273
        %v3401 = vpop.xlane.xlu0 %3400
        %3402 = vadd.xlane.f32.xlu0 %v3275
        %v3403 = vpop.xlane.xlu0 %3402
        %3404 = vadd.xlane.f32.xlu0 %v3277
        %v3405 = vpop.xlane.xlu0 %3404
        %3406 = vadd.xlane.f32.xlu0 %v3279
        %v3407 = vpop.xlane.xlu0 %3406
        %3408 = vadd.xlane.f32.xlu0 %v3281
        %v3409 = vpop.xlane.xlu0 %3408
        %3410 = vadd.xlane.f32.xlu0 %v3283
        %v3411 = vpop.xlane.xlu0 %3410
        %3412 = vadd.xlane.f32.xlu0 %v3285
        %v3413 = vpop.xlane.xlu0 %3412
        %3414 = vadd.xlane.f32.xlu0 %v3287
        %v3415 = vpop.xlane.xlu0 %3414
        %3416 = vadd.xlane.f32.xlu0 %v3289
        %v3417 = vpop.xlane.xlu0 %3416
        %v3418 = vrcp.pop %v3291
        %v3419 = vrcp.pop %v3293
        %v3420 = vrcp.pop %v3295
        %v3421 = vrcp.pop %v3297
        %v3422 = vrcp.pop %v3299
        %v3423 = vrcp.pop %v3301
        %v3424 = vrcp.pop %v3303
        %v3425 = vrcp.pop %v3305
        %v3426 = vrcp.pop %v3307
        %v3427 = vrcp.pop %v3309
        %v3428 = vrcp.pop %v3311
        %v3429 = vrcp.pop %v3313
        %v3430 = vrcp.pop %v3315
        %v3431 = vrcp.pop %v3317
        %v3432 = vrcp.pop %v3319
        %v3433 = vrcp.pop %v3321
        %v3434 = vrcp.pop %v3323
        %v3435 = vrcp.pop %v3325
        %v3436 = vrcp.pop %v3327
        %v3437 = vrcp.pop %v3329
        %v3438 = vrcp.pop %v3331
        %v3439 = vrcp.pop %v3333
        %v3440 = vrcp.pop %v3335
        %v3441 = vrcp.pop %v3337
        %v3442 = vrcp.pop %v3339
        %v3443 = vrcp.pop %v3341
        %v3444 = vrcp.pop %v3343
        %v3445 = vrcp.pop %v3345
        %v3446 = vrcp.pop %v3347
        %v3447 = vrcp.pop %v3349
        %v3448 = vrcp.pop %v3351
        %v3449 = vrcp.pop %v3353
        %v3450 = vrcp.pop %v3355
        %v3451 = vrcp.pop %v3357
        %v3452 = vrcp.pop %v3359
        %v3453 = vrcp.pop %v3361
        %v3454 = vrcp.pop %v3363
        %v3455 = vrcp.pop %v3365
        %v3456 = vrcp.pop %v3367
        %v3457 = vrcp.pop %v3369
        %v3458 = vrcp.pop %v3371
        %v3459 = vrcp.pop %v3373
        %v3460 = vrcp.pop %v3375
        %v3461 = vrcp.pop %v3377
        %v3462 = vrcp.pop %v3379
        %v3463 = vrcp.pop %v3381
        %v3464 = vrcp.pop %v3383
        %v3465 = vrcp.pop %v3385
        %v3466 = vrcp.pop %v3387
        %v3467 = vrcp.pop %v3389
        %v3468 = vrcp.pop %v3391
        %v3469 = vrcp.pop %v3393
        %v3470 = vrcp.pop %v3395
        %v3471 = vrcp.pop %v3397
        %v3472 = vrcp.pop %v3399
        %v3473 = vrcp.pop %v3401
        %v3474 = vrcp.pop %v3403
        %v3475 = vrcp.pop %v3405
        %v3476 = vrcp.pop %v3407
        %v3477 = vrcp.pop %v3409
        %v3478 = vrcp.pop %v3411
        %v3479 = vrcp.pop %v3413
        %v3480 = vrcp.pop %v3415
        %v3481 = vrcp.pop %v3417
        %v3482 = vmul.f32 %v3291, %v3418
        %v3483 = vmul.f32 %v3293, %v3419
        %v3484 = vmul.f32 %v3295, %v3420
        %v3485 = vmul.f32 %v3297, %v3421
        %v3486 = vmul.f32 %v3299, %v3422
        %v3487 = vmul.f32 %v3301, %v3423
        %v3488 = vmul.f32 %v3303, %v3424
        %v3489 = vmul.f32 %v3305, %v3425
        %v3490 = vmul.f32 %v3307, %v3426
        %v3491 = vmul.f32 %v3309, %v3427
        %v3492 = vmul.f32 %v3311, %v3428
        %v3493 = vmul.f32 %v3313, %v3429
        %v3494 = vmul.f32 %v3315, %v3430
        %v3495 = vmul.f32 %v3317, %v3431
        %v3496 = vmul.f32 %v3319, %v3432
        %v3497 = vmul.f32 %v3321, %v3433
        %v3498 = vmul.f32 %v3323, %v3434
        %v3499 = vmul.f32 %v3325, %v3435
        %v3500 = vmul.f32 %v3327, %v3436
        %v3501 = vmul.f32 %v3329, %v3437
        %v3502 = vmul.f32 %v3331, %v3438
        %v3503 = vmul.f32 %v3333, %v3439
        %v3504 = vmul.f32 %v3335, %v3440
        %v3505 = vmul.f32 %v3337, %v3441
        %v3506 = vmul.f32 %v3339, %v3442
        %v3507 = vmul.f32 %v3341, %v3443
        %v3508 = vmul.f32 %v3343, %v3444
        %v3509 = vmul.f32 %v3345, %v3445
        %v3510 = vmul.f32 %v3347, %v3446
        %v3511 = vmul.f32 %v3349, %v3447
        %v3512 = vmul.f32 %v3351, %v3448
        %v3513 = vmul.f32 %v3353, %v3449
        %v3514 = vmul.f32 %v3355, %v3450
        %v3515 = vmul.f32 %v3357, %v3451
        %v3516 = vmul.f32 %v3359, %v3452
        %v3517 = vmul.f32 %v3361, %v3453
        %v3518 = vmul.f32 %v3363, %v3454
        %v3519 = vmul.f32 %v3365, %v3455
        %v3520 = vmul.f32 %v3367, %v3456
        %v3521 = vmul.f32 %v3369, %v3457
        %v3522 = vmul.f32 %v3371, %v3458
        %v3523 = vmul.f32 %v3373, %v3459
        %v3524 = vmul.f32 %v3375, %v3460
        %v3525 = vmul.f32 %v3377, %v3461
        %v3526 = vmul.f32 %v3379, %v3462
        %v3527 = vmul.f32 %v3381, %v3463
        %v3528 = vmul.f32 %v3383, %v3464
        %v3529 = vmul.f32 %v3385, %v3465
        %v3530 = vmul.f32 %v3387, %v3466
        %v3531 = vmul.f32 %v3389, %v3467
        %v3532 = vmul.f32 %v3391, %v3468
        %v3533 = vmul.f32 %v3393, %v3469
        %v3534 = vmul.f32 %v3395, %v3470
        %v3535 = vmul.f32 %v3397, %v3471
        %v3536 = vmul.f32 %v3399, %v3472
        %v3537 = vmul.f32 %v3401, %v3473
        %v3538 = vmul.f32 %v3403, %v3474
        %v3539 = vmul.f32 %v3405, %v3475
        %v3540 = vmul.f32 %v3407, %v3476
        %v3541 = vmul.f32 %v3409, %v3477
        %v3542 = vmul.f32 %v3411, %v3478
        %v3543 = vmul.f32 %v3413, %v3479
        %v3544 = vmul.f32 %v3415, %v3480
        %v3545 = vmul.f32 %v3417, %v3481
        %v3546 = vsub.f32 2.0, %v3482
        %v3547 = vsub.f32 2.0, %v3483
        %v3548 = vsub.f32 2.0, %v3484
        %v3549 = vsub.f32 2.0, %v3485
        %v3550 = vsub.f32 2.0, %v3486
        %v3551 = vsub.f32 2.0, %v3487
        %v3552 = vsub.f32 2.0, %v3488
        %v3553 = vsub.f32 2.0, %v3489
        %v3554 = vsub.f32 2.0, %v3490
        %v3555 = vsub.f32 2.0, %v3491
        %v3556 = vsub.f32 2.0, %v3492
        %v3557 = vsub.f32 2.0, %v3493
        %v3558 = vsub.f32 2.0, %v3494
        %v3559 = vsub.f32 2.0, %v3495
        %v3560 = vsub.f32 2.0, %v3496
        %v3561 = vsub.f32 2.0, %v3497
        %v3562 = vsub.f32 2.0, %v3498
        %v3563 = vsub.f32 2.0, %v3499
        %v3564 = vsub.f32 2.0, %v3500
        %v3565 = vsub.f32 2.0, %v3501
        %v3566 = vsub.f32 2.0, %v3502
        %v3567 = vsub.f32 2.0, %v3503
        %v3568 = vsub.f32 2.0, %v3504
        %v3569 = vsub.f32 2.0, %v3505
        %v3570 = vsub.f32 2.0, %v3506
        %v3571 = vsub.f32 2.0, %v3507
        %v3572 = vsub.f32 2.0, %v3508
        %v3573 = vsub.f32 2.0, %v3509
        %v3574 = vsub.f32 2.0, %v3510
        %v3575 = vsub.f32 2.0, %v3511
        %v3576 = vsub.f32 2.0, %v3512
        %v3577 = vsub.f32 2.0, %v3513
        %v3578 = vsub.f32 2.0, %v3514
        %v3579 = vsub.f32 2.0, %v3515
        %v3580 = vsub.f32 2.0, %v3516
        %v3581 = vsub.f32 2.0, %v3517
        %v3582 = vsub.f32 2.0, %v3518
        %v3583 = vsub.f32 2.0, %v3519
        %v3584 = vsub.f32 2.0, %v3520
        %v3585 = vsub.f32 2.0, %v3521
        %v3586 = vsub.f32 2.0, %v3522
        %v3587 = vsub.f32 2.0, %v3523
        %v3588 = vsub.f32 2.0, %v3524
        %v3589 = vsub.f32 2.0, %v3525
        %v3590 = vsub.f32 2.0, %v3526
        %v3591 = vsub.f32 2.0, %v3527
        %v3592 = vsub.f32 2.0, %v3528
        %v3593 = vsub.f32 2.0, %v3529
        %v3594 = vsub.f32 2.0, %v3530
        %v3595 = vsub.f32 2.0, %v3531
        %v3596 = vsub.f32 2.0, %v3532
        %v3597 = vsub.f32 2.0, %v3533
        %v3598 = vsub.f32 2.0, %v3534
        %v3599 = vsub.f32 2.0, %v3535
        %v3600 = vsub.f32 2.0, %v3536
        %v3601 = vsub.f32 2.0, %v3537
        %v3602 = vsub.f32 2.0, %v3538
        %v3603 = vsub.f32 2.0, %v3539
        %v3604 = vsub.f32 2.0, %v3540
        %v3605 = vsub.f32 2.0, %v3541
        %v3606 = vsub.f32 2.0, %v3542
        %v3607 = vsub.f32 2.0, %v3543
        %v3608 = vsub.f32 2.0, %v3544
        %v3609 = vsub.f32 2.0, %v3545
        %v3610 = vmul.f32 %v3418, %v3546
        %v3611 = vmul.f32 %v3419, %v3547
        %v3612 = vmul.f32 %v3420, %v3548
        %v3613 = vmul.f32 %v3421, %v3549
        %v3614 = vmul.f32 %v3422, %v3550
        %v3615 = vmul.f32 %v3423, %v3551
        %v3616 = vmul.f32 %v3424, %v3552
        %v3617 = vmul.f32 %v3425, %v3553
        %v3618 = vmul.f32 %v3426, %v3554
        %v3619 = vmul.f32 %v3427, %v3555
        %v3620 = vmul.f32 %v3428, %v3556
        %v3621 = vmul.f32 %v3429, %v3557
        %v3622 = vmul.f32 %v3430, %v3558
        %v3623 = vmul.f32 %v3431, %v3559
        %v3624 = vmul.f32 %v3432, %v3560
        %v3625 = vmul.f32 %v3433, %v3561
        %v3626 = vmul.f32 %v3434, %v3562
        %v3627 = vmul.f32 %v3435, %v3563
        %v3628 = vmul.f32 %v3436, %v3564
        %v3629 = vmul.f32 %v3437, %v3565
        %v3630 = vmul.f32 %v3438, %v3566
        %v3631 = vmul.f32 %v3439, %v3567
        %v3632 = vmul.f32 %v3440, %v3568
        %v3633 = vmul.f32 %v3441, %v3569
        %v3634 = vmul.f32 %v3442, %v3570
        %v3635 = vmul.f32 %v3443, %v3571
        %v3636 = vmul.f32 %v3444, %v3572
        %v3637 = vmul.f32 %v3445, %v3573
        %v3638 = vmul.f32 %v3446, %v3574
        %v3639 = vmul.f32 %v3447, %v3575
        %v3640 = vmul.f32 %v3448, %v3576
        %v3641 = vmul.f32 %v3449, %v3577
        %v3642 = vmul.f32 %v3450, %v3578
        %v3643 = vmul.f32 %v3451, %v3579
        %v3644 = vmul.f32 %v3452, %v3580
        %v3645 = vmul.f32 %v3453, %v3581
        %v3646 = vmul.f32 %v3454, %v3582
        %v3647 = vmul.f32 %v3455, %v3583
        %v3648 = vmul.f32 %v3456, %v3584
        %v3649 = vmul.f32 %v3457, %v3585
        %v3650 = vmul.f32 %v3458, %v3586
        %v3651 = vmul.f32 %v3459, %v3587
        %v3652 = vmul.f32 %v3460, %v3588
        %v3653 = vmul.f32 %v3461, %v3589
        %v3654 = vmul.f32 %v3462, %v3590
        %v3655 = vmul.f32 %v3463, %v3591
        %v3656 = vmul.f32 %v3464, %v3592
        %v3657 = vmul.f32 %v3465, %v3593
        %v3658 = vmul.f32 %v3466, %v3594
        %v3659 = vmul.f32 %v3467, %v3595
        %v3660 = vmul.f32 %v3468, %v3596
        %v3661 = vmul.f32 %v3469, %v3597
        %v3662 = vmul.f32 %v3470, %v3598
        %v3663 = vmul.f32 %v3471, %v3599
        %v3664 = vmul.f32 %v3472, %v3600
        %v3665 = vmul.f32 %v3473, %v3601
        %v3666 = vmul.f32 %v3474, %v3602
        %v3667 = vmul.f32 %v3475, %v3603
        %v3668 = vmul.f32 %v3476, %v3604
        %v3669 = vmul.f32 %v3477, %v3605
        %v3670 = vmul.f32 %v3478, %v3606
        %v3671 = vmul.f32 %v3479, %v3607
        %v3672 = vmul.f32 %v3480, %v3608
        %v3673 = vmul.f32 %v3481, %v3609
        %v3674 = vmul.f32 %v3163, %v3610
        %v3675 = vmul.f32 %v3165, %v3611
        %v3676 = vmul.f32 %v3167, %v3612
        %v3677 = vmul.f32 %v3169, %v3613
        %v3678 = vmul.f32 %v3171, %v3614
        %v3679 = vmul.f32 %v3173, %v3615
        %v3680 = vmul.f32 %v3175, %v3616
        %v3681 = vmul.f32 %v3177, %v3617
        %v3682 = vmul.f32 %v3179, %v3618
        %v3683 = vmul.f32 %v3181, %v3619
        %v3684 = vmul.f32 %v3183, %v3620
        %v3685 = vmul.f32 %v3185, %v3621
        %v3686 = vmul.f32 %v3187, %v3622
        %v3687 = vmul.f32 %v3189, %v3623
        %v3688 = vmul.f32 %v3191, %v3624
        %v3689 = vmul.f32 %v3193, %v3625
        %v3690 = vmul.f32 %v3195, %v3626
        %v3691 = vmul.f32 %v3197, %v3627
        %v3692 = vmul.f32 %v3199, %v3628
        %v3693 = vmul.f32 %v3201, %v3629
        %v3694 = vmul.f32 %v3203, %v3630
        %v3695 = vmul.f32 %v3205, %v3631
        %v3696 = vmul.f32 %v3207, %v3632
        %v3697 = vmul.f32 %v3209, %v3633
        %v3698 = vmul.f32 %v3211, %v3634
        %v3699 = vmul.f32 %v3213, %v3635
        %v3700 = vmul.f32 %v3215, %v3636
        %v3701 = vmul.f32 %v3217, %v3637
        %v3702 = vmul.f32 %v3219, %v3638
        %v3703 = vmul.f32 %v3221, %v3639
        %v3704 = vmul.f32 %v3223, %v3640
        %v3705 = vmul.f32 %v3225, %v3641
        %v3706 = vmul.f32 %v3227, %v3642
        %v3707 = vmul.f32 %v3229, %v3643
        %v3708 = vmul.f32 %v3231, %v3644
        %v3709 = vmul.f32 %v3233, %v3645
        %v3710 = vmul.f32 %v3235, %v3646
        %v3711 = vmul.f32 %v3237, %v3647
        %v3712 = vmul.f32 %v3239, %v3648
        %v3713 = vmul.f32 %v3241, %v3649
        %v3714 = vmul.f32 %v3243, %v3650
        %v3715 = vmul.f32 %v3245, %v3651
        %v3716 = vmul.f32 %v3247, %v3652
        %v3717 = vmul.f32 %v3249, %v3653
        %v3718 = vmul.f32 %v3251, %v3654
        %v3719 = vmul.f32 %v3253, %v3655
        %v3720 = vmul.f32 %v3255, %v3656
        %v3721 = vmul.f32 %v3257, %v3657
        %v3722 = vmul.f32 %v3259, %v3658
        %v3723 = vmul.f32 %v3261, %v3659
        %v3724 = vmul.f32 %v3263, %v3660
        %v3725 = vmul.f32 %v3265, %v3661
        %v3726 = vmul.f32 %v3267, %v3662
        %v3727 = vmul.f32 %v3269, %v3663
        %v3728 = vmul.f32 %v3271, %v3664
        %v3729 = vmul.f32 %v3273, %v3665
        %v3730 = vmul.f32 %v3275, %v3666
        %v3731 = vmul.f32 %v3277, %v3667
        %v3732 = vmul.f32 %v3279, %v3668
        %v3733 = vmul.f32 %v3281, %v3669
        %v3734 = vmul.f32 %v3283, %v3670
        %v3735 = vmul.f32 %v3285, %v3671
        %v3736 = vmul.f32 %v3287, %v3672
        %v3737 = vmul.f32 %v3289, %v3673
        %3738 = vst [vmem:[%s326] sm:$0xff] %v3674
        %3739 = vst [vmem:[%s326 + $0x8] sm:$0xff] %v3675
        %3740 = vst [vmem:[%s326 + $0x10] sm:$0xff] %v3676
        %3741 = vst [vmem:[%s326 + $0x18] sm:$0xff] %v3677
        %3742 = vst [vmem:[%s326 + $0x20] sm:$0xff] %v3678
        %3743 = vst [vmem:[%s326 + $0x28] sm:$0xff] %v3679
        %3744 = vst [vmem:[%s326 + $0x30] sm:$0xff] %v3680
        %3745 = vst [vmem:[%s326 + $0x38] sm:$0xff] %v3681
        %3746 = vst [vmem:[%s326 + $0x40] sm:$0xff] %v3682
        %3747 = vst [vmem:[%s326 + $0x48] sm:$0xff] %v3683
        %3748 = vst [vmem:[%s326 + $0x50] sm:$0xff] %v3684
        %3749 = vst [vmem:[%s326 + $0x58] sm:$0xff] %v3685
        %3750 = vst [vmem:[%s326 + $0x60] sm:$0xff] %v3686
        %3751 = vst [vmem:[%s326 + $0x68] sm:$0xff] %v3687
        %3752 = vst [vmem:[%s326 + $0x70] sm:$0xff] %v3688
        %3753 = vst [vmem:[%s326 + $0x78] sm:$0xff] %v3689
        %3754 = vst [vmem:[%s326 + $0x80] sm:$0xff] %v3690
        %3755 = vst [vmem:[%s326 + $0x88] sm:$0xff] %v3691
        %3756 = vst [vmem:[%s326 + $0x90] sm:$0xff] %v3692
        %3757 = vst [vmem:[%s326 + $0x98] sm:$0xff] %v3693
        %3758 = vst [vmem:[%s326 + $0xa0] sm:$0xff] %v3694
        %3759 = vst [vmem:[%s326 + $0xa8] sm:$0xff] %v3695
        %3760 = vst [vmem:[%s326 + $0xb0] sm:$0xff] %v3696
        %3761 = vst [vmem:[%s326 + $0xb8] sm:$0xff] %v3697
        %3762 = vst [vmem:[%s326 + $0xc0] sm:$0xff] %v3698
        %3763 = vst [vmem:[%s326 + $0xc8] sm:$0xff] %v3699
        %3764 = vst [vmem:[%s326 + $0xd0] sm:$0xff] %v3700
        %3765 = vst [vmem:[%s326 + $0xd8] sm:$0xff] %v3701
        %3766 = vst [vmem:[%s326 + $0xe0] sm:$0xff] %v3702
        %3767 = vst [vmem:[%s326 + $0xe8] sm:$0xff] %v3703
        %3768 = vst [vmem:[%s326 + $0xf0] sm:$0xff] %v3704
        %3769 = vst [vmem:[%s326 + $0xf8] sm:$0xff] %v3705
        %3770 = vst [vmem:[%s326 + $0x100] sm:$0xff] %v3706
        %3771 = vst [vmem:[%s326 + $0x108] sm:$0xff] %v3707
        %3772 = vst [vmem:[%s326 + $0x110] sm:$0xff] %v3708
        %3773 = vst [vmem:[%s326 + $0x118] sm:$0xff] %v3709
        %3774 = vst [vmem:[%s326 + $0x120] sm:$0xff] %v3710
        %3775 = vst [vmem:[%s326 + $0x128] sm:$0xff] %v3711
        %3776 = vst [vmem:[%s326 + $0x130] sm:$0xff] %v3712
        %3777 = vst [vmem:[%s326 + $0x138] sm:$0xff] %v3713
        %3778 = vst [vmem:[%s326 + $0x140] sm:$0xff] %v3714
        %3779 = vst [vmem:[%s326 + $0x148] sm:$0xff] %v3715
        %3780 = vst [vmem:[%s326 + $0x150] sm:$0xff] %v3716
        %3781 = vst [vmem:[%s326 + $0x158] sm:$0xff] %v3717
        %3782 = vst [vmem:[%s326 + $0x160] sm:$0xff] %v3718
        %3783 = vst [vmem:[%s326 + $0x168] sm:$0xff] %v3719
        %3784 = vst [vmem:[%s326 + $0x170] sm:$0xff] %v3720
        %3785 = vst [vmem:[%s326 + $0x178] sm:$0xff] %v3721
        %3786 = vst [vmem:[%s326 + $0x180] sm:$0xff] %v3722
        %3787 = vst [vmem:[%s326 + $0x188] sm:$0xff] %v3723
        %3788 = vst [vmem:[%s326 + $0x190] sm:$0xff] %v3724
        %3789 = vst [vmem:[%s326 + $0x198] sm:$0xff] %v3725
        %3790 = vst [vmem:[%s326 + $0x1a0] sm:$0xff] %v3726
        %3791 = vst [vmem:[%s326 + $0x1a8] sm:$0xff] %v3727
        %3792 = vst [vmem:[%s326 + $0x1b0] sm:$0xff] %v3728
        %3793 = vst [vmem:[%s326 + $0x1b8] sm:$0xff] %v3729
        %3794 = vst [vmem:[%s326 + $0x1c0] sm:$0xff] %v3730
        %3795 = vst [vmem:[%s326 + $0x1c8] sm:$0xff] %v3731
        %3796 = vst [vmem:[%s326 + $0x1d0] sm:$0xff] %v3732
        %3797 = vst [vmem:[%s326 + $0x1d8] sm:$0xff] %v3733
        %3798 = vst [vmem:[%s326 + $0x1e0] sm:$0xff] %v3734
        %3799 = vst [vmem:[%s326 + $0x1e8] sm:$0xff] %v3735
        %3800 = vst [vmem:[%s326 + $0x1f0] sm:$0xff] %v3736
        %3801 = vst [vmem:[%s326 + $0x1f8] sm:$0xff] %v3737
        %s3802 = sand.u32 %s225, 1
        %s3803 = scalar_lea.sflag [#allocation3], %s3802
        %s3804 = sand.u32 %s225, 1
        %s3805 = smul.addr %s3804, 512
        %s3806 = scalar_lea.vmem [#allocation2], %s3805
        // Predicated region
        $region57: #{tpu_custom_call.1} parent=55 // pred_check
          %p3807 = pneg %p235
        $region58: #{tpu_custom_call.1} parent=55 // pred_check_branch
          %3809 = sbr.rel (%p3807) target = $region60
        $region59: #{tpu_custom_call.1} parent=55 // pred_region
          %s3810 = smul.u32 64, %s23
          %3812 = vsyncadd %s3803, 0
          %s3813 = smul.addr %s3810, 8
          %s3814 = scalar_lea.hbm %s9, %s3813
          %s3815 = sshll.u32 %s3806, 4
          %s3816 = int_to_ptr.vmem [resolvable:$true] %s3815
          %s3817 = sshll.u32 %s3814, 4
          %s3818 = int_to_ptr.hbm [resolvable:$true] %s3817
          %3823 = dma.vmem_to_hbm [thread:$0]  %s3816, 8192, %s3818, %s3803, 128, 128, 8
        $region60: #{tpu_custom_call.1} parent=55 // pred_fallthru
          _
      $region56: #{tpu_custom_call.1} parent=5 // pred_fallthru
        _
      %p3824 = scmp.le.s32.totalorder 2, %s18
      // Predicated region
      $region61: #{tpu_custom_call.1} parent=5 // pred_check
        %p3825 = pneg %p3824
      $region62: #{tpu_custom_call.1} parent=5 // pred_check_branch
        %3827 = sbr.rel (%p3825) target = $region64
      $region63: #{tpu_custom_call.1} parent=5 // pred_region
        %s3828 = ssub.s32 %s18, 2
        // Predicated region
        $region65: #{tpu_custom_call.1} parent=63 // pred_check
          %p3829 = pneg %p241
        $region66: #{tpu_custom_call.1} parent=63 // pred_check_branch
          %3831 = sbr.rel (%p3829) target = $region68
        $region67: #{tpu_custom_call.1} parent=63 // pred_region
          %s3832 = sand.u32 %s226, 1
          %s3833 = scalar_lea.sflag [#allocation3], %s3832
          %s3834 = sand.u32 %s226, 1
          %s3835 = smul.addr %s3834, 512
          %s3836 = scalar_lea.vmem [#allocation2], %s3835
          %3838 = dma.done %s3833, 8192
        $region68: #{tpu_custom_call.1} parent=63 // pred_fallthru
          _
      $region64: #{tpu_custom_call.1} parent=5 // pred_fallthru
        _
    $region6: #{tpu_custom_call.1} parent=1 // loop_footer
      %s22 = sadd.s32 1, %s18
    $region7: #{tpu_custom_call.1} parent=1 // loop_footer_branch
      %17 = sbr.rel target = $region3
    $region8: #{tpu_custom_call.1} parent=1 // loop_exit
      _
    %3839 = vsyncpa [#allocation3], 1
    %s3840 = scalar_lea.sflag [#allocation3], 1
    %3841 = vsyncpa %s3840, 1

</llo_original>
